<compile_context>
chip_gen: v6e
topology: v6e:2x2x1
jax: 0.10.0
libtpu: 0.0.40
codegen_flags: <defaults>
</compile_context>

<pallas_src>
import numpy as np
import jax
import jax.numpy as jnp
from jax import lax
from jax.experimental import pallas as pl
from jax.experimental.pallas import tpu as pltpu

# ---- small synthetic CLIP-text config ----
VOCAB = 64      # vocab size
SEQ = 8         # context length
D = 32          # transformer width
H = 4           # attention heads
HD = D // H     # head dim
L = 2           # transformer layers
MLP = 4 * D     # mlp hidden
EMBED = 32      # text_projection output dim == image_reference_feat.size(0)
EPS = 1e-5


def _layer_norm(x, g, b):
    mu = jnp.mean(x, axis=-1, keepdims=True)
    var = jnp.mean((x - mu) ** 2, axis=-1, keepdims=True)
    return (x - mu) * lax.rsqrt(var + EPS) * g + b


def _gelu(x):
    # TODO(synk): torch nn.GELU defaults to the exact erf form; tanh approximation used here.
    c = jnp.sqrt(2.0 / jnp.pi).astype(x.dtype)
    return 0.5 * x * (1.0 + jnp.tanh(c * (x + 0.044715 * x * x * x)))


def _text_encoder_kernel(ids_col_ref,            # (B*S, 1) int32 token ids (row-major over (B,S))
                         ids_bs_ref,             # (B, S)   int32 token ids
                         tok_emb_ref,            # (VOCAB, D)   token_embedding.weight
                         pos_ref,                # (S, D)       positional_embedding
                         mask_ref,               # (B*S, B*S)   block-diag causal additive mask
                         ln1_g_ref, ln1_b_ref,   # (L, D)
                         wqkv_ref, bqkv_ref,     # (L, D, 3D), (L, 3D)
                         wo_ref, bo_ref,         # (L, D, D),  (L, D)
                         ln2_g_ref, ln2_b_ref,   # (L, D)
                         wfc_ref, bfc_ref,       # (L, D, MLP), (L, MLP)
                         wpj_ref, bpj_ref,       # (L, MLP, D), (L, D)
                         lnf_g_ref, lnf_b_ref,   # (1, D)       ln_final
                         tproj_ref,              # (D, EMBED)   text_projection
                         headw_ref, headb_ref,   # (1, EMBED), (1, 1)  fake_head
                         out_ref):               # (B, 1)
    B = ids_bs_ref.shape[0]
    BS = B * SEQ

    # ---- token embedding as a one-hot matmul (gather fused in-kernel) ----
    v_iota = lax.broadcasted_iota(jnp.int32, (BS, VOCAB), 1)
    onehot = (v_iota == ids_col_ref[...]).astype(jnp.float32)                        # (BS, VOCAB)
    x = jnp.dot(onehot, tok_emb_ref[...], preferred_element_type=jnp.float32)        # (BS, D)

    # + positional embedding (identical for every batch element)
    x = x + jnp.concatenate([pos_ref[...]] * B, axis=0)                              # (BS, D)

    mask = mask_ref[...]                                                             # (BS, BS)
    scale = float(HD) ** -0.5

    for l in range(L):
        # ---- multi-head self-attention (pre-LN, residual), batched over B and H ----
        h = _layer_norm(x, ln1_g_ref[l], ln1_b_ref[l])
        qkv = jnp.dot(h, wqkv_ref[l], preferred_element_type=jnp.float32) + bqkv_ref[l]  # (BS, 3D)

        q_h = jnp.stack([qkv[:, hh * HD:(hh + 1) * HD] for hh in range(H)], axis=0) * scale
        k_h = jnp.stack([qkv[:, D + hh * HD:D + (hh + 1) * HD] for hh in range(H)], axis=0)
        v_h = jnp.stack([qkv[:, 2 * D + hh * HD:2 * D + (hh + 1) * HD] for hh in range(H)], axis=0)
        # each: (H, BS, HD)

        s = jnp.einsum('hqd,hkd->hqk', q_h, k_h,
                       preferred_element_type=jnp.float32)                           # (H, BS, BS)
        s = s + mask[None, :, :]
        s = s - jnp.max(s, axis=-1, keepdims=True)
        p = jnp.exp(s)
        p = p * pl.reciprocal(jnp.sum(p, axis=-1, keepdims=True), approx=True)
        o = jnp.einsum('hqk,hkd->hqd', p, v_h,
                       preferred_element_type=jnp.float32)                           # (H, BS, HD)
        attn = jnp.concatenate([o[hh] for hh in range(H)], axis=-1)                  # (BS, D)
        x = x + jnp.dot(attn, wo_ref[l], preferred_element_type=jnp.float32) + bo_ref[l]

        # ---- MLP block (pre-LN, residual) ----
        h = _layer_norm(x, ln2_g_ref[l], ln2_b_ref[l])
        h = jnp.dot(h, wfc_ref[l], preferred_element_type=jnp.float32) + bfc_ref[l]
        h = _gelu(h)
        h = jnp.dot(h, wpj_ref[l], preferred_element_type=jnp.float32) + bpj_ref[l]
        x = x + h

    # ---- ln_final ----
    x = _layer_norm(x, lnf_g_ref[0], lnf_b_ref[0])                                   # (BS, D)

    # ---- text_global_pool(pool_type='argmax'): first index of max token id, per batch ----
    ids = ids_bs_ref[...]                                                            # (B, S)
    s_iota = lax.broadcasted_iota(jnp.int32, (B, SEQ), 1)
    max_id = jnp.max(ids, axis=-1, keepdims=True)                                    # (B, 1)
    cand = jnp.where(ids == max_id, s_iota, SEQ)
    eot = jnp.min(cand, axis=-1, keepdims=True)                                      # (B, 1) first argmax
    b_iota = lax.broadcasted_iota(jnp.int32, (B, 1), 0)
    target = eot + b_iota * SEQ                                                      # (B, 1) flat row index
    r_iota = lax.broadcasted_iota(jnp.int32, (B, BS), 1)
    pool = (r_iota == target).astype(jnp.float32)                                    # (B, BS)
    pooled = jnp.dot(pool, x, preferred_element_type=jnp.float32)                    # (B, D)

    # ---- text_projection ----
    feat = jnp.dot(pooled, tproj_ref[...], preferred_element_type=jnp.float32)       # (B, EMBED)

    # ---- fake_head: Linear(EMBED -> 1), weight = image_reference_feat ----
    val = jnp.sum(feat * headw_ref[...], axis=-1, keepdims=True) + headb_ref[...]    # (B, 1)
    out_ref[...] = val


WEIGHT_ORDER = ["ln1_g", "ln1_b", "wqkv", "bqkv", "wo", "bo",
                "ln2_g", "ln2_b", "wfc", "bfc", "wpj", "bpj",
                "lnf_g", "lnf_b", "tproj", "headw", "headb"]


def make_params(key):
    ks = jax.random.split(key, 10)
    init = lambda k, shape, s=0.02: jax.random.normal(k, shape, jnp.float32) * s
    return dict(
        tok_emb=init(ks[0], (VOCAB, D)),                 # token_embedding.weight
        pos=init(ks[1], (SEQ, D), 0.01),                 # positional_embedding
        ln1_g=jnp.ones((L, D), jnp.float32),
        ln1_b=jnp.zeros((L, D), jnp.float32),
        wqkv=init(ks[2], (L, D, 3 * D)),
        bqkv=jnp.zeros((L, 3 * D), jnp.float32),
        wo=init(ks[3], (L, D, D)),
        bo=jnp.zeros((L, D), jnp.float32),
        ln2_g=jnp.ones((L, D), jnp.float32),
        ln2_b=jnp.zeros((L, D), jnp.float32),
        wfc=init(ks[4], (L, D, MLP)),
        bfc=jnp.zeros((L, MLP), jnp.float32),
        wpj=init(ks[5], (L, MLP, D)),
        bpj=jnp.zeros((L, D), jnp.float32),
        lnf_g=jnp.ones((1, D), jnp.float32),
        lnf_b=jnp.zeros((1, D), jnp.float32),
        tproj=init(ks[6], (D, EMBED)),                   # text_projection
        headw=init(ks[7], (1, EMBED), 1.0),              # image_reference_feat (fake_head.weight)
        headb=jnp.zeros((1, 1), jnp.float32),            # fake_head.bias
    )


def _block_causal_mask(B):
    """Additive (B*S, B*S) mask: causal within a batch element, -1e9 across batches."""
    BS = B * SEQ
    r = np.arange(BS)
    same_b = (r[:, None] // SEQ) == (r[None, :] // SEQ)
    causal = r[None, :] <= r[:, None]
    return jnp.asarray(np.where(same_b & causal, 0.0, -1e9), dtype=jnp.float32)


def textual_wrapper_forward(text, params):
    """text: (B, S) int32 token ids  ->  (B, 1) fake_head output."""
    B = text.shape[0]
    BS = B * SEQ
    text = text.astype(jnp.int32)
    ids_col = text.reshape(BS, 1)          # tiny int reshape; ids land in sublanes for the gather
    mask = _block_causal_mask(B)           # compile-time constant (keeps batches independent)

    def full_spec(a):
        nd = a.ndim
        return pl.BlockSpec(a.shape, lambda i, _nd=nd: (0,) * _nd)

    args = [ids_col, text, params["tok_emb"], params["pos"], mask] + \
           [params[n] for n in WEIGHT_ORDER]

    out = pl.pallas_call(
        _text_encoder_kernel,
        out_shape=jax.ShapeDtypeStruct((B, 1), jnp.float32),
        grid=(1,),                                   # whole batch fused into one step
        in_specs=[full_spec(a) for a in args],
        out_specs=pl.BlockSpec((B, 1), lambda i: (0, 0)),
        compiler_params=pltpu.CompilerParams(dimension_semantics=("arbitrary",)),
    )(*args)
    return out


if __name__ == "__main__":
    key = jax.random.PRNGKey(0)
    pkey, tkey = jax.random.split(key)
    params = make_params(pkey)

    B = 2
    # token ids in [1, VOCAB-2], with the EOT token (id VOCAB-1, the max) placed per row
    text = jax.random.randint(tkey, (B, SEQ), 1, VOCAB - 1).astype(jnp.int32)
    eot_pos = jnp.array([SEQ - 1, SEQ // 2], dtype=jnp.int32)
    text = text.at[jnp.arange(B), eot_pos].set(VOCAB - 1)

    out = textual_wrapper_forward(text, params)
    jax.block_until_ready(out)
    print("KERNEL_OK")
</pallas_src>

<mosaic_0001>
module attributes {stable_mosaic.version = 11 : i64} {
  func.func @_text_encoder_kernel(%arg0: i32, %arg1: memref<16x1xi32, #tpu.memory_space<vmem>>, %arg2: memref<2x8xi32, #tpu.memory_space<vmem>>, %arg3: memref<64x32xf32, #tpu.memory_space<vmem>>, %arg4: memref<8x32xf32, #tpu.memory_space<vmem>>, %arg5: memref<16x16xf32, #tpu.memory_space<vmem>>, %arg6: memref<2x32xf32, #tpu.memory_space<vmem>>, %arg7: memref<2x32xf32, #tpu.memory_space<vmem>>, %arg8: memref<2x32x96xf32, #tpu.memory_space<vmem>>, %arg9: memref<2x96xf32, #tpu.memory_space<vmem>>, %arg10: memref<2x32x32xf32, #tpu.memory_space<vmem>>, %arg11: memref<2x32xf32, #tpu.memory_space<vmem>>, %arg12: memref<2x32xf32, #tpu.memory_space<vmem>>, %arg13: memref<2x32xf32, #tpu.memory_space<vmem>>, %arg14: memref<2x32x128xf32, #tpu.memory_space<vmem>>, %arg15: memref<2x128xf32, #tpu.memory_space<vmem>>, %arg16: memref<2x128x32xf32, #tpu.memory_space<vmem>>, %arg17: memref<2x32xf32, #tpu.memory_space<vmem>>, %arg18: memref<1x32xf32, #tpu.memory_space<vmem>>, %arg19: memref<1x32xf32, #tpu.memory_space<vmem>>, %arg20: memref<32x32xf32, #tpu.memory_space<vmem>>, %arg21: memref<1x32xf32, #tpu.memory_space<vmem>>, %arg22: memref<1x1xf32, #tpu.memory_space<vmem>>, %arg23: memref<2x1xf32, #tpu.memory_space<vmem>>) attributes {dimension_semantics = [#tpu.dimension_semantics<arbitrary>], iteration_bounds = array<i64: 1>, scalar_prefetch = 0 : i64, scratch_operands = 0 : i64, tpu.core_type = #tpu.core_type<tc>, window_params = [{pipeline_mode = #tpu.pipeline_mode<synchronous>, transform_indices = @transform_0, window_bounds = array<i64: 16, 1>}, {pipeline_mode = #tpu.pipeline_mode<synchronous>, transform_indices = @transform_1, window_bounds = array<i64: 2, 8>}, {pipeline_mode = #tpu.pipeline_mode<synchronous>, transform_indices = @transform_2, window_bounds = array<i64: 64, 32>}, {pipeline_mode = #tpu.pipeline_mode<synchronous>, transform_indices = @transform_3, window_bounds = array<i64: 8, 32>}, {pipeline_mode = #tpu.pipeline_mode<synchronous>, transform_indices = @transform_4, window_bounds = array<i64: 16, 16>}, {pipeline_mode = #tpu.pipeline_mode<synchronous>, transform_indices = @transform_5, window_bounds = array<i64: 2, 32>}, {pipeline_mode = #tpu.pipeline_mode<synchronous>, transform_indices = @transform_6, window_bounds = array<i64: 2, 32>}, {pipeline_mode = #tpu.pipeline_mode<synchronous>, transform_indices = @transform_7, window_bounds = array<i64: 2, 32, 96>}, {pipeline_mode = #tpu.pipeline_mode<synchronous>, transform_indices = @transform_8, window_bounds = array<i64: 2, 96>}, {pipeline_mode = #tpu.pipeline_mode<synchronous>, transform_indices = @transform_9, window_bounds = array<i64: 2, 32, 32>}, {pipeline_mode = #tpu.pipeline_mode<synchronous>, transform_indices = @transform_10, window_bounds = array<i64: 2, 32>}, {pipeline_mode = #tpu.pipeline_mode<synchronous>, transform_indices = @transform_11, window_bounds = array<i64: 2, 32>}, {pipeline_mode = #tpu.pipeline_mode<synchronous>, transform_indices = @transform_12, window_bounds = array<i64: 2, 32>}, {pipeline_mode = #tpu.pipeline_mode<synchronous>, transform_indices = @transform_13, window_bounds = array<i64: 2, 32, 128>}, {pipeline_mode = #tpu.pipeline_mode<synchronous>, transform_indices = @transform_14, window_bounds = array<i64: 2, 128>}, {pipeline_mode = #tpu.pipeline_mode<synchronous>, transform_indices = @transform_15, window_bounds = array<i64: 2, 128, 32>}, {pipeline_mode = #tpu.pipeline_mode<synchronous>, transform_indices = @transform_16, window_bounds = array<i64: 2, 32>}, {pipeline_mode = #tpu.pipeline_mode<synchronous>, transform_indices = @transform_17, window_bounds = array<i64: 1, 32>}, {pipeline_mode = #tpu.pipeline_mode<synchronous>, transform_indices = @transform_18, window_bounds = array<i64: 1, 32>}, {pipeline_mode = #tpu.pipeline_mode<synchronous>, transform_indices = @transform_19, window_bounds = array<i64: 32, 32>}, {pipeline_mode = #tpu.pipeline_mode<synchronous>, transform_indices = @transform_20, window_bounds = array<i64: 1, 32>}, {pipeline_mode = #tpu.pipeline_mode<synchronous>, transform_indices = @transform_21, window_bounds = array<i64: 1, 1>}, {pipeline_mode = #tpu.pipeline_mode<synchronous>, transform_indices = @transform_22, window_bounds = array<i64: 2, 1>}]} {
    %0 = tpu.iota {dimensions = array<i32: 1>} : vector<16x64xi32>
    %c0 = arith.constant 0 : index
    %c0_0 = arith.constant 0 : index
    %1 = vector.load %arg1[%c0, %c0_0] : memref<16x1xi32, #tpu.memory_space<vmem>>, vector<16x1xi32>
    %2 = vector.broadcast %1 : vector<16x1xi32> to vector<16x64xi32>
    %3 = arith.cmpi eq, %0, %2 : vector<16x64xi32>
    %4 = arith.extui %3 : vector<16x64xi1> to vector<16x64xi32>
    %5 = arith.sitofp %4 : vector<16x64xi32> to vector<16x64xf32>
    %c0_1 = arith.constant 0 : index
    %c0_2 = arith.constant 0 : index
    %6 = vector.load %arg3[%c0_1, %c0_2] : memref<64x32xf32, #tpu.memory_space<vmem>>, vector<64x32xf32>
    %cst = arith.constant dense<0.000000e+00> : vector<16x32xf32>
    %7 = tpu.matmul %5, %6, %cst {dimension_numbers = #tpu.dot_dimension_numbers<[1], [0], [0], [1], [0, 0, 1, 1], [], []>} : vector<16x64xf32>, vector<64x32xf32>, vector<16x32xf32> -> vector<16x32xf32>
    %c0_3 = arith.constant 0 : index
    %c0_4 = arith.constant 0 : index
    %8 = vector.load %arg4[%c0_3, %c0_4] : memref<8x32xf32, #tpu.memory_space<vmem>>, vector<8x32xf32>
    %9 = tpu.concatenate %8, %8 in 0 : vector<8x32xf32>, vector<8x32xf32> -> vector<16x32xf32>
    %10 = arith.addf %7, %9 : vector<16x32xf32>
    %c0_5 = arith.constant 0 : index
    %c0_6 = arith.constant 0 : index
    %11 = vector.load %arg5[%c0_5, %c0_6] : memref<16x16xf32, #tpu.memory_space<vmem>>, vector<16x16xf32>
    %c0_7 = arith.constant 0 : index
    %c0_8 = arith.constant 0 : index
    %12 = vector.load %arg6[%c0_7, %c0_8] : memref<2x32xf32, #tpu.memory_space<vmem>>, vector<1x32xf32>
    %13 = vector.shape_cast %12 : vector<1x32xf32> to vector<32xf32>
    %c0_9 = arith.constant 0 : index
    %c0_10 = arith.constant 0 : index
    %14 = vector.load %arg7[%c0_9, %c0_10] : memref<2x32xf32, #tpu.memory_space<vmem>>, vector<1x32xf32>
    %15 = vector.shape_cast %14 : vector<1x32xf32> to vector<32xf32>
    %cst_11 = arith.constant dense<0.000000e+00> : vector<16xf32>
    %16 = vector.multi_reduction <add>, %10, %cst_11 [1] : vector<16x32xf32> to vector<16xf32>
    %17 = vector.shape_cast %16 : vector<16xf32> to vector<16x1xf32>
    %cst_12 = arith.constant 3.200000e+01 : f32
    %18 = vector.broadcast %cst_12 : f32 to vector<16x1xf32>
    %19 = arith.divf %17, %18 : vector<16x1xf32>
    %20 = vector.broadcast %19 : vector<16x1xf32> to vector<16x32xf32>
    %21 = arith.subf %10, %20 : vector<16x32xf32>
    %22 = arith.mulf %21, %21 : vector<16x32xf32>
    %cst_13 = arith.constant dense<0.000000e+00> : vector<16xf32>
    %23 = vector.multi_reduction <add>, %22, %cst_13 [1] : vector<16x32xf32> to vector<16xf32>
    %24 = vector.shape_cast %23 : vector<16xf32> to vector<16x1xf32>
    %cst_14 = arith.constant 3.200000e+01 : f32
    %25 = vector.broadcast %cst_14 : f32 to vector<16x1xf32>
    %26 = arith.divf %24, %25 : vector<16x1xf32>
    %27 = vector.broadcast %19 : vector<16x1xf32> to vector<16x32xf32>
    %28 = arith.subf %10, %27 : vector<16x32xf32>
    %cst_15 = arith.constant 9.99999974E-6 : f32
    %29 = vector.broadcast %cst_15 : f32 to vector<16x1xf32>
    %30 = arith.addf %26, %29 : vector<16x1xf32>
    %31 = math.rsqrt %30 : vector<16x1xf32>
    %32 = vector.broadcast %31 : vector<16x1xf32> to vector<16x32xf32>
    %33 = arith.mulf %28, %32 : vector<16x32xf32>
    %34 = vector.shape_cast %13 : vector<32xf32> to vector<1x32xf32>
    %35 = vector.broadcast %34 : vector<1x32xf32> to vector<16x32xf32>
    %36 = arith.mulf %33, %35 : vector<16x32xf32>
    %37 = vector.shape_cast %15 : vector<32xf32> to vector<1x32xf32>
    %38 = vector.broadcast %37 : vector<1x32xf32> to vector<16x32xf32>
    %39 = arith.addf %36, %38 : vector<16x32xf32>
    %c0_16 = arith.constant 0 : index
    %c0_17 = arith.constant 0 : index
    %c0_18 = arith.constant 0 : index
    %40 = vector.load %arg8[%c0_16, %c0_17, %c0_18] : memref<2x32x96xf32, #tpu.memory_space<vmem>>, vector<1x32x96xf32>
    %41 = vector.shape_cast %40 : vector<1x32x96xf32> to vector<32x96xf32>
    %cst_19 = arith.constant dense<0.000000e+00> : vector<16x96xf32>
    %42 = tpu.matmul %39, %41, %cst_19 {dimension_numbers = #tpu.dot_dimension_numbers<[1], [0], [0], [1], [0, 0, 1, 1], [], []>} : vector<16x32xf32>, vector<32x96xf32>, vector<16x96xf32> -> vector<16x96xf32>
    %c0_20 = arith.constant 0 : index
    %c0_21 = arith.constant 0 : index
    %43 = vector.load %arg9[%c0_20, %c0_21] : memref<2x96xf32, #tpu.memory_space<vmem>>, vector<1x96xf32>
    %44 = vector.shape_cast %43 : vector<1x96xf32> to vector<96xf32>
    %45 = vector.shape_cast %44 : vector<96xf32> to vector<1x96xf32>
    %46 = vector.broadcast %45 : vector<1x96xf32> to vector<16x96xf32>
    %47 = arith.addf %42, %46 : vector<16x96xf32>
    %48 = vector.extract_strided_slice %47 {offsets = [0, 0], sizes = [16, 8], strides = [1, 1]} : vector<16x96xf32> to vector<16x8xf32>
    %49 = vector.extract_strided_slice %47 {offsets = [0, 8], sizes = [16, 8], strides = [1, 1]} : vector<16x96xf32> to vector<16x8xf32>
    %50 = vector.extract_strided_slice %47 {offsets = [0, 16], sizes = [16, 8], strides = [1, 1]} : vector<16x96xf32> to vector<16x8xf32>
    %51 = vector.extract_strided_slice %47 {offsets = [0, 24], sizes = [16, 8], strides = [1, 1]} : vector<16x96xf32> to vector<16x8xf32>
    %52 = vector.shape_cast %48 : vector<16x8xf32> to vector<1x16x8xf32>
    %53 = vector.shape_cast %49 : vector<16x8xf32> to vector<1x16x8xf32>
    %54 = vector.shape_cast %50 : vector<16x8xf32> to vector<1x16x8xf32>
    %55 = vector.shape_cast %51 : vector<16x8xf32> to vector<1x16x8xf32>
    %56 = tpu.concatenate %52, %53, %54, %55 in 0 : vector<1x16x8xf32>, vector<1x16x8xf32>, vector<1x16x8xf32>, vector<1x16x8xf32> -> vector<4x16x8xf32>
    %cst_22 = arith.constant 0.353553385 : f32
    %57 = vector.broadcast %cst_22 : f32 to vector<4x16x8xf32>
    %58 = arith.mulf %56, %57 : vector<4x16x8xf32>
    %59 = vector.extract_strided_slice %47 {offsets = [0, 32], sizes = [16, 8], strides = [1, 1]} : vector<16x96xf32> to vector<16x8xf32>
    %60 = vector.extract_strided_slice %47 {offsets = [0, 40], sizes = [16, 8], strides = [1, 1]} : vector<16x96xf32> to vector<16x8xf32>
    %61 = vector.extract_strided_slice %47 {offsets = [0, 48], sizes = [16, 8], strides = [1, 1]} : vector<16x96xf32> to vector<16x8xf32>
    %62 = vector.extract_strided_slice %47 {offsets = [0, 56], sizes = [16, 8], strides = [1, 1]} : vector<16x96xf32> to vector<16x8xf32>
    %63 = vector.shape_cast %59 : vector<16x8xf32> to vector<1x16x8xf32>
    %64 = vector.shape_cast %60 : vector<16x8xf32> to vector<1x16x8xf32>
    %65 = vector.shape_cast %61 : vector<16x8xf32> to vector<1x16x8xf32>
    %66 = vector.shape_cast %62 : vector<16x8xf32> to vector<1x16x8xf32>
    %67 = tpu.concatenate %63, %64, %65, %66 in 0 : vector<1x16x8xf32>, vector<1x16x8xf32>, vector<1x16x8xf32>, vector<1x16x8xf32> -> vector<4x16x8xf32>
    %68 = vector.extract_strided_slice %47 {offsets = [0, 64], sizes = [16, 8], strides = [1, 1]} : vector<16x96xf32> to vector<16x8xf32>
    %69 = vector.extract_strided_slice %47 {offsets = [0, 72], sizes = [16, 8], strides = [1, 1]} : vector<16x96xf32> to vector<16x8xf32>
    %70 = vector.extract_strided_slice %47 {offsets = [0, 80], sizes = [16, 8], strides = [1, 1]} : vector<16x96xf32> to vector<16x8xf32>
    %71 = vector.extract_strided_slice %47 {offsets = [0, 88], sizes = [16, 8], strides = [1, 1]} : vector<16x96xf32> to vector<16x8xf32>
    %72 = vector.shape_cast %68 : vector<16x8xf32> to vector<1x16x8xf32>
    %73 = vector.shape_cast %69 : vector<16x8xf32> to vector<1x16x8xf32>
    %74 = vector.shape_cast %70 : vector<16x8xf32> to vector<1x16x8xf32>
    %75 = vector.shape_cast %71 : vector<16x8xf32> to vector<1x16x8xf32>
    %76 = tpu.concatenate %72, %73, %74, %75 in 0 : vector<1x16x8xf32>, vector<1x16x8xf32>, vector<1x16x8xf32>, vector<1x16x8xf32> -> vector<4x16x8xf32>
    "tpu.trace_start"() <{level = 10 : i32, message = "hqd,hkd->hqk"}> : () -> ()
    %cst_23 = arith.constant dense<0.000000e+00> : vector<4x16x16xf32>
    %77 = tpu.matmul %58, %67, %cst_23 {dimension_numbers = #tpu.dot_dimension_numbers<[2], [2], [1], [1], [0, 0, 0, 1, 1, 1], [0], [0]>} : vector<4x16x8xf32>, vector<4x16x8xf32>, vector<4x16x16xf32> -> vector<4x16x16xf32>
    "tpu.trace_stop"() : () -> ()
    %78 = vector.shape_cast %11 : vector<16x16xf32> to vector<1x16x16xf32>
    %79 = vector.broadcast %78 : vector<1x16x16xf32> to vector<4x16x16xf32>
    %80 = arith.addf %77, %79 : vector<4x16x16xf32>
    %cst_24 = arith.constant dense<0xFF800000> : vector<4x16xf32>
    %81 = vector.multi_reduction <maximumf>, %80, %cst_24 [2] : vector<4x16x16xf32> to vector<4x16xf32>
    %82 = vector.shape_cast %81 : vector<4x16xf32> to vector<4x16x1xf32>
    %83 = vector.broadcast %82 : vector<4x16x1xf32> to vector<4x16x16xf32>
    %84 = arith.subf %80, %83 : vector<4x16x16xf32>
    %85 = math.exp %84 : vector<4x16x16xf32>
    %cst_25 = arith.constant dense<0.000000e+00> : vector<4x16xf32>
    %86 = vector.multi_reduction <add>, %85, %cst_25 [2] : vector<4x16x16xf32> to vector<4x16xf32>
    %87 = vector.shape_cast %86 : vector<4x16xf32> to vector<4x16x1xf32>
    %88 = tpu.reciprocal %87 {approx = true} : vector<4x16x1xf32> -> vector<4x16x1xf32>
    %89 = vector.broadcast %88 : vector<4x16x1xf32> to vector<4x16x16xf32>
    %90 = arith.mulf %85, %89 : vector<4x16x16xf32>
    "tpu.trace_start"() <{level = 10 : i32, message = "hqk,hkd->hqd"}> : () -> ()
    %cst_26 = arith.constant dense<0.000000e+00> : vector<4x16x8xf32>
    %91 = tpu.matmul %90, %76, %cst_26 {dimension_numbers = #tpu.dot_dimension_numbers<[2], [1], [1], [2], [0, 0, 0, 1, 1, 2], [0], [0]>} : vector<4x16x16xf32>, vector<4x16x8xf32>, vector<4x16x8xf32> -> vector<4x16x8xf32>
    "tpu.trace_stop"() : () -> ()
    %92 = vector.extract_strided_slice %91 {offsets = [0, 0, 0], sizes = [1, 16, 8], strides = [1, 1, 1]} : vector<4x16x8xf32> to vector<1x16x8xf32>
    %93 = vector.shape_cast %92 : vector<1x16x8xf32> to vector<16x8xf32>
    %94 = vector.extract_strided_slice %91 {offsets = [1, 0, 0], sizes = [1, 16, 8], strides = [1, 1, 1]} : vector<4x16x8xf32> to vector<1x16x8xf32>
    %95 = vector.shape_cast %94 : vector<1x16x8xf32> to vector<16x8xf32>
    %96 = vector.extract_strided_slice %91 {offsets = [2, 0, 0], sizes = [1, 16, 8], strides = [1, 1, 1]} : vector<4x16x8xf32> to vector<1x16x8xf32>
    %97 = vector.shape_cast %96 : vector<1x16x8xf32> to vector<16x8xf32>
    %98 = vector.extract_strided_slice %91 {offsets = [3, 0, 0], sizes = [1, 16, 8], strides = [1, 1, 1]} : vector<4x16x8xf32> to vector<1x16x8xf32>
    %99 = vector.shape_cast %98 : vector<1x16x8xf32> to vector<16x8xf32>
    %100 = tpu.concatenate %93, %95, %97, %99 in 1 : vector<16x8xf32>, vector<16x8xf32>, vector<16x8xf32>, vector<16x8xf32> -> vector<16x32xf32>
    %c0_27 = arith.constant 0 : index
    %c0_28 = arith.constant 0 : index
    %c0_29 = arith.constant 0 : index
    %101 = vector.load %arg10[%c0_27, %c0_28, %c0_29] : memref<2x32x32xf32, #tpu.memory_space<vmem>>, vector<1x32x32xf32>
    %102 = vector.shape_cast %101 : vector<1x32x32xf32> to vector<32x32xf32>
    %cst_30 = arith.constant dense<0.000000e+00> : vector<16x32xf32>
    %103 = tpu.matmul %100, %102, %cst_30 {dimension_numbers = #tpu.dot_dimension_numbers<[1], [0], [0], [1], [0, 0, 1, 1], [], []>} : vector<16x32xf32>, vector<32x32xf32>, vector<16x32xf32> -> vector<16x32xf32>
    %104 = arith.addf %10, %103 : vector<16x32xf32>
    %c0_31 = arith.constant 0 : index
    %c0_32 = arith.constant 0 : index
    %105 = vector.load %arg11[%c0_31, %c0_32] : memref<2x32xf32, #tpu.memory_space<vmem>>, vector<1x32xf32>
    %106 = vector.shape_cast %105 : vector<1x32xf32> to vector<32xf32>
    %107 = vector.shape_cast %106 : vector<32xf32> to vector<1x32xf32>
    %108 = vector.broadcast %107 : vector<1x32xf32> to vector<16x32xf32>
    %109 = arith.addf %104, %108 : vector<16x32xf32>
    %c0_33 = arith.constant 0 : index
    %c0_34 = arith.constant 0 : index
    %110 = vector.load %arg12[%c0_33, %c0_34] : memref<2x32xf32, #tpu.memory_space<vmem>>, vector<1x32xf32>
    %111 = vector.shape_cast %110 : vector<1x32xf32> to vector<32xf32>
    %c0_35 = arith.constant 0 : index
    %c0_36 = arith.constant 0 : index
    %112 = vector.load %arg13[%c0_35, %c0_36] : memref<2x32xf32, #tpu.memory_space<vmem>>, vector<1x32xf32>
    %113 = vector.shape_cast %112 : vector<1x32xf32> to vector<32xf32>
    %cst_37 = arith.constant dense<0.000000e+00> : vector<16xf32>
    %114 = vector.multi_reduction <add>, %109, %cst_37 [1] : vector<16x32xf32> to vector<16xf32>
    %115 = vector.shape_cast %114 : vector<16xf32> to vector<16x1xf32>
    %cst_38 = arith.constant 3.200000e+01 : f32
    %116 = vector.broadcast %cst_38 : f32 to vector<16x1xf32>
    %117 = arith.divf %115, %116 : vector<16x1xf32>
    %118 = vector.broadcast %117 : vector<16x1xf32> to vector<16x32xf32>
    %119 = arith.subf %109, %118 : vector<16x32xf32>
    %120 = arith.mulf %119, %119 : vector<16x32xf32>
    %cst_39 = arith.constant dense<0.000000e+00> : vector<16xf32>
    %121 = vector.multi_reduction <add>, %120, %cst_39 [1] : vector<16x32xf32> to vector<16xf32>
    %122 = vector.shape_cast %121 : vector<16xf32> to vector<16x1xf32>
    %cst_40 = arith.constant 3.200000e+01 : f32
    %123 = vector.broadcast %cst_40 : f32 to vector<16x1xf32>
    %124 = arith.divf %122, %123 : vector<16x1xf32>
    %125 = vector.broadcast %117 : vector<16x1xf32> to vector<16x32xf32>
    %126 = arith.subf %109, %125 : vector<16x32xf32>
    %cst_41 = arith.constant 9.99999974E-6 : f32
    %127 = vector.broadcast %cst_41 : f32 to vector<16x1xf32>
    %128 = arith.addf %124, %127 : vector<16x1xf32>
    %129 = math.rsqrt %128 : vector<16x1xf32>
    %130 = vector.broadcast %129 : vector<16x1xf32> to vector<16x32xf32>
    %131 = arith.mulf %126, %130 : vector<16x32xf32>
    %132 = vector.shape_cast %111 : vector<32xf32> to vector<1x32xf32>
    %133 = vector.broadcast %132 : vector<1x32xf32> to vector<16x32xf32>
    %134 = arith.mulf %131, %133 : vector<16x32xf32>
    %135 = vector.shape_cast %113 : vector<32xf32> to vector<1x32xf32>
    %136 = vector.broadcast %135 : vector<1x32xf32> to vector<16x32xf32>
    %137 = arith.addf %134, %136 : vector<16x32xf32>
    %c0_42 = arith.constant 0 : index
    %c0_43 = arith.constant 0 : index
    %c0_44 = arith.constant 0 : index
    %138 = vector.load %arg14[%c0_42, %c0_43, %c0_44] : memref<2x32x128xf32, #tpu.memory_space<vmem>>, vector<1x32x128xf32>
    %139 = vector.shape_cast %138 : vector<1x32x128xf32> to vector<32x128xf32>
    %cst_45 = arith.constant dense<0.000000e+00> : vector<16x128xf32>
    %140 = tpu.matmul %137, %139, %cst_45 {dimension_numbers = #tpu.dot_dimension_numbers<[1], [0], [0], [1], [0, 0, 1, 1], [], []>} : vector<16x32xf32>, vector<32x128xf32>, vector<16x128xf32> -> vector<16x128xf32>
    %c0_46 = arith.constant 0 : index
    %c0_47 = arith.constant 0 : index
    %141 = vector.load %arg15[%c0_46, %c0_47] : memref<2x128xf32, #tpu.memory_space<vmem>>, vector<1x128xf32>
    %142 = vector.shape_cast %141 : vector<1x128xf32> to vector<128xf32>
    %143 = vector.shape_cast %142 : vector<128xf32> to vector<1x128xf32>
    %144 = vector.broadcast %143 : vector<1x128xf32> to vector<16x128xf32>
    %145 = arith.addf %140, %144 : vector<16x128xf32>
    %cst_48 = arith.constant 0.636619746 : f32
    %146 = math.sqrt %cst_48 : f32
    %cst_49 = arith.constant 5.000000e-01 : f32
    %147 = vector.broadcast %cst_49 : f32 to vector<16x128xf32>
    %148 = arith.mulf %147, %145 : vector<16x128xf32>
    %cst_50 = arith.constant 4.471500e-02 : f32
    %149 = vector.broadcast %cst_50 : f32 to vector<16x128xf32>
    %150 = arith.mulf %149, %145 : vector<16x128xf32>
    %151 = arith.mulf %150, %145 : vector<16x128xf32>
    %152 = arith.mulf %151, %145 : vector<16x128xf32>
    %153 = arith.addf %145, %152 : vector<16x128xf32>
    %154 = vector.broadcast %146 : f32 to vector<16x128xf32>
    %155 = arith.mulf %154, %153 : vector<16x128xf32>
    %156 = math.tanh %155 : vector<16x128xf32>
    %cst_51 = arith.constant 1.000000e+00 : f32
    %157 = vector.broadcast %cst_51 : f32 to vector<16x128xf32>
    %158 = arith.addf %157, %156 : vector<16x128xf32>
    %159 = arith.mulf %148, %158 : vector<16x128xf32>
    %c0_52 = arith.constant 0 : index
    %c0_53 = arith.constant 0 : index
    %c0_54 = arith.constant 0 : index
    %160 = vector.load %arg16[%c0_52, %c0_53, %c0_54] : memref<2x128x32xf32, #tpu.memory_space<vmem>>, vector<1x128x32xf32>
    %161 = vector.shape_cast %160 : vector<1x128x32xf32> to vector<128x32xf32>
    %cst_55 = arith.constant dense<0.000000e+00> : vector<16x32xf32>
    %162 = tpu.matmul %159, %161, %cst_55 {dimension_numbers = #tpu.dot_dimension_numbers<[1], [0], [0], [1], [0, 0, 1, 1], [], []>} : vector<16x128xf32>, vector<128x32xf32>, vector<16x32xf32> -> vector<16x32xf32>
    %c0_56 = arith.constant 0 : index
    %c0_57 = arith.constant 0 : index
    %163 = vector.load %arg17[%c0_56, %c0_57] : memref<2x32xf32, #tpu.memory_space<vmem>>, vector<1x32xf32>
    %164 = vector.shape_cast %163 : vector<1x32xf32> to vector<32xf32>
    %165 = vector.shape_cast %164 : vector<32xf32> to vector<1x32xf32>
    %166 = vector.broadcast %165 : vector<1x32xf32> to vector<16x32xf32>
    %167 = arith.addf %162, %166 : vector<16x32xf32>
    %168 = arith.addf %109, %167 : vector<16x32xf32>
    %c1 = arith.constant 1 : index
    %c0_58 = arith.constant 0 : index
    %169 = vector.load %arg6[%c1, %c0_58] : memref<2x32xf32, #tpu.memory_space<vmem>>, vector<1x32xf32>
    %170 = vector.shape_cast %169 : vector<1x32xf32> to vector<32xf32>
    %c1_59 = arith.constant 1 : index
    %c0_60 = arith.constant 0 : index
    %171 = vector.load %arg7[%c1_59, %c0_60] : memref<2x32xf32, #tpu.memory_space<vmem>>, vector<1x32xf32>
    %172 = vector.shape_cast %171 : vector<1x32xf32> to vector<32xf32>
    %cst_61 = arith.constant dense<0.000000e+00> : vector<16xf32>
    %173 = vector.multi_reduction <add>, %168, %cst_61 [1] : vector<16x32xf32> to vector<16xf32>
    %174 = vector.shape_cast %173 : vector<16xf32> to vector<16x1xf32>
    %cst_62 = arith.constant 3.200000e+01 : f32
    %175 = vector.broadcast %cst_62 : f32 to vector<16x1xf32>
    %176 = arith.divf %174, %175 : vector<16x1xf32>
    %177 = vector.broadcast %176 : vector<16x1xf32> to vector<16x32xf32>
    %178 = arith.subf %168, %177 : vector<16x32xf32>
    %179 = arith.mulf %178, %178 : vector<16x32xf32>
    %cst_63 = arith.constant dense<0.000000e+00> : vector<16xf32>
    %180 = vector.multi_reduction <add>, %179, %cst_63 [1] : vector<16x32xf32> to vector<16xf32>
    %181 = vector.shape_cast %180 : vector<16xf32> to vector<16x1xf32>
    %cst_64 = arith.constant 3.200000e+01 : f32
    %182 = vector.broadcast %cst_64 : f32 to vector<16x1xf32>
    %183 = arith.divf %181, %182 : vector<16x1xf32>
    %184 = vector.broadcast %176 : vector<16x1xf32> to vector<16x32xf32>
    %185 = arith.subf %168, %184 : vector<16x32xf32>
    %cst_65 = arith.constant 9.99999974E-6 : f32
    %186 = vector.broadcast %cst_65 : f32 to vector<16x1xf32>
    %187 = arith.addf %183, %186 : vector<16x1xf32>
    %188 = math.rsqrt %187 : vector<16x1xf32>
    %189 = vector.broadcast %188 : vector<16x1xf32> to vector<16x32xf32>
    %190 = arith.mulf %185, %189 : vector<16x32xf32>
    %191 = vector.shape_cast %170 : vector<32xf32> to vector<1x32xf32>
    %192 = vector.broadcast %191 : vector<1x32xf32> to vector<16x32xf32>
    %193 = arith.mulf %190, %192 : vector<16x32xf32>
    %194 = vector.shape_cast %172 : vector<32xf32> to vector<1x32xf32>
    %195 = vector.broadcast %194 : vector<1x32xf32> to vector<16x32xf32>
    %196 = arith.addf %193, %195 : vector<16x32xf32>
    %c1_66 = arith.constant 1 : index
    %c0_67 = arith.constant 0 : index
    %c0_68 = arith.constant 0 : index
    %197 = vector.load %arg8[%c1_66, %c0_67, %c0_68] : memref<2x32x96xf32, #tpu.memory_space<vmem>>, vector<1x32x96xf32>
    %198 = vector.shape_cast %197 : vector<1x32x96xf32> to vector<32x96xf32>
    %cst_69 = arith.constant dense<0.000000e+00> : vector<16x96xf32>
    %199 = tpu.matmul %196, %198, %cst_69 {dimension_numbers = #tpu.dot_dimension_numbers<[1], [0], [0], [1], [0, 0, 1, 1], [], []>} : vector<16x32xf32>, vector<32x96xf32>, vector<16x96xf32> -> vector<16x96xf32>
    %c1_70 = arith.constant 1 : index
    %c0_71 = arith.constant 0 : index
    %200 = vector.load %arg9[%c1_70, %c0_71] : memref<2x96xf32, #tpu.memory_space<vmem>>, vector<1x96xf32>
    %201 = vector.shape_cast %200 : vector<1x96xf32> to vector<96xf32>
    %202 = vector.shape_cast %201 : vector<96xf32> to vector<1x96xf32>
    %203 = vector.broadcast %202 : vector<1x96xf32> to vector<16x96xf32>
    %204 = arith.addf %199, %203 : vector<16x96xf32>
    %205 = vector.extract_strided_slice %204 {offsets = [0, 0], sizes = [16, 8], strides = [1, 1]} : vector<16x96xf32> to vector<16x8xf32>
    %206 = vector.extract_strided_slice %204 {offsets = [0, 8], sizes = [16, 8], strides = [1, 1]} : vector<16x96xf32> to vector<16x8xf32>
    %207 = vector.extract_strided_slice %204 {offsets = [0, 16], sizes = [16, 8], strides = [1, 1]} : vector<16x96xf32> to vector<16x8xf32>
    %208 = vector.extract_strided_slice %204 {offsets = [0, 24], sizes = [16, 8], strides = [1, 1]} : vector<16x96xf32> to vector<16x8xf32>
    %209 = vector.shape_cast %205 : vector<16x8xf32> to vector<1x16x8xf32>
    %210 = vector.shape_cast %206 : vector<16x8xf32> to vector<1x16x8xf32>
    %211 = vector.shape_cast %207 : vector<16x8xf32> to vector<1x16x8xf32>
    %212 = vector.shape_cast %208 : vector<16x8xf32> to vector<1x16x8xf32>
    %213 = tpu.concatenate %209, %210, %211, %212 in 0 : vector<1x16x8xf32>, vector<1x16x8xf32>, vector<1x16x8xf32>, vector<1x16x8xf32> -> vector<4x16x8xf32>
    %cst_72 = arith.constant 0.353553385 : f32
    %214 = vector.broadcast %cst_72 : f32 to vector<4x16x8xf32>
    %215 = arith.mulf %213, %214 : vector<4x16x8xf32>
    %216 = vector.extract_strided_slice %204 {offsets = [0, 32], sizes = [16, 8], strides = [1, 1]} : vector<16x96xf32> to vector<16x8xf32>
    %217 = vector.extract_strided_slice %204 {offsets = [0, 40], sizes = [16, 8], strides = [1, 1]} : vector<16x96xf32> to vector<16x8xf32>
    %218 = vector.extract_strided_slice %204 {offsets = [0, 48], sizes = [16, 8], strides = [1, 1]} : vector<16x96xf32> to vector<16x8xf32>
    %219 = vector.extract_strided_slice %204 {offsets = [0, 56], sizes = [16, 8], strides = [1, 1]} : vector<16x96xf32> to vector<16x8xf32>
    %220 = vector.shape_cast %216 : vector<16x8xf32> to vector<1x16x8xf32>
    %221 = vector.shape_cast %217 : vector<16x8xf32> to vector<1x16x8xf32>
    %222 = vector.shape_cast %218 : vector<16x8xf32> to vector<1x16x8xf32>
    %223 = vector.shape_cast %219 : vector<16x8xf32> to vector<1x16x8xf32>
    %224 = tpu.concatenate %220, %221, %222, %223 in 0 : vector<1x16x8xf32>, vector<1x16x8xf32>, vector<1x16x8xf32>, vector<1x16x8xf32> -> vector<4x16x8xf32>
    %225 = vector.extract_strided_slice %204 {offsets = [0, 64], sizes = [16, 8], strides = [1, 1]} : vector<16x96xf32> to vector<16x8xf32>
    %226 = vector.extract_strided_slice %204 {offsets = [0, 72], sizes = [16, 8], strides = [1, 1]} : vector<16x96xf32> to vector<16x8xf32>
    %227 = vector.extract_strided_slice %204 {offsets = [0, 80], sizes = [16, 8], strides = [1, 1]} : vector<16x96xf32> to vector<16x8xf32>
    %228 = vector.extract_strided_slice %204 {offsets = [0, 88], sizes = [16, 8], strides = [1, 1]} : vector<16x96xf32> to vector<16x8xf32>
    %229 = vector.shape_cast %225 : vector<16x8xf32> to vector<1x16x8xf32>
    %230 = vector.shape_cast %226 : vector<16x8xf32> to vector<1x16x8xf32>
    %231 = vector.shape_cast %227 : vector<16x8xf32> to vector<1x16x8xf32>
    %232 = vector.shape_cast %228 : vector<16x8xf32> to vector<1x16x8xf32>
    %233 = tpu.concatenate %229, %230, %231, %232 in 0 : vector<1x16x8xf32>, vector<1x16x8xf32>, vector<1x16x8xf32>, vector<1x16x8xf32> -> vector<4x16x8xf32>
    "tpu.trace_start"() <{level = 10 : i32, message = "hqd,hkd->hqk"}> : () -> ()
    %cst_73 = arith.constant dense<0.000000e+00> : vector<4x16x16xf32>
    %234 = tpu.matmul %215, %224, %cst_73 {dimension_numbers = #tpu.dot_dimension_numbers<[2], [2], [1], [1], [0, 0, 0, 1, 1, 1], [0], [0]>} : vector<4x16x8xf32>, vector<4x16x8xf32>, vector<4x16x16xf32> -> vector<4x16x16xf32>
    "tpu.trace_stop"() : () -> ()
    %235 = vector.shape_cast %11 : vector<16x16xf32> to vector<1x16x16xf32>
    %236 = vector.broadcast %235 : vector<1x16x16xf32> to vector<4x16x16xf32>
    %237 = arith.addf %234, %236 : vector<4x16x16xf32>
    %cst_74 = arith.constant dense<0xFF800000> : vector<4x16xf32>
    %238 = vector.multi_reduction <maximumf>, %237, %cst_74 [2] : vector<4x16x16xf32> to vector<4x16xf32>
    %239 = vector.shape_cast %238 : vector<4x16xf32> to vector<4x16x1xf32>
    %240 = vector.broadcast %239 : vector<4x16x1xf32> to vector<4x16x16xf32>
    %241 = arith.subf %237, %240 : vector<4x16x16xf32>
    %242 = math.exp %241 : vector<4x16x16xf32>
    %cst_75 = arith.constant dense<0.000000e+00> : vector<4x16xf32>
    %243 = vector.multi_reduction <add>, %242, %cst_75 [2] : vector<4x16x16xf32> to vector<4x16xf32>
    %244 = vector.shape_cast %243 : vector<4x16xf32> to vector<4x16x1xf32>
    %245 = tpu.reciprocal %244 {approx = true} : vector<4x16x1xf32> -> vector<4x16x1xf32>
    %246 = vector.broadcast %245 : vector<4x16x1xf32> to vector<4x16x16xf32>
    %247 = arith.mulf %242, %246 : vector<4x16x16xf32>
    "tpu.trace_start"() <{level = 10 : i32, message = "hqk,hkd->hqd"}> : () -> ()
    %cst_76 = arith.constant dense<0.000000e+00> : vector<4x16x8xf32>
    %248 = tpu.matmul %247, %233, %cst_76 {dimension_numbers = #tpu.dot_dimension_numbers<[2], [1], [1], [2], [0, 0, 0, 1, 1, 2], [0], [0]>} : vector<4x16x16xf32>, vector<4x16x8xf32>, vector<4x16x8xf32> -> vector<4x16x8xf32>
    "tpu.trace_stop"() : () -> ()
    %249 = vector.extract_strided_slice %248 {offsets = [0, 0, 0], sizes = [1, 16, 8], strides = [1, 1, 1]} : vector<4x16x8xf32> to vector<1x16x8xf32>
    %250 = vector.shape_cast %249 : vector<1x16x8xf32> to vector<16x8xf32>
    %251 = vector.extract_strided_slice %248 {offsets = [1, 0, 0], sizes = [1, 16, 8], strides = [1, 1, 1]} : vector<4x16x8xf32> to vector<1x16x8xf32>
    %252 = vector.shape_cast %251 : vector<1x16x8xf32> to vector<16x8xf32>
    %253 = vector.extract_strided_slice %248 {offsets = [2, 0, 0], sizes = [1, 16, 8], strides = [1, 1, 1]} : vector<4x16x8xf32> to vector<1x16x8xf32>
    %254 = vector.shape_cast %253 : vector<1x16x8xf32> to vector<16x8xf32>
    %255 = vector.extract_strided_slice %248 {offsets = [3, 0, 0], sizes = [1, 16, 8], strides = [1, 1, 1]} : vector<4x16x8xf32> to vector<1x16x8xf32>
    %256 = vector.shape_cast %255 : vector<1x16x8xf32> to vector<16x8xf32>
    %257 = tpu.concatenate %250, %252, %254, %256 in 1 : vector<16x8xf32>, vector<16x8xf32>, vector<16x8xf32>, vector<16x8xf32> -> vector<16x32xf32>
    %c1_77 = arith.constant 1 : index
    %c0_78 = arith.constant 0 : index
    %c0_79 = arith.constant 0 : index
    %258 = vector.load %arg10[%c1_77, %c0_78, %c0_79] : memref<2x32x32xf32, #tpu.memory_space<vmem>>, vector<1x32x32xf32>
    %259 = vector.shape_cast %258 : vector<1x32x32xf32> to vector<32x32xf32>
    %cst_80 = arith.constant dense<0.000000e+00> : vector<16x32xf32>
    %260 = tpu.matmul %257, %259, %cst_80 {dimension_numbers = #tpu.dot_dimension_numbers<[1], [0], [0], [1], [0, 0, 1, 1], [], []>} : vector<16x32xf32>, vector<32x32xf32>, vector<16x32xf32> -> vector<16x32xf32>
    %261 = arith.addf %168, %260 : vector<16x32xf32>
    %c1_81 = arith.constant 1 : index
    %c0_82 = arith.constant 0 : index
    %262 = vector.load %arg11[%c1_81, %c0_82] : memref<2x32xf32, #tpu.memory_space<vmem>>, vector<1x32xf32>
    %263 = vector.shape_cast %262 : vector<1x32xf32> to vector<32xf32>
    %264 = vector.shape_cast %263 : vector<32xf32> to vector<1x32xf32>
    %265 = vector.broadcast %264 : vector<1x32xf32> to vector<16x32xf32>
    %266 = arith.addf %261, %265 : vector<16x32xf32>
    %c1_83 = arith.constant 1 : index
    %c0_84 = arith.constant 0 : index
    %267 = vector.load %arg12[%c1_83, %c0_84] : memref<2x32xf32, #tpu.memory_space<vmem>>, vector<1x32xf32>
    %268 = vector.shape_cast %267 : vector<1x32xf32> to vector<32xf32>
    %c1_85 = arith.constant 1 : index
    %c0_86 = arith.constant 0 : index
    %269 = vector.load %arg13[%c1_85, %c0_86] : memref<2x32xf32, #tpu.memory_space<vmem>>, vector<1x32xf32>
    %270 = vector.shape_cast %269 : vector<1x32xf32> to vector<32xf32>
    %cst_87 = arith.constant dense<0.000000e+00> : vector<16xf32>
    %271 = vector.multi_reduction <add>, %266, %cst_87 [1] : vector<16x32xf32> to vector<16xf32>
    %272 = vector.shape_cast %271 : vector<16xf32> to vector<16x1xf32>
    %cst_88 = arith.constant 3.200000e+01 : f32
    %273 = vector.broadcast %cst_88 : f32 to vector<16x1xf32>
    %274 = arith.divf %272, %273 : vector<16x1xf32>
    %275 = vector.broadcast %274 : vector<16x1xf32> to vector<16x32xf32>
    %276 = arith.subf %266, %275 : vector<16x32xf32>
    %277 = arith.mulf %276, %276 : vector<16x32xf32>
    %cst_89 = arith.constant dense<0.000000e+00> : vector<16xf32>
    %278 = vector.multi_reduction <add>, %277, %cst_89 [1] : vector<16x32xf32> to vector<16xf32>
    %279 = vector.shape_cast %278 : vector<16xf32> to vector<16x1xf32>
    %cst_90 = arith.constant 3.200000e+01 : f32
    %280 = vector.broadcast %cst_90 : f32 to vector<16x1xf32>
    %281 = arith.divf %279, %280 : vector<16x1xf32>
    %282 = vector.broadcast %274 : vector<16x1xf32> to vector<16x32xf32>
    %283 = arith.subf %266, %282 : vector<16x32xf32>
    %cst_91 = arith.constant 9.99999974E-6 : f32
    %284 = vector.broadcast %cst_91 : f32 to vector<16x1xf32>
    %285 = arith.addf %281, %284 : vector<16x1xf32>
    %286 = math.rsqrt %285 : vector<16x1xf32>
    %287 = vector.broadcast %286 : vector<16x1xf32> to vector<16x32xf32>
    %288 = arith.mulf %283, %287 : vector<16x32xf32>
    %289 = vector.shape_cast %268 : vector<32xf32> to vector<1x32xf32>
    %290 = vector.broadcast %289 : vector<1x32xf32> to vector<16x32xf32>
    %291 = arith.mulf %288, %290 : vector<16x32xf32>
    %292 = vector.shape_cast %270 : vector<32xf32> to vector<1x32xf32>
    %293 = vector.broadcast %292 : vector<1x32xf32> to vector<16x32xf32>
    %294 = arith.addf %291, %293 : vector<16x32xf32>
    %c1_92 = arith.constant 1 : index
    %c0_93 = arith.constant 0 : index
    %c0_94 = arith.constant 0 : index
    %295 = vector.load %arg14[%c1_92, %c0_93, %c0_94] : memref<2x32x128xf32, #tpu.memory_space<vmem>>, vector<1x32x128xf32>
    %296 = vector.shape_cast %295 : vector<1x32x128xf32> to vector<32x128xf32>
    %cst_95 = arith.constant dense<0.000000e+00> : vector<16x128xf32>
    %297 = tpu.matmul %294, %296, %cst_95 {dimension_numbers = #tpu.dot_dimension_numbers<[1], [0], [0], [1], [0, 0, 1, 1], [], []>} : vector<16x32xf32>, vector<32x128xf32>, vector<16x128xf32> -> vector<16x128xf32>
    %c1_96 = arith.constant 1 : index
    %c0_97 = arith.constant 0 : index
    %298 = vector.load %arg15[%c1_96, %c0_97] : memref<2x128xf32, #tpu.memory_space<vmem>>, vector<1x128xf32>
    %299 = vector.shape_cast %298 : vector<1x128xf32> to vector<128xf32>
    %300 = vector.shape_cast %299 : vector<128xf32> to vector<1x128xf32>
    %301 = vector.broadcast %300 : vector<1x128xf32> to vector<16x128xf32>
    %302 = arith.addf %297, %301 : vector<16x128xf32>
    %cst_98 = arith.constant 0.636619746 : f32
    %303 = math.sqrt %cst_98 : f32
    %cst_99 = arith.constant 5.000000e-01 : f32
    %304 = vector.broadcast %cst_99 : f32 to vector<16x128xf32>
    %305 = arith.mulf %304, %302 : vector<16x128xf32>
    %cst_100 = arith.constant 4.471500e-02 : f32
    %306 = vector.broadcast %cst_100 : f32 to vector<16x128xf32>
    %307 = arith.mulf %306, %302 : vector<16x128xf32>
    %308 = arith.mulf %307, %302 : vector<16x128xf32>
    %309 = arith.mulf %308, %302 : vector<16x128xf32>
    %310 = arith.addf %302, %309 : vector<16x128xf32>
    %311 = vector.broadcast %303 : f32 to vector<16x128xf32>
    %312 = arith.mulf %311, %310 : vector<16x128xf32>
    %313 = math.tanh %312 : vector<16x128xf32>
    %cst_101 = arith.constant 1.000000e+00 : f32
    %314 = vector.broadcast %cst_101 : f32 to vector<16x128xf32>
    %315 = arith.addf %314, %313 : vector<16x128xf32>
    %316 = arith.mulf %305, %315 : vector<16x128xf32>
    %c1_102 = arith.constant 1 : index
    %c0_103 = arith.constant 0 : index
    %c0_104 = arith.constant 0 : index
    %317 = vector.load %arg16[%c1_102, %c0_103, %c0_104] : memref<2x128x32xf32, #tpu.memory_space<vmem>>, vector<1x128x32xf32>
    %318 = vector.shape_cast %317 : vector<1x128x32xf32> to vector<128x32xf32>
    %cst_105 = arith.constant dense<0.000000e+00> : vector<16x32xf32>
    %319 = tpu.matmul %316, %318, %cst_105 {dimension_numbers = #tpu.dot_dimension_numbers<[1], [0], [0], [1], [0, 0, 1, 1], [], []>} : vector<16x128xf32>, vector<128x32xf32>, vector<16x32xf32> -> vector<16x32xf32>
    %c1_106 = arith.constant 1 : index
    %c0_107 = arith.constant 0 : index
    %320 = vector.load %arg17[%c1_106, %c0_107] : memref<2x32xf32, #tpu.memory_space<vmem>>, vector<1x32xf32>
    %321 = vector.shape_cast %320 : vector<1x32xf32> to vector<32xf32>
    %322 = vector.shape_cast %321 : vector<32xf32> to vector<1x32xf32>
    %323 = vector.broadcast %322 : vector<1x32xf32> to vector<16x32xf32>
    %324 = arith.addf %319, %323 : vector<16x32xf32>
    %325 = arith.addf %266, %324 : vector<16x32xf32>
    %c0_108 = arith.constant 0 : index
    %c0_109 = arith.constant 0 : index
    %326 = vector.load %arg18[%c0_108, %c0_109] : memref<1x32xf32, #tpu.memory_space<vmem>>, vector<1x32xf32>
    %327 = vector.shape_cast %326 : vector<1x32xf32> to vector<32xf32>
    %c0_110 = arith.constant 0 : index
    %c0_111 = arith.constant 0 : index
    %328 = vector.load %arg19[%c0_110, %c0_111] : memref<1x32xf32, #tpu.memory_space<vmem>>, vector<1x32xf32>
    %329 = vector.shape_cast %328 : vector<1x32xf32> to vector<32xf32>
    %cst_112 = arith.constant dense<0.000000e+00> : vector<16xf32>
    %330 = vector.multi_reduction <add>, %325, %cst_112 [1] : vector<16x32xf32> to vector<16xf32>
    %331 = vector.shape_cast %330 : vector<16xf32> to vector<16x1xf32>
    %cst_113 = arith.constant 3.200000e+01 : f32
    %332 = vector.broadcast %cst_113 : f32 to vector<16x1xf32>
    %333 = arith.divf %331, %332 : vector<16x1xf32>
    %334 = vector.broadcast %333 : vector<16x1xf32> to vector<16x32xf32>
    %335 = arith.subf %325, %334 : vector<16x32xf32>
    %336 = arith.mulf %335, %335 : vector<16x32xf32>
    %cst_114 = arith.constant dense<0.000000e+00> : vector<16xf32>
    %337 = vector.multi_reduction <add>, %336, %cst_114 [1] : vector<16x32xf32> to vector<16xf32>
    %338 = vector.shape_cast %337 : vector<16xf32> to vector<16x1xf32>
    %cst_115 = arith.constant 3.200000e+01 : f32
    %339 = vector.broadcast %cst_115 : f32 to vector<16x1xf32>
    %340 = arith.divf %338, %339 : vector<16x1xf32>
    %341 = vector.broadcast %333 : vector<16x1xf32> to vector<16x32xf32>
    %342 = arith.subf %325, %341 : vector<16x32xf32>
    %cst_116 = arith.constant 9.99999974E-6 : f32
    %343 = vector.broadcast %cst_116 : f32 to vector<16x1xf32>
    %344 = arith.addf %340, %343 : vector<16x1xf32>
    %345 = math.rsqrt %344 : vector<16x1xf32>
    %346 = vector.broadcast %345 : vector<16x1xf32> to vector<16x32xf32>
    %347 = arith.mulf %342, %346 : vector<16x32xf32>
    %348 = vector.shape_cast %327 : vector<32xf32> to vector<1x32xf32>
    %349 = vector.broadcast %348 : vector<1x32xf32> to vector<16x32xf32>
    %350 = arith.mulf %347, %349 : vector<16x32xf32>
    %351 = vector.shape_cast %329 : vector<32xf32> to vector<1x32xf32>
    %352 = vector.broadcast %351 : vector<1x32xf32> to vector<16x32xf32>
    %353 = arith.addf %350, %352 : vector<16x32xf32>
    %c0_117 = arith.constant 0 : index
    %c0_118 = arith.constant 0 : index
    %354 = vector.load %arg2[%c0_117, %c0_118] : memref<2x8xi32, #tpu.memory_space<vmem>>, vector<2x8xi32>
    %355 = tpu.iota {dimensions = array<i32: 1>} : vector<2x8xi32>
    %cst_119 = arith.constant dense<-2147483648> : vector<2xi32>
    %356 = vector.multi_reduction <maxsi>, %354, %cst_119 [1] : vector<2x8xi32> to vector<2xi32>
    %357 = vector.shape_cast %356 : vector<2xi32> to vector<2x1xi32>
    %358 = vector.broadcast %357 : vector<2x1xi32> to vector<2x8xi32>
    %359 = arith.cmpi eq, %354, %358 : vector<2x8xi32>
    %c8_i32 = arith.constant 8 : i32
    %360 = vector.broadcast %c8_i32 : i32 to vector<2x8xi32>
    %361 = arith.select %359, %355, %360 : vector<2x8xi1>, vector<2x8xi32>
    %cst_120 = arith.constant dense<2147483647> : vector<2xi32>
    %362 = vector.multi_reduction <minsi>, %361, %cst_120 [1] : vector<2x8xi32> to vector<2xi32>
    %363 = vector.shape_cast %362 : vector<2xi32> to vector<2x1xi32>
    %364 = tpu.iota {dimensions = array<i32: 0>} : vector<2x1xi32>
    %c8_i32_121 = arith.constant 8 : i32
    %365 = vector.broadcast %c8_i32_121 : i32 to vector<2x1xi32>
    %366 = arith.muli %364, %365 : vector<2x1xi32>
    %367 = arith.addi %363, %366 : vector<2x1xi32>
    %368 = tpu.iota {dimensions = array<i32: 1>} : vector<2x16xi32>
    %369 = vector.broadcast %367 : vector<2x1xi32> to vector<2x16xi32>
    %370 = arith.cmpi eq, %368, %369 : vector<2x16xi32>
    %371 = arith.extui %370 : vector<2x16xi1> to vector<2x16xi32>
    %372 = arith.sitofp %371 : vector<2x16xi32> to vector<2x16xf32>
    %cst_122 = arith.constant dense<0.000000e+00> : vector<2x32xf32>
    %373 = tpu.matmul %372, %353, %cst_122 {dimension_numbers = #tpu.dot_dimension_numbers<[1], [0], [0], [1], [0, 0, 1, 1], [], []>} : vector<2x16xf32>, vector<16x32xf32>, vector<2x32xf32> -> vector<2x32xf32>
    %c0_123 = arith.constant 0 : index
    %c0_124 = arith.constant 0 : index
    %374 = vector.load %arg20[%c0_123, %c0_124] : memref<32x32xf32, #tpu.memory_space<vmem>>, vector<32x32xf32>
    %cst_125 = arith.constant dense<0.000000e+00> : vector<2x32xf32>
    %375 = tpu.matmul %373, %374, %cst_125 {dimension_numbers = #tpu.dot_dimension_numbers<[1], [0], [0], [1], [0, 0, 1, 1], [], []>} : vector<2x32xf32>, vector<32x32xf32>, vector<2x32xf32> -> vector<2x32xf32>
    %c0_126 = arith.constant 0 : index
    %c0_127 = arith.constant 0 : index
    %376 = vector.load %arg21[%c0_126, %c0_127] : memref<1x32xf32, #tpu.memory_space<vmem>>, vector<1x32xf32>
    %377 = vector.broadcast %376 : vector<1x32xf32> to vector<2x32xf32>
    %378 = arith.mulf %375, %377 : vector<2x32xf32>
    %cst_128 = arith.constant dense<0.000000e+00> : vector<2xf32>
    %379 = vector.multi_reduction <add>, %378, %cst_128 [1] : vector<2x32xf32> to vector<2xf32>
    %380 = vector.shape_cast %379 : vector<2xf32> to vector<2x1xf32>
    %c0_129 = arith.constant 0 : index
    %c0_130 = arith.constant 0 : index
    %381 = vector.load %arg22[%c0_129, %c0_130] : memref<1x1xf32, #tpu.memory_space<vmem>>, vector<1x1xf32>
    %382 = vector.broadcast %381 : vector<1x1xf32> to vector<2x1xf32>
    %383 = arith.addf %380, %382 : vector<2x1xf32>
    %c0_131 = arith.constant 0 : index
    %c0_132 = arith.constant 0 : index
    %384 = vector.load %arg23[%c0_131, %c0_132] : memref<2x1xf32, #tpu.memory_space<vmem>>, vector<2x1xf32>
    tpu.vector_store %arg23[%c0_131, %c0_132], %383 {strides = array<i32>} : memref<2x1xf32, #tpu.memory_space<vmem>>, vector<2x1xf32>,
    return
  }
  func.func @transform_0(%arg0: i32) -> (i32, i32) {
    %c0_i32 = arith.constant 0 : i32
    %c0_i32_0 = arith.constant 0 : i32
    %c0_i32_1 = arith.constant 0 : i32
    return %c0_i32, %c0_i32_0 : i32, i32
  }
  func.func @transform_1(%arg0: i32) -> (i32, i32) {
    %c0_i32 = arith.constant 0 : i32
    %c0_i32_0 = arith.constant 0 : i32
    %c0_i32_1 = arith.constant 0 : i32
    return %c0_i32, %c0_i32_0 : i32, i32
  }
  func.func @transform_2(%arg0: i32) -> (i32, i32) {
    %c0_i32 = arith.constant 0 : i32
    %c0_i32_0 = arith.constant 0 : i32
    %c0_i32_1 = arith.constant 0 : i32
    return %c0_i32, %c0_i32_0 : i32, i32
  }
  func.func @transform_3(%arg0: i32) -> (i32, i32) {
    %c0_i32 = arith.constant 0 : i32
    %c0_i32_0 = arith.constant 0 : i32
    %c0_i32_1 = arith.constant 0 : i32
    return %c0_i32, %c0_i32_0 : i32, i32
  }
  func.func @transform_4(%arg0: i32) -> (i32, i32) {
    %c0_i32 = arith.constant 0 : i32
    %c0_i32_0 = arith.constant 0 : i32
    %c0_i32_1 = arith.constant 0 : i32
    return %c0_i32, %c0_i32_0 : i32, i32
  }
  func.func @transform_5(%arg0: i32) -> (i32, i32) {
    %c0_i32 = arith.constant 0 : i32
    %c0_i32_0 = arith.constant 0 : i32
    %c0_i32_1 = arith.constant 0 : i32
    return %c0_i32, %c0_i32_0 : i32, i32
  }
  func.func @transform_6(%arg0: i32) -> (i32, i32) {
    %c0_i32 = arith.constant 0 : i32
    %c0_i32_0 = arith.constant 0 : i32
    %c0_i32_1 = arith.constant 0 : i32
    return %c0_i32, %c0_i32_0 : i32, i32
  }
  func.func @transform_7(%arg0: i32) -> (i32, i32, i32) {
    %c0_i32 = arith.constant 0 : i32
    %c0_i32_0 = arith.constant 0 : i32
    %c0_i32_1 = arith.constant 0 : i32
    %c0_i32_2 = arith.constant 0 : i32
    return %c0_i32, %c0_i32_0, %c0_i32_1 : i32, i32, i32
  }
  func.func @transform_8(%arg0: i32) -> (i32, i32) {
    %c0_i32 = arith.constant 0 : i32
    %c0_i32_0 = arith.constant 0 : i32
    %c0_i32_1 = arith.constant 0 : i32
    return %c0_i32, %c0_i32_0 : i32, i32
  }
  func.func @transform_9(%arg0: i32) -> (i32, i32, i32) {
    %c0_i32 = arith.constant 0 : i32
    %c0_i32_0 = arith.constant 0 : i32
    %c0_i32_1 = arith.constant 0 : i32
    %c0_i32_2 = arith.constant 0 : i32
    return %c0_i32, %c0_i32_0, %c0_i32_1 : i32, i32, i32
  }
  func.func @transform_10(%arg0: i32) -> (i32, i32) {
    %c0_i32 = arith.constant 0 : i32
    %c0_i32_0 = arith.constant 0 : i32
    %c0_i32_1 = arith.constant 0 : i32
    return %c0_i32, %c0_i32_0 : i32, i32
  }
  func.func @transform_11(%arg0: i32) -> (i32, i32) {
    %c0_i32 = arith.constant 0 : i32
    %c0_i32_0 = arith.constant 0 : i32
    %c0_i32_1 = arith.constant 0 : i32
    return %c0_i32, %c0_i32_0 : i32, i32
  }
  func.func @transform_12(%arg0: i32) -> (i32, i32) {
    %c0_i32 = arith.constant 0 : i32
    %c0_i32_0 = arith.constant 0 : i32
    %c0_i32_1 = arith.constant 0 : i32
    return %c0_i32, %c0_i32_0 : i32, i32
  }
  func.func @transform_13(%arg0: i32) -> (i32, i32, i32) {
    %c0_i32 = arith.constant 0 : i32
    %c0_i32_0 = arith.constant 0 : i32
    %c0_i32_1 = arith.constant 0 : i32
    %c0_i32_2 = arith.constant 0 : i32
    return %c0_i32, %c0_i32_0, %c0_i32_1 : i32, i32, i32
  }
  func.func @transform_14(%arg0: i32) -> (i32, i32) {
    %c0_i32 = arith.constant 0 : i32
    %c0_i32_0 = arith.constant 0 : i32
    %c0_i32_1 = arith.constant 0 : i32
    return %c0_i32, %c0_i32_0 : i32, i32
  }
  func.func @transform_15(%arg0: i32) -> (i32, i32, i32) {
    %c0_i32 = arith.constant 0 : i32
    %c0_i32_0 = arith.constant 0 : i32
    %c0_i32_1 = arith.constant 0 : i32
    %c0_i32_2 = arith.constant 0 : i32
    return %c0_i32, %c0_i32_0, %c0_i32_1 : i32, i32, i32
  }
  func.func @transform_16(%arg0: i32) -> (i32, i32) {
    %c0_i32 = arith.constant 0 : i32
    %c0_i32_0 = arith.constant 0 : i32
    %c0_i32_1 = arith.constant 0 : i32
    return %c0_i32, %c0_i32_0 : i32, i32
  }
  func.func @transform_17(%arg0: i32) -> (i32, i32) {
    %c0_i32 = arith.constant 0 : i32
    %c0_i32_0 = arith.constant 0 : i32
    %c0_i32_1 = arith.constant 0 : i32
    return %c0_i32, %c0_i32_0 : i32, i32
  }
  func.func @transform_18(%arg0: i32) -> (i32, i32) {
    %c0_i32 = arith.constant 0 : i32
    %c0_i32_0 = arith.constant 0 : i32
    %c0_i32_1 = arith.constant 0 : i32
    return %c0_i32, %c0_i32_0 : i32, i32
  }
  func.func @transform_19(%arg0: i32) -> (i32, i32) {
    %c0_i32 = arith.constant 0 : i32
    %c0_i32_0 = arith.constant 0 : i32
    %c0_i32_1 = arith.constant 0 : i32
    return %c0_i32, %c0_i32_0 : i32, i32
  }
  func.func @transform_20(%arg0: i32) -> (i32, i32) {
    %c0_i32 = arith.constant 0 : i32
    %c0_i32_0 = arith.constant 0 : i32
    %c0_i32_1 = arith.constant 0 : i32
    return %c0_i32, %c0_i32_0 : i32, i32
  }
  func.func @transform_21(%arg0: i32) -> (i32, i32) {
    %c0_i32 = arith.constant 0 : i32
    %c0_i32_0 = arith.constant 0 : i32
    %c0_i32_1 = arith.constant 0 : i32
    return %c0_i32, %c0_i32_0 : i32, i32
  }
  func.func @transform_22(%arg0: i32) -> (i32, i32) {
    %c0_i32 = arith.constant 0 : i32
    %c0_i32_0 = arith.constant 0 : i32
    %c0_i32_1 = arith.constant 0 : i32
    return %c0_i32, %c0_i32_0 : i32, i32
  }
}

</mosaic_0001>

<llo_original>
// kernel: tpu_custom_call.1
$region0: #{tpu_custom_call.1}
  #allocation0 [shape = 'u32[]', space=smem, size = 0x4, offset = 0x4, fixed_abs, tag = 'smem constant byte address 0x4 - core index']
  #allocation1 [shape = 'u32[144,128]{1,0:T(1,128)}', space=vmem, size = 0x12000, scoped, tag = 'internal scratch']
  #allocation2 [shape = 'f32[1,1]{1,0:T(1,128)S(1)}', space=vmem, size = 0x200, scoped, tag = 'scoped memory for tpu_custom_call.1']
  %s0 = inlined_call_operand.vmem [shape: s32[16,1], index: 0, kind: input, shape index: {}]
  %s1 = inlined_call_operand.vmem [shape: s32[2,8], index: 1, kind: input, shape index: {}]
  %s2 = inlined_call_operand.vmem [shape: f32[64,32], index: 2, kind: input, shape index: {}]
  %s3 = inlined_call_operand.vmem [shape: f32[8,32], index: 3, kind: input, shape index: {}]
  %s4 = inlined_call_operand.vmem [shape: f32[16,16], index: 4, kind: input, shape index: {}]
  %s5 = inlined_call_operand.vmem [shape: f32[2,32], index: 5, kind: input, shape index: {}]
  %s6 = inlined_call_operand.vmem [shape: f32[2,32], index: 6, kind: input, shape index: {}]
  %s7 = inlined_call_operand.vmem [shape: f32[2,32,96], index: 7, kind: input, shape index: {}]
  %s8 = inlined_call_operand.vmem [shape: f32[2,96], index: 8, kind: input, shape index: {}]
  %s9 = inlined_call_operand.vmem [shape: f32[2,32,32], index: 9, kind: input, shape index: {}]
  %s10 = inlined_call_operand.vmem [shape: f32[2,32], index: 10, kind: input, shape index: {}]
  %s11 = inlined_call_operand.vmem [shape: f32[2,32], index: 11, kind: input, shape index: {}]
  %s12 = inlined_call_operand.vmem [shape: f32[2,32], index: 12, kind: input, shape index: {}]
  %s13 = inlined_call_operand.vmem [shape: f32[2,32,128], index: 13, kind: input, shape index: {}]
  %s14 = inlined_call_operand.vmem [shape: f32[2,128], index: 14, kind: input, shape index: {}]
  %s15 = inlined_call_operand.vmem [shape: f32[2,128,32], index: 15, kind: input, shape index: {}]
  %s16 = inlined_call_operand.vmem [shape: f32[2,32], index: 16, kind: input, shape index: {}]
  %s17 = inlined_call_operand.vmem [shape: f32[1,32], index: 17, kind: input, shape index: {}]
  %s18 = inlined_call_operand.vmem [shape: f32[1,32], index: 18, kind: input, shape index: {}]
  %s19 = inlined_call_operand.vmem [shape: f32[32,32], index: 19, kind: input, shape index: {}]
  %s20 = inlined_call_operand.vmem [shape: f32[1,32], index: 20, kind: input, shape index: {}]
  %s21 = inlined_call_operand.<no memory space> [shape: f32[1,1], index: 21, kind: input, shape index: {}]
  %s22 = inlined_call_operand.vmem [shape: f32[2,1], index: 22, kind: output, shape index: {}]
  %s23 = sld [smem:[#allocation0]]
  $region98: #{tpu_custom_call.1} parent=0
    _
  %s25 = ssub.s32 1, %s23
  %s26 = scalar_select 0, %s25, %s23
  %v27 = vstv %s21
  %28 = vst [vmem:[#allocation2] sm:$0x1] %v27
  // Predicated region
  $region2: #{tpu_custom_call.1} parent=0 // pred_check
    _
  $region3: #{tpu_custom_call.1} parent=0 // pred_check_branch
    %30 = sbr.rel (0) target = $region5
  $region4: #{tpu_custom_call.1} parent=0 // pred_region
    _
  $region5: #{tpu_custom_call.1} parent=0 // pred_fallthru
    _
  // Predicated region
  $region6: #{tpu_custom_call.1} parent=0 // pred_check
    _
  $region7: #{tpu_custom_call.1} parent=0 // pred_check_branch
    %32 = sbr.rel (0) target = $region9
  $region8: #{tpu_custom_call.1} parent=0 // pred_region
    _
  $region9: #{tpu_custom_call.1} parent=0 // pred_fallthru
    _
  // Predicated region
  $region10: #{tpu_custom_call.1} parent=0 // pred_check
    _
  $region11: #{tpu_custom_call.1} parent=0 // pred_check_branch
    %34 = sbr.rel (0) target = $region13
  $region12: #{tpu_custom_call.1} parent=0 // pred_region
    _
  $region13: #{tpu_custom_call.1} parent=0 // pred_fallthru
    _
  // Predicated region
  $region14: #{tpu_custom_call.1} parent=0 // pred_check
    _
  $region15: #{tpu_custom_call.1} parent=0 // pred_check_branch
    %36 = sbr.rel (0) target = $region17
  $region16: #{tpu_custom_call.1} parent=0 // pred_region
    _
  $region17: #{tpu_custom_call.1} parent=0 // pred_fallthru
    _
  // Predicated region
  $region18: #{tpu_custom_call.1} parent=0 // pred_check
    _
  $region19: #{tpu_custom_call.1} parent=0 // pred_check_branch
    %38 = sbr.rel (0) target = $region21
  $region20: #{tpu_custom_call.1} parent=0 // pred_region
    _
  $region21: #{tpu_custom_call.1} parent=0 // pred_fallthru
    _
  // Predicated region
  $region22: #{tpu_custom_call.1} parent=0 // pred_check
    _
  $region23: #{tpu_custom_call.1} parent=0 // pred_check_branch
    %40 = sbr.rel (0) target = $region25
  $region24: #{tpu_custom_call.1} parent=0 // pred_region
    _
  $region25: #{tpu_custom_call.1} parent=0 // pred_fallthru
    _
  // Predicated region
  $region26: #{tpu_custom_call.1} parent=0 // pred_check
    _
  $region27: #{tpu_custom_call.1} parent=0 // pred_check_branch
    %42 = sbr.rel (0) target = $region29
  $region28: #{tpu_custom_call.1} parent=0 // pred_region
    _
  $region29: #{tpu_custom_call.1} parent=0 // pred_fallthru
    _
  // Predicated region
  $region30: #{tpu_custom_call.1} parent=0 // pred_check
    _
  $region31: #{tpu_custom_call.1} parent=0 // pred_check_branch
    %44 = sbr.rel (0) target = $region33
  $region32: #{tpu_custom_call.1} parent=0 // pred_region
    _
  $region33: #{tpu_custom_call.1} parent=0 // pred_fallthru
    _
  // Predicated region
  $region34: #{tpu_custom_call.1} parent=0 // pred_check
    _
  $region35: #{tpu_custom_call.1} parent=0 // pred_check_branch
    %46 = sbr.rel (0) target = $region37
  $region36: #{tpu_custom_call.1} parent=0 // pred_region
    _
  $region37: #{tpu_custom_call.1} parent=0 // pred_fallthru
    _
  // Predicated region
  $region38: #{tpu_custom_call.1} parent=0 // pred_check
    _
  $region39: #{tpu_custom_call.1} parent=0 // pred_check_branch
    %48 = sbr.rel (0) target = $region41
  $region40: #{tpu_custom_call.1} parent=0 // pred_region
    _
  $region41: #{tpu_custom_call.1} parent=0 // pred_fallthru
    _
  // Predicated region
  $region42: #{tpu_custom_call.1} parent=0 // pred_check
    _
  $region43: #{tpu_custom_call.1} parent=0 // pred_check_branch
    %50 = sbr.rel (0) target = $region45
  $region44: #{tpu_custom_call.1} parent=0 // pred_region
    _
  $region45: #{tpu_custom_call.1} parent=0 // pred_fallthru
    _
  // Predicated region
  $region46: #{tpu_custom_call.1} parent=0 // pred_check
    _
  $region47: #{tpu_custom_call.1} parent=0 // pred_check_branch
    %52 = sbr.rel (0) target = $region49
  $region48: #{tpu_custom_call.1} parent=0 // pred_region
    _
  $region49: #{tpu_custom_call.1} parent=0 // pred_fallthru
    _
  // Predicated region
  $region50: #{tpu_custom_call.1} parent=0 // pred_check
    _
  $region51: #{tpu_custom_call.1} parent=0 // pred_check_branch
    %54 = sbr.rel (0) target = $region53
  $region52: #{tpu_custom_call.1} parent=0 // pred_region
    _
  $region53: #{tpu_custom_call.1} parent=0 // pred_fallthru
    _
  // Predicated region
  $region54: #{tpu_custom_call.1} parent=0 // pred_check
    _
  $region55: #{tpu_custom_call.1} parent=0 // pred_check_branch
    %56 = sbr.rel (0) target = $region57
  $region56: #{tpu_custom_call.1} parent=0 // pred_region
    _
  $region57: #{tpu_custom_call.1} parent=0 // pred_fallthru
    _
  // Predicated region
  $region58: #{tpu_custom_call.1} parent=0 // pred_check
    _
  $region59: #{tpu_custom_call.1} parent=0 // pred_check_branch
    %58 = sbr.rel (0) target = $region61
  $region60: #{tpu_custom_call.1} parent=0 // pred_region
    _
  $region61: #{tpu_custom_call.1} parent=0 // pred_fallthru
    _
  // Predicated region
  $region62: #{tpu_custom_call.1} parent=0 // pred_check
    _
  $region63: #{tpu_custom_call.1} parent=0 // pred_check_branch
    %60 = sbr.rel (0) target = $region65
  $region64: #{tpu_custom_call.1} parent=0 // pred_region
    _
  $region65: #{tpu_custom_call.1} parent=0 // pred_fallthru
    _
  // Predicated region
  $region66: #{tpu_custom_call.1} parent=0 // pred_check
    _
  $region67: #{tpu_custom_call.1} parent=0 // pred_check_branch
    %62 = sbr.rel (0) target = $region69
  $region68: #{tpu_custom_call.1} parent=0 // pred_region
    _
  $region69: #{tpu_custom_call.1} parent=0 // pred_fallthru
    _
  // Predicated region
  $region70: #{tpu_custom_call.1} parent=0 // pred_check
    _
  $region71: #{tpu_custom_call.1} parent=0 // pred_check_branch
    %64 = sbr.rel (0) target = $region73
  $region72: #{tpu_custom_call.1} parent=0 // pred_region
    _
  $region73: #{tpu_custom_call.1} parent=0 // pred_fallthru
    _
  // Predicated region
  $region74: #{tpu_custom_call.1} parent=0 // pred_check
    _
  $region75: #{tpu_custom_call.1} parent=0 // pred_check_branch
    %66 = sbr.rel (0) target = $region77
  $region76: #{tpu_custom_call.1} parent=0 // pred_region
    _
  $region77: #{tpu_custom_call.1} parent=0 // pred_fallthru
    _
  // Predicated region
  $region78: #{tpu_custom_call.1} parent=0 // pred_check
    _
  $region79: #{tpu_custom_call.1} parent=0 // pred_check_branch
    %68 = sbr.rel (0) target = $region81
  $region80: #{tpu_custom_call.1} parent=0 // pred_region
    _
  $region81: #{tpu_custom_call.1} parent=0 // pred_fallthru
    _
  // Predicated region
  $region82: #{tpu_custom_call.1} parent=0 // pred_check
    _
  $region83: #{tpu_custom_call.1} parent=0 // pred_check_branch
    %70 = sbr.rel (0) target = $region85
  $region84: #{tpu_custom_call.1} parent=0 // pred_region
    _
  $region85: #{tpu_custom_call.1} parent=0 // pred_fallthru
    _
  // Predicated region
  $region86: #{tpu_custom_call.1} parent=0 // pred_check
    _
  $region87: #{tpu_custom_call.1} parent=0 // pred_check_branch
    %72 = sbr.rel (0) target = $region89
  $region88: #{tpu_custom_call.1} parent=0 // pred_region
    _
  $region89: #{tpu_custom_call.1} parent=0 // pred_fallthru
    _
  %v73 = vlaneseq
  %v74 = vand.u32 %v73, 127
  %v75 = vld [vmem:[%s0] sm:$0xff]
  %v76 = vld [vmem:[%s0 + $0x8] sm:$0xff]
  %77 = vset.pattern.permute.xlu0 0
  %78 = vperm.xlu0 %77, %v75
  %v79 = vpop.permute.xlu0 %78
  %80 = vset.pattern.permute.xlu0 0
  %81 = vperm.xlu0 %80, %v76
  %v82 = vpop.permute.xlu0 %81
  %vm83 = vcmp.eq.s32.totalorder %v74, %v79
  %vm84 = vcmp.eq.s32.totalorder %v74, %v82
  %v85 = vsel %vm83, 1, 0
  %v86 = vsel %vm84, 1, 0
  %v87 = vcvt.s32.f32 %v85
  %v88 = vcvt.s32.f32 %v86
  %v89 = vld [vmem:[%s2] sm:$0xff]
  %v90 = vld [vmem:[%s2 + $0x8] sm:$0xff]
  %v91 = vld [vmem:[%s2 + $0x10] sm:$0xff]
  %v92 = vld [vmem:[%s2 + $0x18] sm:$0xff]
  %v93 = vld [vmem:[%s2 + $0x20] sm:$0xff]
  %v94 = vld [vmem:[%s2 + $0x28] sm:$0xff]
  %v95 = vld [vmem:[%s2 + $0x30] sm:$0xff]
  %v96 = vld [vmem:[%s2 + $0x38] sm:$0xff]
  %v97 = vld [vmem:[%s3] sm:$0xff]
  %vm98 = vcmask 523264
  %v100 = vsel %vm98, %v87, 0
  %v103 = vsel %vm98, %v88, 0
  %105 = vmatprep.subr.mxu0 0.0
  %106 = vmatpush1.msra.mxu0 0.0
  %107 = vmatprep.subr.mxu0 0.0
  %108 = vmatpush1.msra.mxu0 0.0
  %109 = vmatprep.subr.mxu0 0.0
  %110 = vmatpush1.msra.mxu0 0.0
  %111 = vmatprep.subr.mxu0 0.0
  %112 = vmatpush1.msra.mxu0 0.0
  %113 = vmatprep.subr.mxu0 0.0
  %114 = vmatpush1.msra.mxu0 0.0
  %115 = vmatprep.subr.mxu0 0.0
  %116 = vmatpush1.msra.mxu0 0.0
  %117 = vmatprep.subr.mxu0 0.0
  %118 = vmatpush1.msra.mxu0 0.0
  %119 = vmatprep.subr.mxu0 0.0
  %120 = vmatpush1.msra.mxu0 0.0
  %121 = vmatprep.subr.mxu0 0.0
  %122 = vmatpush1.msra.mxu0 %v96
  %123 = vmatprep.subr.mxu0 0.0
  %124 = vmatpush1.msra.mxu0 %v95
  %125 = vmatprep.subr.mxu0 0.0
  %126 = vmatpush1.msra.mxu0 %v94
  %127 = vmatprep.subr.mxu0 0.0
  %128 = vmatpush1.msra.mxu0 %v93
  %129 = vmatprep.subr.mxu0 0.0
  %130 = vmatpush1.msra.mxu0 %v92
  %131 = vmatprep.subr.mxu0 0.0
  %132 = vmatpush1.msra.mxu0 %v91
  %133 = vmatprep.subr.mxu0 0.0
  %134 = vmatpush1.msra.mxu0 %v90
  %135 = vmatprep.subr.mxu0 0.0
  %136 = vmatpush1.msra.mxu0 %v89
  %137 = vmatprep.subr.mxu0 0.0
  %138 = vmatpush2.msra.mxu0 0.0
  %139 = vmatprep.subr.mxu0 0.0
  %140 = vmatpush2.msra.mxu0 0.0
  %141 = vmatprep.subr.mxu0 0.0
  %142 = vmatpush2.msra.mxu0 0.0
  %143 = vmatprep.subr.mxu0 0.0
  %144 = vmatpush2.msra.mxu0 0.0
  %145 = vmatprep.subr.mxu0 0.0
  %146 = vmatpush2.msra.mxu0 0.0
  %147 = vmatprep.subr.mxu0 0.0
  %148 = vmatpush2.msra.mxu0 0.0
  %149 = vmatprep.subr.mxu0 0.0
  %150 = vmatpush2.msra.mxu0 0.0
  %151 = vmatprep.subr.mxu0 0.0
  %152 = vmatpush2.msra.mxu0 0.0
  %153 = vmatprep.subr.mxu0 0.0
  %154 = vmatpush2.msra.mxu0 0.0
  %155 = vmatprep.subr.mxu0 0.0
  %156 = vmatpush2.msra.mxu0 0.0
  %157 = vmatprep.subr.mxu0 0.0
  %158 = vmatpush2.msra.mxu0 0.0
  %159 = vmatprep.subr.mxu0 0.0
  %160 = vmatpush2.msra.mxu0 0.0
  %161 = vmatprep.subr.mxu0 0.0
  %162 = vmatpush2.msra.mxu0 0.0
  %163 = vmatprep.subr.mxu0 0.0
  %164 = vmatpush2.msra.mxu0 0.0
  %165 = vmatprep.subr.mxu0 0.0
  %166 = vmatpush2.msra.mxu0 0.0
  %167 = vmatprep.subr.mxu0 0.0
  %168 = vmatpush2.msra.mxu0 0.0
  %169 = vmatprep.mubr.f32.mxu0 0.0
  %170 = vmatmul.mubr.f32.gmra.mxu0 %v100
  %v171 = vpop.f32.mrf.mxu0
  %v172 = vadd.f32 %v97, %v171
  %v173 = vpop.f32.mrf.mxu0
  %174 = vmatprep.mubr.f32.mxu0 0.0
  %175 = vmatmul.mubr.f32.gmra.mxu0 %v103
  %v176 = vpop.f32.mrf.mxu0
  %v177 = vadd.f32 %v97, %v176
  %v178 = vpop.f32.mrf.mxu0
  %179 = vdwg.mxu0
  %v180 = vld [vmem:[%s4] sm:$0xff]
  %v181 = vld [vmem:[%s4 + $0x8] sm:$0xff]
  %v182 = vld [vmem:[%s5] sm:$0x1]
  %v183 = vld [vmem:[%s6] sm:$0x1]
  %vm184 = vcmask 261120
  %v185 = vsel %vm184, %v172, 0.0
  %186 = vadd.xlane.f32.xlu0 %v185
  %v187 = vpop.xlane.xlu0 %186
  %v188 = vsel %vm184, %v177, 0.0
  %189 = vadd.xlane.f32.xlu0 %v188
  %v190 = vpop.xlane.xlu0 %189
  %v191 = vrcp.pop 32.0
  %v192 = vmul.f32 %v187, %v191
  %v193 = vmul.f32 %v190, %v191
  %v194 = vsub.f32 %v172, %v192
  %v195 = vsub.f32 %v177, %v193
  %v196 = vmul.f32 %v194, %v194
  %v197 = vmul.f32 %v195, %v195
  %v198 = vsel %vm184, %v196, 0.0
  %199 = vadd.xlane.f32.xlu0 %v198
  %v200 = vpop.xlane.xlu0 %199
  %v201 = vsel %vm184, %v197, 0.0
  %202 = vadd.xlane.f32.xlu0 %v201
  %v203 = vpop.xlane.xlu0 %202
  %v204 = vmul.f32 %v200, %v191
  %v205 = vmul.f32 %v203, %v191
  %v206 = vadd.f32 %v204, 1e-05
  %v207 = vadd.f32 %v205, 1e-05
  %v208 = vrsqrt.pop %v206
  %v209 = vrsqrt.pop %v207
  %v210 = vmul.f32 %v194, %v208
  %v211 = vmul.f32 %v195, %v209
  %v212 = vlaneseq
  %v213 = vshrl.u32 %v212, 7
  %v214 = vsub.s32 0, %v213
  %v215 = vrot.slane %v182, %v214
  %v216 = vmul.f32 %v210, %v215
  %v217 = vmul.f32 %v211, %v215
  %v218 = vlaneseq
  %v219 = vshrl.u32 %v218, 7
  %v220 = vsub.s32 0, %v219
  %v221 = vrot.slane %v183, %v220
  %v222 = vadd.f32 %v216, %v221
  %v223 = vadd.f32 %v217, %v221
  %v224 = vld [vmem:[%s7] sm:$0xff]
  %v225 = vld [vmem:[%s7 + $0x8] sm:$0xff]
  %v226 = vld [vmem:[%s7 + $0x10] sm:$0xff]
  %v227 = vld [vmem:[%s7 + $0x18] sm:$0xff]
  %v228 = vld [vmem:[%s8] sm:$0x1]
  %v229 = vlaneseq
  %v230 = vshrl.u32 %v229, 7
  %v231 = vsub.s32 0, %v230
  %v232 = vrot.slane %v228, %v231
  %v234 = vsel %vm184, %v222, 0
  %v237 = vsel %vm184, %v223, 0
  %239 = vmatprep.subr.mxu0 0.0
  %240 = vmatpush1.msra.mxu0 0.0
  %241 = vmatprep.subr.mxu0 0.0
  %242 = vmatpush1.msra.mxu0 0.0
  %243 = vmatprep.subr.mxu0 0.0
  %244 = vmatpush1.msra.mxu0 0.0
  %245 = vmatprep.subr.mxu0 0.0
  %246 = vmatpush1.msra.mxu0 0.0
  %247 = vmatprep.subr.mxu0 0.0
  %248 = vmatpush1.msra.mxu0 0.0
  %249 = vmatprep.subr.mxu0 0.0
  %250 = vmatpush1.msra.mxu0 0.0
  %251 = vmatprep.subr.mxu0 0.0
  %252 = vmatpush1.msra.mxu0 0.0
  %253 = vmatprep.subr.mxu0 0.0
  %254 = vmatpush1.msra.mxu0 0.0
  %255 = vmatprep.subr.mxu0 0.0
  %256 = vmatpush1.msra.mxu0 0.0
  %257 = vmatprep.subr.mxu0 0.0
  %258 = vmatpush1.msra.mxu0 0.0
  %259 = vmatprep.subr.mxu0 0.0
  %260 = vmatpush1.msra.mxu0 0.0
  %261 = vmatprep.subr.mxu0 0.0
  %262 = vmatpush1.msra.mxu0 0.0
  %263 = vmatprep.subr.mxu0 0.0
  %264 = vmatpush1.msra.mxu0 %v227
  %265 = vmatprep.subr.mxu0 0.0
  %266 = vmatpush1.msra.mxu0 %v226
  %267 = vmatprep.subr.mxu0 0.0
  %268 = vmatpush1.msra.mxu0 %v225
  %269 = vmatprep.subr.mxu0 0.0
  %270 = vmatpush1.msra.mxu0 %v224
  %271 = vmatprep.subr.mxu0 0.0
  %272 = vmatpush2.msra.mxu0 0.0
  %273 = vmatprep.subr.mxu0 0.0
  %274 = vmatpush2.msra.mxu0 0.0
  %275 = vmatprep.subr.mxu0 0.0
  %276 = vmatpush2.msra.mxu0 0.0
  %277 = vmatprep.subr.mxu0 0.0
  %278 = vmatpush2.msra.mxu0 0.0
  %279 = vmatprep.subr.mxu0 0.0
  %280 = vmatpush2.msra.mxu0 0.0
  %281 = vmatprep.subr.mxu0 0.0
  %282 = vmatpush2.msra.mxu0 0.0
  %283 = vmatprep.subr.mxu0 0.0
  %284 = vmatpush2.msra.mxu0 0.0
  %285 = vmatprep.subr.mxu0 0.0
  %286 = vmatpush2.msra.mxu0 0.0
  %287 = vmatprep.subr.mxu0 0.0
  %288 = vmatpush2.msra.mxu0 0.0
  %289 = vmatprep.subr.mxu0 0.0
  %290 = vmatpush2.msra.mxu0 0.0
  %291 = vmatprep.subr.mxu0 0.0
  %292 = vmatpush2.msra.mxu0 0.0
  %293 = vmatprep.subr.mxu0 0.0
  %294 = vmatpush2.msra.mxu0 0.0
  %295 = vmatprep.subr.mxu0 0.0
  %296 = vmatpush2.msra.mxu0 0.0
  %297 = vmatprep.subr.mxu0 0.0
  %298 = vmatpush2.msra.mxu0 0.0
  %299 = vmatprep.subr.mxu0 0.0
  %300 = vmatpush2.msra.mxu0 0.0
  %301 = vmatprep.subr.mxu0 0.0
  %302 = vmatpush2.msra.mxu0 0.0
  %303 = vmatprep.mubr.f32.mxu0 0.0
  %304 = vmatmul.mubr.f32.gmra.mxu0 %v234
  %v305 = vpop.f32.mrf.mxu0
  %v306 = vadd.f32 %v232, %v305
  %v307 = vpop.f32.mrf.mxu0
  %308 = vmatprep.mubr.f32.mxu0 0.0
  %309 = vmatmul.mubr.f32.gmra.mxu0 %v237
  %v310 = vpop.f32.mrf.mxu0
  %v311 = vadd.f32 %v232, %v310
  %v312 = vpop.f32.mrf.mxu0
  %313 = vdwg.mxu0
  %316 = vrot.lane.b32.xlu0 %v306, 120
  %v317 = vpop.permute.xlu0 %316
  %318 = vrot.lane.b32.xlu0 %v311, 120
  %v319 = vpop.permute.xlu0 %318
  %322 = vrot.lane.b32.xlu0 %v306, 112
  %v323 = vpop.permute.xlu0 %322
  %324 = vrot.lane.b32.xlu0 %v311, 112
  %v325 = vpop.permute.xlu0 %324
  %328 = vrot.lane.b32.xlu0 %v306, 104
  %v329 = vpop.permute.xlu0 %328
  %330 = vrot.lane.b32.xlu0 %v311, 104
  %v331 = vpop.permute.xlu0 %330
  %v334 = vmul.f32 %v306, 0.35355338
  %v335 = vmul.f32 %v311, 0.35355338
  %v336 = vmul.f32 %v317, 0.35355338
  %v337 = vmul.f32 %v319, 0.35355338
  %v338 = vmul.f32 %v323, 0.35355338
  %v339 = vmul.f32 %v325, 0.35355338
  %v340 = vmul.f32 %v329, 0.35355338
  %v341 = vmul.f32 %v331, 0.35355338
  %342 = vrot.lane.b32.xlu0 %v306, 96
  %v343 = vpop.permute.xlu0 %342
  %344 = vrot.lane.b32.xlu0 %v311, 96
  %v345 = vpop.permute.xlu0 %344
  %vm346 = vcmask 64512
  %v348 = vsel %vm346, %v334, 0
  %v351 = vsel %vm346, %v335, 0
  %v353 = vsel %vm346, %v343, 0
  %v355 = vsel %vm346, %v345, 0
  %357 = vmatprep.subr.mxu0 0.0
  %358 = vmatpush1.xpose.msra.mxu0 0.0
  %359 = vmatprep.subr.mxu0 0.0
  %360 = vmatpush1.xpose.msra.mxu0 0.0
  %361 = vmatprep.subr.mxu0 0.0
  %362 = vmatpush1.xpose.msra.mxu0 0.0
  %363 = vmatprep.subr.mxu0 0.0
  %364 = vmatpush1.xpose.msra.mxu0 0.0
  %365 = vmatprep.subr.mxu0 0.0
  %366 = vmatpush1.xpose.msra.mxu0 0.0
  %367 = vmatprep.subr.mxu0 0.0
  %368 = vmatpush1.xpose.msra.mxu0 0.0
  %369 = vmatprep.subr.mxu0 0.0
  %370 = vmatpush1.xpose.msra.mxu0 0.0
  %371 = vmatprep.subr.mxu0 0.0
  %372 = vmatpush1.xpose.msra.mxu0 0.0
  %373 = vmatprep.subr.mxu0 0.0
  %374 = vmatpush1.xpose.msra.mxu0 0.0
  %375 = vmatprep.subr.mxu0 0.0
  %376 = vmatpush1.xpose.msra.mxu0 0.0
  %377 = vmatprep.subr.mxu0 0.0
  %378 = vmatpush1.xpose.msra.mxu0 0.0
  %379 = vmatprep.subr.mxu0 0.0
  %380 = vmatpush1.xpose.msra.mxu0 0.0
  %381 = vmatprep.subr.mxu0 0.0
  %382 = vmatpush1.xpose.msra.mxu0 0.0
  %383 = vmatprep.subr.mxu0 0.0
  %384 = vmatpush1.xpose.msra.mxu0 0.0
  %385 = vmatprep.subr.mxu0 0.0
  %386 = vmatpush1.xpose.msra.mxu0 %v355
  %387 = vmatprep.subr.mxu0 0.0
  %388 = vmatpush1.xpose.msra.mxu0 %v353
  %389 = vmatprep.subr.mxu0 0.0
  %390 = vmatpush2.xpose.msra.mxu0 0.0
  %391 = vmatprep.subr.mxu0 0.0
  %392 = vmatpush2.xpose.msra.mxu0 0.0
  %393 = vmatprep.subr.mxu0 0.0
  %394 = vmatpush2.xpose.msra.mxu0 0.0
  %395 = vmatprep.subr.mxu0 0.0
  %396 = vmatpush2.xpose.msra.mxu0 0.0
  %397 = vmatprep.subr.mxu0 0.0
  %398 = vmatpush2.xpose.msra.mxu0 0.0
  %399 = vmatprep.subr.mxu0 0.0
  %400 = vmatpush2.xpose.msra.mxu0 0.0
  %401 = vmatprep.subr.mxu0 0.0
  %402 = vmatpush2.xpose.msra.mxu0 0.0
  %403 = vmatprep.subr.mxu0 0.0
  %404 = vmatpush2.xpose.msra.mxu0 0.0
  %405 = vmatprep.subr.mxu0 0.0
  %406 = vmatpush2.xpose.msra.mxu0 0.0
  %407 = vmatprep.subr.mxu0 0.0
  %408 = vmatpush2.xpose.msra.mxu0 0.0
  %409 = vmatprep.subr.mxu0 0.0
  %410 = vmatpush2.xpose.msra.mxu0 0.0
  %411 = vmatprep.subr.mxu0 0.0
  %412 = vmatpush2.xpose.msra.mxu0 0.0
  %413 = vmatprep.subr.mxu0 0.0
  %414 = vmatpush2.xpose.msra.mxu0 0.0
  %415 = vmatprep.subr.mxu0 0.0
  %416 = vmatpush2.xpose.msra.mxu0 0.0
  %417 = vmatprep.subr.mxu0 0.0
  %418 = vmatpush2.xpose.msra.mxu0 0.0
  %419 = vmatprep.subr.mxu0 0.0
  %420 = vmatpush2.xpose.msra.mxu0 0.0
  %421 = vmatprep.mubr.f32.mxu0 0.0
  %422 = vmatmul.mubr.f32.gmra.mxu0 %v348
  %v423 = vpop.f32.mrf.mxu0
  %v424 = vadd.f32 %v180, %v423
  %v425 = vpop.f32.mrf.mxu0
  %426 = vmatprep.mubr.f32.mxu0 0.0
  %427 = vmatmul.mubr.f32.gmra.mxu0 %v351
  %v428 = vpop.f32.mrf.mxu0
  %v429 = vadd.f32 %v181, %v428
  %v430 = vpop.f32.mrf.mxu0
  %431 = vdwg.mxu0
  %432 = vrot.lane.b32.xlu0 %v317, 96
  %v433 = vpop.permute.xlu0 %432
  %434 = vrot.lane.b32.xlu0 %v319, 96
  %v435 = vpop.permute.xlu0 %434
  %v437 = vsel %vm346, %v336, 0
  %v440 = vsel %vm346, %v337, 0
  %v442 = vsel %vm346, %v433, 0
  %v444 = vsel %vm346, %v435, 0
  %446 = vmatprep.subr.mxu0 0.0
  %447 = vmatpush1.xpose.msra.mxu0 0.0
  %448 = vmatprep.subr.mxu0 0.0
  %449 = vmatpush1.xpose.msra.mxu0 0.0
  %450 = vmatprep.subr.mxu0 0.0
  %451 = vmatpush1.xpose.msra.mxu0 0.0
  %452 = vmatprep.subr.mxu0 0.0
  %453 = vmatpush1.xpose.msra.mxu0 0.0
  %454 = vmatprep.subr.mxu0 0.0
  %455 = vmatpush1.xpose.msra.mxu0 0.0
  %456 = vmatprep.subr.mxu0 0.0
  %457 = vmatpush1.xpose.msra.mxu0 0.0
  %458 = vmatprep.subr.mxu0 0.0
  %459 = vmatpush1.xpose.msra.mxu0 0.0
  %460 = vmatprep.subr.mxu0 0.0
  %461 = vmatpush1.xpose.msra.mxu0 0.0
  %462 = vmatprep.subr.mxu0 0.0
  %463 = vmatpush1.xpose.msra.mxu0 0.0
  %464 = vmatprep.subr.mxu0 0.0
  %465 = vmatpush1.xpose.msra.mxu0 0.0
  %466 = vmatprep.subr.mxu0 0.0
  %467 = vmatpush1.xpose.msra.mxu0 0.0
  %468 = vmatprep.subr.mxu0 0.0
  %469 = vmatpush1.xpose.msra.mxu0 0.0
  %470 = vmatprep.subr.mxu0 0.0
  %471 = vmatpush1.xpose.msra.mxu0 0.0
  %472 = vmatprep.subr.mxu0 0.0
  %473 = vmatpush1.xpose.msra.mxu0 0.0
  %474 = vmatprep.subr.mxu0 0.0
  %475 = vmatpush1.xpose.msra.mxu0 %v444
  %476 = vmatprep.subr.mxu0 0.0
  %477 = vmatpush1.xpose.msra.mxu0 %v442
  %478 = vmatprep.subr.mxu0 0.0
  %479 = vmatpush2.xpose.msra.mxu0 0.0
  %480 = vmatprep.subr.mxu0 0.0
  %481 = vmatpush2.xpose.msra.mxu0 0.0
  %482 = vmatprep.subr.mxu0 0.0
  %483 = vmatpush2.xpose.msra.mxu0 0.0
  %484 = vmatprep.subr.mxu0 0.0
  %485 = vmatpush2.xpose.msra.mxu0 0.0
  %486 = vmatprep.subr.mxu0 0.0
  %487 = vmatpush2.xpose.msra.mxu0 0.0
  %488 = vmatprep.subr.mxu0 0.0
  %489 = vmatpush2.xpose.msra.mxu0 0.0
  %490 = vmatprep.subr.mxu0 0.0
  %491 = vmatpush2.xpose.msra.mxu0 0.0
  %492 = vmatprep.subr.mxu0 0.0
  %493 = vmatpush2.xpose.msra.mxu0 0.0
  %494 = vmatprep.subr.mxu0 0.0
  %495 = vmatpush2.xpose.msra.mxu0 0.0
  %496 = vmatprep.subr.mxu0 0.0
  %497 = vmatpush2.xpose.msra.mxu0 0.0
  %498 = vmatprep.subr.mxu0 0.0
  %499 = vmatpush2.xpose.msra.mxu0 0.0
  %500 = vmatprep.subr.mxu0 0.0
  %501 = vmatpush2.xpose.msra.mxu0 0.0
  %502 = vmatprep.subr.mxu0 0.0
  %503 = vmatpush2.xpose.msra.mxu0 0.0
  %504 = vmatprep.subr.mxu0 0.0
  %505 = vmatpush2.xpose.msra.mxu0 0.0
  %506 = vmatprep.subr.mxu0 0.0
  %507 = vmatpush2.xpose.msra.mxu0 0.0
  %508 = vmatprep.subr.mxu0 0.0
  %509 = vmatpush2.xpose.msra.mxu0 0.0
  %510 = vmatprep.mubr.f32.mxu0 0.0
  %511 = vmatmul.mubr.f32.gmra.mxu0 %v437
  %v512 = vpop.f32.mrf.mxu0
  %v513 = vadd.f32 %v180, %v512
  %v514 = vpop.f32.mrf.mxu0
  %515 = vmatprep.mubr.f32.mxu0 0.0
  %516 = vmatmul.mubr.f32.gmra.mxu0 %v440
  %v517 = vpop.f32.mrf.mxu0
  %v518 = vadd.f32 %v181, %v517
  %v519 = vpop.f32.mrf.mxu0
  %520 = vdwg.mxu0
  %521 = vrot.lane.b32.xlu0 %v323, 96
  %v522 = vpop.permute.xlu0 %521
  %523 = vrot.lane.b32.xlu0 %v325, 96
  %v524 = vpop.permute.xlu0 %523
  %v526 = vsel %vm346, %v338, 0
  %v529 = vsel %vm346, %v339, 0
  %v531 = vsel %vm346, %v522, 0
  %v533 = vsel %vm346, %v524, 0
  %535 = vmatprep.subr.mxu0 0.0
  %536 = vmatpush1.xpose.msra.mxu0 0.0
  %537 = vmatprep.subr.mxu0 0.0
  %538 = vmatpush1.xpose.msra.mxu0 0.0
  %539 = vmatprep.subr.mxu0 0.0
  %540 = vmatpush1.xpose.msra.mxu0 0.0
  %541 = vmatprep.subr.mxu0 0.0
  %542 = vmatpush1.xpose.msra.mxu0 0.0
  %543 = vmatprep.subr.mxu0 0.0
  %544 = vmatpush1.xpose.msra.mxu0 0.0
  %545 = vmatprep.subr.mxu0 0.0
  %546 = vmatpush1.xpose.msra.mxu0 0.0
  %547 = vmatprep.subr.mxu0 0.0
  %548 = vmatpush1.xpose.msra.mxu0 0.0
  %549 = vmatprep.subr.mxu0 0.0
  %550 = vmatpush1.xpose.msra.mxu0 0.0
  %551 = vmatprep.subr.mxu0 0.0
  %552 = vmatpush1.xpose.msra.mxu0 0.0
  %553 = vmatprep.subr.mxu0 0.0
  %554 = vmatpush1.xpose.msra.mxu0 0.0
  %555 = vmatprep.subr.mxu0 0.0
  %556 = vmatpush1.xpose.msra.mxu0 0.0
  %557 = vmatprep.subr.mxu0 0.0
  %558 = vmatpush1.xpose.msra.mxu0 0.0
  %559 = vmatprep.subr.mxu0 0.0
  %560 = vmatpush1.xpose.msra.mxu0 0.0
  %561 = vmatprep.subr.mxu0 0.0
  %562 = vmatpush1.xpose.msra.mxu0 0.0
  %563 = vmatprep.subr.mxu0 0.0
  %564 = vmatpush1.xpose.msra.mxu0 %v533
  %565 = vmatprep.subr.mxu0 0.0
  %566 = vmatpush1.xpose.msra.mxu0 %v531
  %567 = vmatprep.subr.mxu0 0.0
  %568 = vmatpush2.xpose.msra.mxu0 0.0
  %569 = vmatprep.subr.mxu0 0.0
  %570 = vmatpush2.xpose.msra.mxu0 0.0
  %571 = vmatprep.subr.mxu0 0.0
  %572 = vmatpush2.xpose.msra.mxu0 0.0
  %573 = vmatprep.subr.mxu0 0.0
  %574 = vmatpush2.xpose.msra.mxu0 0.0
  %575 = vmatprep.subr.mxu0 0.0
  %576 = vmatpush2.xpose.msra.mxu0 0.0
  %577 = vmatprep.subr.mxu0 0.0
  %578 = vmatpush2.xpose.msra.mxu0 0.0
  %579 = vmatprep.subr.mxu0 0.0
  %580 = vmatpush2.xpose.msra.mxu0 0.0
  %581 = vmatprep.subr.mxu0 0.0
  %582 = vmatpush2.xpose.msra.mxu0 0.0
  %583 = vmatprep.subr.mxu0 0.0
  %584 = vmatpush2.xpose.msra.mxu0 0.0
  %585 = vmatprep.subr.mxu0 0.0
  %586 = vmatpush2.xpose.msra.mxu0 0.0
  %587 = vmatprep.subr.mxu0 0.0
  %588 = vmatpush2.xpose.msra.mxu0 0.0
  %589 = vmatprep.subr.mxu0 0.0
  %590 = vmatpush2.xpose.msra.mxu0 0.0
  %591 = vmatprep.subr.mxu0 0.0
  %592 = vmatpush2.xpose.msra.mxu0 0.0
  %593 = vmatprep.subr.mxu0 0.0
  %594 = vmatpush2.xpose.msra.mxu0 0.0
  %595 = vmatprep.subr.mxu0 0.0
  %596 = vmatpush2.xpose.msra.mxu0 0.0
  %597 = vmatprep.subr.mxu0 0.0
  %598 = vmatpush2.xpose.msra.mxu0 0.0
  %599 = vmatprep.mubr.f32.mxu0 0.0
  %600 = vmatmul.mubr.f32.gmra.mxu0 %v526
  %v601 = vpop.f32.mrf.mxu0
  %v602 = vadd.f32 %v180, %v601
  %v603 = vpop.f32.mrf.mxu0
  %604 = vmatprep.mubr.f32.mxu0 0.0
  %605 = vmatmul.mubr.f32.gmra.mxu0 %v529
  %v606 = vpop.f32.mrf.mxu0
  %v607 = vadd.f32 %v181, %v606
  %v608 = vpop.f32.mrf.mxu0
  %609 = vdwg.mxu0
  %610 = vrot.lane.b32.xlu0 %v329, 96
  %v611 = vpop.permute.xlu0 %610
  %612 = vrot.lane.b32.xlu0 %v331, 96
  %v613 = vpop.permute.xlu0 %612
  %v615 = vsel %vm346, %v340, 0
  %v618 = vsel %vm346, %v341, 0
  %v620 = vsel %vm346, %v611, 0
  %v622 = vsel %vm346, %v613, 0
  %624 = vmatprep.subr.mxu0 0.0
  %625 = vmatpush1.xpose.msra.mxu0 0.0
  %626 = vmatprep.subr.mxu0 0.0
  %627 = vmatpush1.xpose.msra.mxu0 0.0
  %628 = vmatprep.subr.mxu0 0.0
  %629 = vmatpush1.xpose.msra.mxu0 0.0
  %630 = vmatprep.subr.mxu0 0.0
  %631 = vmatpush1.xpose.msra.mxu0 0.0
  %632 = vmatprep.subr.mxu0 0.0
  %633 = vmatpush1.xpose.msra.mxu0 0.0
  %634 = vmatprep.subr.mxu0 0.0
  %635 = vmatpush1.xpose.msra.mxu0 0.0
  %636 = vmatprep.subr.mxu0 0.0
  %637 = vmatpush1.xpose.msra.mxu0 0.0
  %638 = vmatprep.subr.mxu0 0.0
  %639 = vmatpush1.xpose.msra.mxu0 0.0
  %640 = vmatprep.subr.mxu0 0.0
  %641 = vmatpush1.xpose.msra.mxu0 0.0
  %642 = vmatprep.subr.mxu0 0.0
  %643 = vmatpush1.xpose.msra.mxu0 0.0
  %644 = vmatprep.subr.mxu0 0.0
  %645 = vmatpush1.xpose.msra.mxu0 0.0
  %646 = vmatprep.subr.mxu0 0.0
  %647 = vmatpush1.xpose.msra.mxu0 0.0
  %648 = vmatprep.subr.mxu0 0.0
  %649 = vmatpush1.xpose.msra.mxu0 0.0
  %650 = vmatprep.subr.mxu0 0.0
  %651 = vmatpush1.xpose.msra.mxu0 0.0
  %652 = vmatprep.subr.mxu0 0.0
  %653 = vmatpush1.xpose.msra.mxu0 %v622
  %654 = vmatprep.subr.mxu0 0.0
  %655 = vmatpush1.xpose.msra.mxu0 %v620
  %656 = vmatprep.subr.mxu0 0.0
  %657 = vmatpush2.xpose.msra.mxu0 0.0
  %658 = vmatprep.subr.mxu0 0.0
  %659 = vmatpush2.xpose.msra.mxu0 0.0
  %660 = vmatprep.subr.mxu0 0.0
  %661 = vmatpush2.xpose.msra.mxu0 0.0
  %662 = vmatprep.subr.mxu0 0.0
  %663 = vmatpush2.xpose.msra.mxu0 0.0
  %664 = vmatprep.subr.mxu0 0.0
  %665 = vmatpush2.xpose.msra.mxu0 0.0
  %666 = vmatprep.subr.mxu0 0.0
  %667 = vmatpush2.xpose.msra.mxu0 0.0
  %668 = vmatprep.subr.mxu0 0.0
  %669 = vmatpush2.xpose.msra.mxu0 0.0
  %670 = vmatprep.subr.mxu0 0.0
  %671 = vmatpush2.xpose.msra.mxu0 0.0
  %672 = vmatprep.subr.mxu0 0.0
  %673 = vmatpush2.xpose.msra.mxu0 0.0
  %674 = vmatprep.subr.mxu0 0.0
  %675 = vmatpush2.xpose.msra.mxu0 0.0
  %676 = vmatprep.subr.mxu0 0.0
  %677 = vmatpush2.xpose.msra.mxu0 0.0
  %678 = vmatprep.subr.mxu0 0.0
  %679 = vmatpush2.xpose.msra.mxu0 0.0
  %680 = vmatprep.subr.mxu0 0.0
  %681 = vmatpush2.xpose.msra.mxu0 0.0
  %682 = vmatprep.subr.mxu0 0.0
  %683 = vmatpush2.xpose.msra.mxu0 0.0
  %684 = vmatprep.subr.mxu0 0.0
  %685 = vmatpush2.xpose.msra.mxu0 0.0
  %686 = vmatprep.subr.mxu0 0.0
  %687 = vmatpush2.xpose.msra.mxu0 0.0
  %688 = vmatprep.mubr.f32.mxu0 0.0
  %689 = vmatmul.mubr.f32.gmra.mxu0 %v615
  %v690 = vpop.f32.mrf.mxu0
  %v691 = vadd.f32 %v180, %v690
  %v692 = vpop.f32.mrf.mxu0
  %693 = vmatprep.mubr.f32.mxu0 0.0
  %694 = vmatmul.mubr.f32.gmra.mxu0 %v618
  %v695 = vpop.f32.mrf.mxu0
  %v696 = vadd.f32 %v181, %v695
  %v697 = vpop.f32.mrf.mxu0
  %698 = vdwg.mxu0
  %vm699 = vcmask 130048
  %v700 = vsel %vm699, %v424, -inf
  %701 = vmax.xlane.f32.xlu0 %v700
  %v702 = vpop.xlane.xlu0 %701
  %v703 = vsel %vm699, %v429, -inf
  %704 = vmax.xlane.f32.xlu0 %v703
  %v705 = vpop.xlane.xlu0 %704
  %v706 = vsel %vm699, %v513, -inf
  %707 = vmax.xlane.f32.xlu0 %v706
  %v708 = vpop.xlane.xlu0 %707
  %v709 = vsel %vm699, %v518, -inf
  %710 = vmax.xlane.f32.xlu0 %v709
  %v711 = vpop.xlane.xlu0 %710
  %v712 = vsel %vm699, %v602, -inf
  %713 = vmax.xlane.f32.xlu0 %v712
  %v714 = vpop.xlane.xlu0 %713
  %v715 = vsel %vm699, %v607, -inf
  %716 = vmax.xlane.f32.xlu0 %v715
  %v717 = vpop.xlane.xlu0 %716
  %v718 = vsel %vm699, %v691, -inf
  %719 = vmax.xlane.f32.xlu0 %v718
  %v720 = vpop.xlane.xlu0 %719
  %v721 = vsel %vm699, %v696, -inf
  %722 = vmax.xlane.f32.xlu0 %v721
  %v723 = vpop.xlane.xlu0 %722
  %v724 = vsub.f32 %v424, %v702
  %v725 = vsub.f32 %v429, %v705
  %v726 = vsub.f32 %v513, %v708
  %v727 = vsub.f32 %v518, %v711
  %v728 = vsub.f32 %v602, %v714
  %v729 = vsub.f32 %v607, %v717
  %v730 = vsub.f32 %v691, %v720
  %v731 = vsub.f32 %v696, %v723
  %v732 = vmul.f32 %v724, 1.442695
  %v733 = vpow.pop %v732
  %v734 = vmul.f32 %v725, 1.442695
  %v735 = vpow.pop %v734
  %v736 = vmul.f32 %v726, 1.442695
  %v737 = vpow.pop %v736
  %v738 = vmul.f32 %v727, 1.442695
  %v739 = vpow.pop %v738
  %v740 = vmul.f32 %v728, 1.442695
  %v741 = vpow.pop %v740
  %v742 = vmul.f32 %v729, 1.442695
  %v743 = vpow.pop %v742
  %v744 = vmul.f32 %v730, 1.442695
  %v745 = vpow.pop %v744
  %v746 = vmul.f32 %v731, 1.442695
  %v747 = vpow.pop %v746
  %v748 = vsel %vm699, %v733, 0.0
  %749 = vadd.xlane.f32.xlu0 %v748
  %v750 = vpop.xlane.xlu0 %749
  %v751 = vsel %vm699, %v735, 0.0
  %752 = vadd.xlane.f32.xlu0 %v751
  %v753 = vpop.xlane.xlu0 %752
  %v754 = vsel %vm699, %v737, 0.0
  %755 = vadd.xlane.f32.xlu0 %v754
  %v756 = vpop.xlane.xlu0 %755
  %v757 = vsel %vm699, %v739, 0.0
  %758 = vadd.xlane.f32.xlu0 %v757
  %v759 = vpop.xlane.xlu0 %758
  %v760 = vsel %vm699, %v741, 0.0
  %761 = vadd.xlane.f32.xlu0 %v760
  %v762 = vpop.xlane.xlu0 %761
  %v763 = vsel %vm699, %v743, 0.0
  %764 = vadd.xlane.f32.xlu0 %v763
  %v765 = vpop.xlane.xlu0 %764
  %v766 = vsel %vm699, %v745, 0.0
  %767 = vadd.xlane.f32.xlu0 %v766
  %v768 = vpop.xlane.xlu0 %767
  %v769 = vsel %vm699, %v747, 0.0
  %770 = vadd.xlane.f32.xlu0 %v769
  %v771 = vpop.xlane.xlu0 %770
  %v772 = vrcp.pop %v750
  %v773 = vrcp.pop %v753
  %v774 = vrcp.pop %v756
  %v775 = vrcp.pop %v759
  %v776 = vrcp.pop %v762
  %v777 = vrcp.pop %v765
  %v778 = vrcp.pop %v768
  %v779 = vrcp.pop %v771
  %v780 = vmul.f32 %v733, %v772
  %v781 = vmul.f32 %v735, %v773
  %v782 = vmul.f32 %v737, %v774
  %v783 = vmul.f32 %v739, %v775
  %v784 = vmul.f32 %v741, %v776
  %v785 = vmul.f32 %v743, %v777
  %v786 = vmul.f32 %v745, %v778
  %v787 = vmul.f32 %v747, %v779
  %788 = vrot.lane.b32.xlu0 %v306, 64
  %v789 = vpop.permute.xlu0 %788
  %790 = vrot.lane.b32.xlu0 %v311, 64
  %v791 = vpop.permute.xlu0 %790
  %v795 = vsel %vm699, %v780, 0
  %v798 = vsel %vm699, %v781, 0
  %800 = vmatprep.subr.mxu0 0.0
  %801 = vmatpush1.msra.mxu0 0.0
  %802 = vmatprep.subr.mxu0 0.0
  %803 = vmatpush1.msra.mxu0 0.0
  %804 = vmatprep.subr.mxu0 0.0
  %805 = vmatpush1.msra.mxu0 0.0
  %806 = vmatprep.subr.mxu0 0.0
  %807 = vmatpush1.msra.mxu0 0.0
  %808 = vmatprep.subr.mxu0 0.0
  %809 = vmatpush1.msra.mxu0 0.0
  %810 = vmatprep.subr.mxu0 0.0
  %811 = vmatpush1.msra.mxu0 0.0
  %812 = vmatprep.subr.mxu0 0.0
  %813 = vmatpush1.msra.mxu0 0.0
  %814 = vmatprep.subr.mxu0 0.0
  %815 = vmatpush1.msra.mxu0 0.0
  %816 = vmatprep.subr.mxu0 0.0
  %817 = vmatpush1.msra.mxu0 0.0
  %818 = vmatprep.subr.mxu0 0.0
  %819 = vmatpush1.msra.mxu0 0.0
  %820 = vmatprep.subr.mxu0 0.0
  %821 = vmatpush1.msra.mxu0 0.0
  %822 = vmatprep.subr.mxu0 0.0
  %823 = vmatpush1.msra.mxu0 0.0
  %824 = vmatprep.subr.mxu0 0.0
  %825 = vmatpush1.msra.mxu0 0.0
  %826 = vmatprep.subr.mxu0 0.0
  %827 = vmatpush1.msra.mxu0 0.0
  %828 = vmatprep.subr.mxu0 0.0
  %829 = vmatpush1.msra.mxu0 %v791
  %830 = vmatprep.subr.mxu0 0.0
  %831 = vmatpush1.msra.mxu0 %v789
  %832 = vmatprep.subr.mxu0 0.0
  %833 = vmatpush2.msra.mxu0 0.0
  %834 = vmatprep.subr.mxu0 0.0
  %835 = vmatpush2.msra.mxu0 0.0
  %836 = vmatprep.subr.mxu0 0.0
  %837 = vmatpush2.msra.mxu0 0.0
  %838 = vmatprep.subr.mxu0 0.0
  %839 = vmatpush2.msra.mxu0 0.0
  %840 = vmatprep.subr.mxu0 0.0
  %841 = vmatpush2.msra.mxu0 0.0
  %842 = vmatprep.subr.mxu0 0.0
  %843 = vmatpush2.msra.mxu0 0.0
  %844 = vmatprep.subr.mxu0 0.0
  %845 = vmatpush2.msra.mxu0 0.0
  %846 = vmatprep.subr.mxu0 0.0
  %847 = vmatpush2.msra.mxu0 0.0
  %848 = vmatprep.subr.mxu0 0.0
  %849 = vmatpush2.msra.mxu0 0.0
  %850 = vmatprep.subr.mxu0 0.0
  %851 = vmatpush2.msra.mxu0 0.0
  %852 = vmatprep.subr.mxu0 0.0
  %853 = vmatpush2.msra.mxu0 0.0
  %854 = vmatprep.subr.mxu0 0.0
  %855 = vmatpush2.msra.mxu0 0.0
  %856 = vmatprep.subr.mxu0 0.0
  %857 = vmatpush2.msra.mxu0 0.0
  %858 = vmatprep.subr.mxu0 0.0
  %859 = vmatpush2.msra.mxu0 0.0
  %860 = vmatprep.subr.mxu0 0.0
  %861 = vmatpush2.msra.mxu0 0.0
  %862 = vmatprep.subr.mxu0 0.0
  %863 = vmatpush2.msra.mxu0 0.0
  %864 = vmatprep.mubr.f32.mxu0 0.0
  %865 = vmatmul.mubr.f32.gmra.mxu0 %v795
  %v866 = vpop.f32.mrf.mxu0
  %v867 = vadd.f32 0.0, %v866
  %v868 = vpop.f32.mrf.mxu0
  %869 = vmatprep.mubr.f32.mxu0 0.0
  %870 = vmatmul.mubr.f32.gmra.mxu0 %v798
  %v871 = vpop.f32.mrf.mxu0
  %v872 = vadd.f32 0.0, %v871
  %v873 = vpop.f32.mrf.mxu0
  %874 = vdwg.mxu0
  %875 = vrot.lane.b32.xlu0 %v317, 64
  %v876 = vpop.permute.xlu0 %875
  %877 = vrot.lane.b32.xlu0 %v319, 64
  %v878 = vpop.permute.xlu0 %877
  %v882 = vsel %vm699, %v782, 0
  %v885 = vsel %vm699, %v783, 0
  %887 = vmatprep.subr.mxu0 0.0
  %888 = vmatpush1.msra.mxu0 0.0
  %889 = vmatprep.subr.mxu0 0.0
  %890 = vmatpush1.msra.mxu0 0.0
  %891 = vmatprep.subr.mxu0 0.0
  %892 = vmatpush1.msra.mxu0 0.0
  %893 = vmatprep.subr.mxu0 0.0
  %894 = vmatpush1.msra.mxu0 0.0
  %895 = vmatprep.subr.mxu0 0.0
  %896 = vmatpush1.msra.mxu0 0.0
  %897 = vmatprep.subr.mxu0 0.0
  %898 = vmatpush1.msra.mxu0 0.0
  %899 = vmatprep.subr.mxu0 0.0
  %900 = vmatpush1.msra.mxu0 0.0
  %901 = vmatprep.subr.mxu0 0.0
  %902 = vmatpush1.msra.mxu0 0.0
  %903 = vmatprep.subr.mxu0 0.0
  %904 = vmatpush1.msra.mxu0 0.0
  %905 = vmatprep.subr.mxu0 0.0
  %906 = vmatpush1.msra.mxu0 0.0
  %907 = vmatprep.subr.mxu0 0.0
  %908 = vmatpush1.msra.mxu0 0.0
  %909 = vmatprep.subr.mxu0 0.0
  %910 = vmatpush1.msra.mxu0 0.0
  %911 = vmatprep.subr.mxu0 0.0
  %912 = vmatpush1.msra.mxu0 0.0
  %913 = vmatprep.subr.mxu0 0.0
  %914 = vmatpush1.msra.mxu0 0.0
  %915 = vmatprep.subr.mxu0 0.0
  %916 = vmatpush1.msra.mxu0 %v878
  %917 = vmatprep.subr.mxu0 0.0
  %918 = vmatpush1.msra.mxu0 %v876
  %919 = vmatprep.subr.mxu0 0.0
  %920 = vmatpush2.msra.mxu0 0.0
  %921 = vmatprep.subr.mxu0 0.0
  %922 = vmatpush2.msra.mxu0 0.0
  %923 = vmatprep.subr.mxu0 0.0
  %924 = vmatpush2.msra.mxu0 0.0
  %925 = vmatprep.subr.mxu0 0.0
  %926 = vmatpush2.msra.mxu0 0.0
  %927 = vmatprep.subr.mxu0 0.0
  %928 = vmatpush2.msra.mxu0 0.0
  %929 = vmatprep.subr.mxu0 0.0
  %930 = vmatpush2.msra.mxu0 0.0
  %931 = vmatprep.subr.mxu0 0.0
  %932 = vmatpush2.msra.mxu0 0.0
  %933 = vmatprep.subr.mxu0 0.0
  %934 = vmatpush2.msra.mxu0 0.0
  %935 = vmatprep.subr.mxu0 0.0
  %936 = vmatpush2.msra.mxu0 0.0
  %937 = vmatprep.subr.mxu0 0.0
  %938 = vmatpush2.msra.mxu0 0.0
  %939 = vmatprep.subr.mxu0 0.0
  %940 = vmatpush2.msra.mxu0 0.0
  %941 = vmatprep.subr.mxu0 0.0
  %942 = vmatpush2.msra.mxu0 0.0
  %943 = vmatprep.subr.mxu0 0.0
  %944 = vmatpush2.msra.mxu0 0.0
  %945 = vmatprep.subr.mxu0 0.0
  %946 = vmatpush2.msra.mxu0 0.0
  %947 = vmatprep.subr.mxu0 0.0
  %948 = vmatpush2.msra.mxu0 0.0
  %949 = vmatprep.subr.mxu0 0.0
  %950 = vmatpush2.msra.mxu0 0.0
  %951 = vmatprep.mubr.f32.mxu0 0.0
  %952 = vmatmul.mubr.f32.gmra.mxu0 %v882
  %v953 = vpop.f32.mrf.mxu0
  %v954 = vadd.f32 0.0, %v953
  %v955 = vpop.f32.mrf.mxu0
  %956 = vmatprep.mubr.f32.mxu0 0.0
  %957 = vmatmul.mubr.f32.gmra.mxu0 %v885
  %v958 = vpop.f32.mrf.mxu0
  %v959 = vadd.f32 0.0, %v958
  %v960 = vpop.f32.mrf.mxu0
  %961 = vdwg.mxu0
  %962 = vrot.lane.b32.xlu0 %v323, 64
  %v963 = vpop.permute.xlu0 %962
  %964 = vrot.lane.b32.xlu0 %v325, 64
  %v965 = vpop.permute.xlu0 %964
  %v969 = vsel %vm699, %v784, 0
  %v972 = vsel %vm699, %v785, 0
  %974 = vmatprep.subr.mxu0 0.0
  %975 = vmatpush1.msra.mxu0 0.0
  %976 = vmatprep.subr.mxu0 0.0
  %977 = vmatpush1.msra.mxu0 0.0
  %978 = vmatprep.subr.mxu0 0.0
  %979 = vmatpush1.msra.mxu0 0.0
  %980 = vmatprep.subr.mxu0 0.0
  %981 = vmatpush1.msra.mxu0 0.0
  %982 = vmatprep.subr.mxu0 0.0
  %983 = vmatpush1.msra.mxu0 0.0
  %984 = vmatprep.subr.mxu0 0.0
  %985 = vmatpush1.msra.mxu0 0.0
  %986 = vmatprep.subr.mxu0 0.0
  %987 = vmatpush1.msra.mxu0 0.0
  %988 = vmatprep.subr.mxu0 0.0
  %989 = vmatpush1.msra.mxu0 0.0
  %990 = vmatprep.subr.mxu0 0.0
  %991 = vmatpush1.msra.mxu0 0.0
  %992 = vmatprep.subr.mxu0 0.0
  %993 = vmatpush1.msra.mxu0 0.0
  %994 = vmatprep.subr.mxu0 0.0
  %995 = vmatpush1.msra.mxu0 0.0
  %996 = vmatprep.subr.mxu0 0.0
  %997 = vmatpush1.msra.mxu0 0.0
  %998 = vmatprep.subr.mxu0 0.0
  %999 = vmatpush1.msra.mxu0 0.0
  %1000 = vmatprep.subr.mxu0 0.0
  %1001 = vmatpush1.msra.mxu0 0.0
  %1002 = vmatprep.subr.mxu0 0.0
  %1003 = vmatpush1.msra.mxu0 %v965
  %1004 = vmatprep.subr.mxu0 0.0
  %1005 = vmatpush1.msra.mxu0 %v963
  %1006 = vmatprep.subr.mxu0 0.0
  %1007 = vmatpush2.msra.mxu0 0.0
  %1008 = vmatprep.subr.mxu0 0.0
  %1009 = vmatpush2.msra.mxu0 0.0
  %1010 = vmatprep.subr.mxu0 0.0
  %1011 = vmatpush2.msra.mxu0 0.0
  %1012 = vmatprep.subr.mxu0 0.0
  %1013 = vmatpush2.msra.mxu0 0.0
  %1014 = vmatprep.subr.mxu0 0.0
  %1015 = vmatpush2.msra.mxu0 0.0
  %1016 = vmatprep.subr.mxu0 0.0
  %1017 = vmatpush2.msra.mxu0 0.0
  %1018 = vmatprep.subr.mxu0 0.0
  %1019 = vmatpush2.msra.mxu0 0.0
  %1020 = vmatprep.subr.mxu0 0.0
  %1021 = vmatpush2.msra.mxu0 0.0
  %1022 = vmatprep.subr.mxu0 0.0
  %1023 = vmatpush2.msra.mxu0 0.0
  %1024 = vmatprep.subr.mxu0 0.0
  %1025 = vmatpush2.msra.mxu0 0.0
  %1026 = vmatprep.subr.mxu0 0.0
  %1027 = vmatpush2.msra.mxu0 0.0
  %1028 = vmatprep.subr.mxu0 0.0
  %1029 = vmatpush2.msra.mxu0 0.0
  %1030 = vmatprep.subr.mxu0 0.0
  %1031 = vmatpush2.msra.mxu0 0.0
  %1032 = vmatprep.subr.mxu0 0.0
  %1033 = vmatpush2.msra.mxu0 0.0
  %1034 = vmatprep.subr.mxu0 0.0
  %1035 = vmatpush2.msra.mxu0 0.0
  %1036 = vmatprep.subr.mxu0 0.0
  %1037 = vmatpush2.msra.mxu0 0.0
  %1038 = vmatprep.mubr.f32.mxu0 0.0
  %1039 = vmatmul.mubr.f32.gmra.mxu0 %v969
  %v1040 = vpop.f32.mrf.mxu0
  %v1041 = vadd.f32 0.0, %v1040
  %v1042 = vpop.f32.mrf.mxu0
  %1043 = vmatprep.mubr.f32.mxu0 0.0
  %1044 = vmatmul.mubr.f32.gmra.mxu0 %v972
  %v1045 = vpop.f32.mrf.mxu0
  %v1046 = vadd.f32 0.0, %v1045
  %v1047 = vpop.f32.mrf.mxu0
  %1048 = vdwg.mxu0
  %1049 = vrot.lane.b32.xlu0 %v329, 64
  %v1050 = vpop.permute.xlu0 %1049
  %1051 = vrot.lane.b32.xlu0 %v331, 64
  %v1052 = vpop.permute.xlu0 %1051
  %v1056 = vsel %vm699, %v786, 0
  %v1059 = vsel %vm699, %v787, 0
  %1061 = vmatprep.subr.mxu0 0.0
  %1062 = vmatpush1.msra.mxu0 0.0
  %1063 = vmatprep.subr.mxu0 0.0
  %1064 = vmatpush1.msra.mxu0 0.0
  %1065 = vmatprep.subr.mxu0 0.0
  %1066 = vmatpush1.msra.mxu0 0.0
  %1067 = vmatprep.subr.mxu0 0.0
  %1068 = vmatpush1.msra.mxu0 0.0
  %1069 = vmatprep.subr.mxu0 0.0
  %1070 = vmatpush1.msra.mxu0 0.0
  %1071 = vmatprep.subr.mxu0 0.0
  %1072 = vmatpush1.msra.mxu0 0.0
  %1073 = vmatprep.subr.mxu0 0.0
  %1074 = vmatpush1.msra.mxu0 0.0
  %1075 = vmatprep.subr.mxu0 0.0
  %1076 = vmatpush1.msra.mxu0 0.0
  %1077 = vmatprep.subr.mxu0 0.0
  %1078 = vmatpush1.msra.mxu0 0.0
  %1079 = vmatprep.subr.mxu0 0.0
  %1080 = vmatpush1.msra.mxu0 0.0
  %1081 = vmatprep.subr.mxu0 0.0
  %1082 = vmatpush1.msra.mxu0 0.0
  %1083 = vmatprep.subr.mxu0 0.0
  %1084 = vmatpush1.msra.mxu0 0.0
  %1085 = vmatprep.subr.mxu0 0.0
  %1086 = vmatpush1.msra.mxu0 0.0
  %1087 = vmatprep.subr.mxu0 0.0
  %1088 = vmatpush1.msra.mxu0 0.0
  %1089 = vmatprep.subr.mxu0 0.0
  %1090 = vmatpush1.msra.mxu0 %v1052
  %1091 = vmatprep.subr.mxu0 0.0
  %1092 = vmatpush1.msra.mxu0 %v1050
  %1093 = vmatprep.subr.mxu0 0.0
  %1094 = vmatpush2.msra.mxu0 0.0
  %1095 = vmatprep.subr.mxu0 0.0
  %1096 = vmatpush2.msra.mxu0 0.0
  %1097 = vmatprep.subr.mxu0 0.0
  %1098 = vmatpush2.msra.mxu0 0.0
  %1099 = vmatprep.subr.mxu0 0.0
  %1100 = vmatpush2.msra.mxu0 0.0
  %1101 = vmatprep.subr.mxu0 0.0
  %1102 = vmatpush2.msra.mxu0 0.0
  %1103 = vmatprep.subr.mxu0 0.0
  %1104 = vmatpush2.msra.mxu0 0.0
  %1105 = vmatprep.subr.mxu0 0.0
  %1106 = vmatpush2.msra.mxu0 0.0
  %1107 = vmatprep.subr.mxu0 0.0
  %1108 = vmatpush2.msra.mxu0 0.0
  %1109 = vmatprep.subr.mxu0 0.0
  %1110 = vmatpush2.msra.mxu0 0.0
  %1111 = vmatprep.subr.mxu0 0.0
  %1112 = vmatpush2.msra.mxu0 0.0
  %1113 = vmatprep.subr.mxu0 0.0
  %1114 = vmatpush2.msra.mxu0 0.0
  %1115 = vmatprep.subr.mxu0 0.0
  %1116 = vmatpush2.msra.mxu0 0.0
  %1117 = vmatprep.subr.mxu0 0.0
  %1118 = vmatpush2.msra.mxu0 0.0
  %1119 = vmatprep.subr.mxu0 0.0
  %1120 = vmatpush2.msra.mxu0 0.0
  %1121 = vmatprep.subr.mxu0 0.0
  %1122 = vmatpush2.msra.mxu0 0.0
  %1123 = vmatprep.subr.mxu0 0.0
  %1124 = vmatpush2.msra.mxu0 0.0
  %1125 = vmatprep.mubr.f32.mxu0 0.0
  %1126 = vmatmul.mubr.f32.gmra.mxu0 %v1056
  %v1127 = vpop.f32.mrf.mxu0
  %v1128 = vadd.f32 0.0, %v1127
  %v1129 = vpop.f32.mrf.mxu0
  %1130 = vmatprep.mubr.f32.mxu0 0.0
  %1131 = vmatmul.mubr.f32.gmra.mxu0 %v1059
  %v1132 = vpop.f32.mrf.mxu0
  %v1133 = vadd.f32 0.0, %v1132
  %v1134 = vpop.f32.mrf.mxu0
  %1135 = vdwg.mxu0
  %1138 = vrot.lane.b32.xlu0 %v954, 8
  %v1139 = vpop.permute.xlu0 %1138
  %1140 = vrot.lane.b32.xlu0 %v959, 8
  %v1141 = vpop.permute.xlu0 %1140
  %1146 = vrot.lane.b32.xlu0 %v1041, 16
  %v1147 = vpop.permute.xlu0 %1146
  %1148 = vrot.lane.b32.xlu0 %v1046, 16
  %v1149 = vpop.permute.xlu0 %1148
  %1154 = vrot.lane.b32.xlu0 %v1128, 24
  %v1155 = vpop.permute.xlu0 %1154
  %1156 = vrot.lane.b32.xlu0 %v1133, 24
  %v1157 = vpop.permute.xlu0 %1156
  %v1160 = vsel %vm346, %v867, %v1139
  %v1161 = vsel %vm346, %v872, %v1141
  %v1162 = vsel %vm699, %v1160, %v1147
  %v1163 = vsel %vm699, %v1161, %v1149
  %vm1164 = vcmask 195584
  %v1165 = vsel %vm1164, %v1162, %v1155
  %v1166 = vsel %vm1164, %v1163, %v1157
  %v1167 = vld [vmem:[%s9] sm:$0xff]
  %v1168 = vld [vmem:[%s9 + $0x8] sm:$0xff]
  %v1169 = vld [vmem:[%s9 + $0x10] sm:$0xff]
  %v1170 = vld [vmem:[%s9 + $0x18] sm:$0xff]
  %v1172 = vsel %vm184, %v1165, 0
  %v1175 = vsel %vm184, %v1166, 0
  %1177 = vmatprep.subr.mxu0 0.0
  %1178 = vmatpush1.msra.mxu0 0.0
  %1179 = vmatprep.subr.mxu0 0.0
  %1180 = vmatpush1.msra.mxu0 0.0
  %1181 = vmatprep.subr.mxu0 0.0
  %1182 = vmatpush1.msra.mxu0 0.0
  %1183 = vmatprep.subr.mxu0 0.0
  %1184 = vmatpush1.msra.mxu0 0.0
  %1185 = vmatprep.subr.mxu0 0.0
  %1186 = vmatpush1.msra.mxu0 0.0
  %1187 = vmatprep.subr.mxu0 0.0
  %1188 = vmatpush1.msra.mxu0 0.0
  %1189 = vmatprep.subr.mxu0 0.0
  %1190 = vmatpush1.msra.mxu0 0.0
  %1191 = vmatprep.subr.mxu0 0.0
  %1192 = vmatpush1.msra.mxu0 0.0
  %1193 = vmatprep.subr.mxu0 0.0
  %1194 = vmatpush1.msra.mxu0 0.0
  %1195 = vmatprep.subr.mxu0 0.0
  %1196 = vmatpush1.msra.mxu0 0.0
  %1197 = vmatprep.subr.mxu0 0.0
  %1198 = vmatpush1.msra.mxu0 0.0
  %1199 = vmatprep.subr.mxu0 0.0
  %1200 = vmatpush1.msra.mxu0 0.0
  %1201 = vmatprep.subr.mxu0 0.0
  %1202 = vmatpush1.msra.mxu0 %v1170
  %1203 = vmatprep.subr.mxu0 0.0
  %1204 = vmatpush1.msra.mxu0 %v1169
  %1205 = vmatprep.subr.mxu0 0.0
  %1206 = vmatpush1.msra.mxu0 %v1168
  %1207 = vmatprep.subr.mxu0 0.0
  %1208 = vmatpush1.msra.mxu0 %v1167
  %1209 = vmatprep.subr.mxu0 0.0
  %1210 = vmatpush2.msra.mxu0 0.0
  %1211 = vmatprep.subr.mxu0 0.0
  %1212 = vmatpush2.msra.mxu0 0.0
  %1213 = vmatprep.subr.mxu0 0.0
  %1214 = vmatpush2.msra.mxu0 0.0
  %1215 = vmatprep.subr.mxu0 0.0
  %1216 = vmatpush2.msra.mxu0 0.0
  %1217 = vmatprep.subr.mxu0 0.0
  %1218 = vmatpush2.msra.mxu0 0.0
  %1219 = vmatprep.subr.mxu0 0.0
  %1220 = vmatpush2.msra.mxu0 0.0
  %1221 = vmatprep.subr.mxu0 0.0
  %1222 = vmatpush2.msra.mxu0 0.0
  %1223 = vmatprep.subr.mxu0 0.0
  %1224 = vmatpush2.msra.mxu0 0.0
  %1225 = vmatprep.subr.mxu0 0.0
  %1226 = vmatpush2.msra.mxu0 0.0
  %1227 = vmatprep.subr.mxu0 0.0
  %1228 = vmatpush2.msra.mxu0 0.0
  %1229 = vmatprep.subr.mxu0 0.0
  %1230 = vmatpush2.msra.mxu0 0.0
  %1231 = vmatprep.subr.mxu0 0.0
  %1232 = vmatpush2.msra.mxu0 0.0
  %1233 = vmatprep.subr.mxu0 0.0
  %1234 = vmatpush2.msra.mxu0 0.0
  %1235 = vmatprep.subr.mxu0 0.0
  %1236 = vmatpush2.msra.mxu0 0.0
  %1237 = vmatprep.subr.mxu0 0.0
  %1238 = vmatpush2.msra.mxu0 0.0
  %1239 = vmatprep.subr.mxu0 0.0
  %1240 = vmatpush2.msra.mxu0 0.0
  %1241 = vmatprep.mubr.f32.mxu0 0.0
  %1242 = vmatmul.mubr.f32.gmra.mxu0 %v1172
  %v1243 = vpop.f32.mrf.mxu0
  %v1244 = vadd.f32 0.0, %v1243
  %v1245 = vpop.f32.mrf.mxu0
  %1246 = vmatprep.mubr.f32.mxu0 0.0
  %1247 = vmatmul.mubr.f32.gmra.mxu0 %v1175
  %v1248 = vpop.f32.mrf.mxu0
  %v1249 = vadd.f32 0.0, %v1248
  %v1250 = vpop.f32.mrf.mxu0
  %1251 = vdwg.mxu0
  %v1252 = vadd.f32 %v172, %v1244
  %v1253 = vadd.f32 %v177, %v1249
  %v1254 = vld [vmem:[%s10] sm:$0x1]
  %v1255 = vlaneseq
  %v1256 = vshrl.u32 %v1255, 7
  %v1257 = vsub.s32 0, %v1256
  %v1258 = vrot.slane %v1254, %v1257
  %v1259 = vadd.f32 %v1252, %v1258
  %v1260 = vadd.f32 %v1253, %v1258
  %v1261 = vld [vmem:[%s11] sm:$0x1]
  %v1262 = vld [vmem:[%s12] sm:$0x1]
  %v1263 = vsel %vm184, %v1259, 0.0
  %1264 = vadd.xlane.f32.xlu0 %v1263
  %v1265 = vpop.xlane.xlu0 %1264
  %v1266 = vsel %vm184, %v1260, 0.0
  %1267 = vadd.xlane.f32.xlu0 %v1266
  %v1268 = vpop.xlane.xlu0 %1267
  %v1269 = vmul.f32 %v1265, %v191
  %v1270 = vmul.f32 %v1268, %v191
  %v1271 = vsub.f32 %v1259, %v1269
  %v1272 = vsub.f32 %v1260, %v1270
  %v1273 = vmul.f32 %v1271, %v1271
  %v1274 = vmul.f32 %v1272, %v1272
  %v1275 = vsel %vm184, %v1273, 0.0
  %1276 = vadd.xlane.f32.xlu0 %v1275
  %v1277 = vpop.xlane.xlu0 %1276
  %v1278 = vsel %vm184, %v1274, 0.0
  %1279 = vadd.xlane.f32.xlu0 %v1278
  %v1280 = vpop.xlane.xlu0 %1279
  %v1281 = vmul.f32 %v1277, %v191
  %v1282 = vmul.f32 %v1280, %v191
  %v1283 = vadd.f32 %v1281, 1e-05
  %v1284 = vadd.f32 %v1282, 1e-05
  %v1285 = vrsqrt.pop %v1283
  %v1286 = vrsqrt.pop %v1284
  %v1287 = vmul.f32 %v1271, %v1285
  %v1288 = vmul.f32 %v1272, %v1286
  %v1289 = vlaneseq
  %v1290 = vshrl.u32 %v1289, 7
  %v1291 = vsub.s32 0, %v1290
  %v1292 = vrot.slane %v1261, %v1291
  %v1293 = vmul.f32 %v1287, %v1292
  %v1294 = vmul.f32 %v1288, %v1292
  %v1295 = vlaneseq
  %v1296 = vshrl.u32 %v1295, 7
  %v1297 = vsub.s32 0, %v1296
  %v1298 = vrot.slane %v1262, %v1297
  %v1299 = vadd.f32 %v1293, %v1298
  %v1300 = vadd.f32 %v1294, %v1298
  %v1301 = vld [vmem:[%s13] sm:$0xff]
  %v1302 = vld [vmem:[%s13 + $0x8] sm:$0xff]
  %v1303 = vld [vmem:[%s13 + $0x10] sm:$0xff]
  %v1304 = vld [vmem:[%s13 + $0x18] sm:$0xff]
  %v1305 = vld [vmem:[%s14] sm:$0x1]
  %v1306 = vlaneseq
  %v1307 = vshrl.u32 %v1306, 7
  %v1308 = vsub.s32 0, %v1307
  %v1309 = vrot.slane %v1305, %v1308
  %v1311 = vsel %vm184, %v1299, 0
  %v1314 = vsel %vm184, %v1300, 0
  %1316 = vmatprep.subr.mxu0 0.0
  %1317 = vmatpush1.msra.mxu0 0.0
  %1318 = vmatprep.subr.mxu0 0.0
  %1319 = vmatpush1.msra.mxu0 0.0
  %1320 = vmatprep.subr.mxu0 0.0
  %1321 = vmatpush1.msra.mxu0 0.0
  %1322 = vmatprep.subr.mxu0 0.0
  %1323 = vmatpush1.msra.mxu0 0.0
  %1324 = vmatprep.subr.mxu0 0.0
  %1325 = vmatpush1.msra.mxu0 0.0
  %1326 = vmatprep.subr.mxu0 0.0
  %1327 = vmatpush1.msra.mxu0 0.0
  %1328 = vmatprep.subr.mxu0 0.0
  %1329 = vmatpush1.msra.mxu0 0.0
  %1330 = vmatprep.subr.mxu0 0.0
  %1331 = vmatpush1.msra.mxu0 0.0
  %1332 = vmatprep.subr.mxu0 0.0
  %1333 = vmatpush1.msra.mxu0 0.0
  %1334 = vmatprep.subr.mxu0 0.0
  %1335 = vmatpush1.msra.mxu0 0.0
  %1336 = vmatprep.subr.mxu0 0.0
  %1337 = vmatpush1.msra.mxu0 0.0
  %1338 = vmatprep.subr.mxu0 0.0
  %1339 = vmatpush1.msra.mxu0 0.0
  %1340 = vmatprep.subr.mxu0 0.0
  %1341 = vmatpush1.msra.mxu0 %v1304
  %1342 = vmatprep.subr.mxu0 0.0
  %1343 = vmatpush1.msra.mxu0 %v1303
  %1344 = vmatprep.subr.mxu0 0.0
  %1345 = vmatpush1.msra.mxu0 %v1302
  %1346 = vmatprep.subr.mxu0 0.0
  %1347 = vmatpush1.msra.mxu0 %v1301
  %1348 = vmatprep.subr.mxu0 0.0
  %1349 = vmatpush2.msra.mxu0 0.0
  %1350 = vmatprep.subr.mxu0 0.0
  %1351 = vmatpush2.msra.mxu0 0.0
  %1352 = vmatprep.subr.mxu0 0.0
  %1353 = vmatpush2.msra.mxu0 0.0
  %1354 = vmatprep.subr.mxu0 0.0
  %1355 = vmatpush2.msra.mxu0 0.0
  %1356 = vmatprep.subr.mxu0 0.0
  %1357 = vmatpush2.msra.mxu0 0.0
  %1358 = vmatprep.subr.mxu0 0.0
  %1359 = vmatpush2.msra.mxu0 0.0
  %1360 = vmatprep.subr.mxu0 0.0
  %1361 = vmatpush2.msra.mxu0 0.0
  %1362 = vmatprep.subr.mxu0 0.0
  %1363 = vmatpush2.msra.mxu0 0.0
  %1364 = vmatprep.subr.mxu0 0.0
  %1365 = vmatpush2.msra.mxu0 0.0
  %1366 = vmatprep.subr.mxu0 0.0
  %1367 = vmatpush2.msra.mxu0 0.0
  %1368 = vmatprep.subr.mxu0 0.0
  %1369 = vmatpush2.msra.mxu0 0.0
  %1370 = vmatprep.subr.mxu0 0.0
  %1371 = vmatpush2.msra.mxu0 0.0
  %1372 = vmatprep.subr.mxu0 0.0
  %1373 = vmatpush2.msra.mxu0 0.0
  %1374 = vmatprep.subr.mxu0 0.0
  %1375 = vmatpush2.msra.mxu0 0.0
  %1376 = vmatprep.subr.mxu0 0.0
  %1377 = vmatpush2.msra.mxu0 0.0
  %1378 = vmatprep.subr.mxu0 0.0
  %1379 = vmatpush2.msra.mxu0 0.0
  %1380 = vmatprep.mubr.f32.mxu0 0.0
  %1381 = vmatmul.mubr.f32.gmra.mxu0 %v1311
  %v1382 = vpop.f32.mrf.mxu0
  %v1383 = vadd.f32 %v1309, %v1382
  %v1384 = vpop.f32.mrf.mxu0
  %1385 = vmatprep.mubr.f32.mxu0 0.0
  %1386 = vmatmul.mubr.f32.gmra.mxu0 %v1314
  %v1387 = vpop.f32.mrf.mxu0
  %v1388 = vadd.f32 %v1309, %v1387
  %v1389 = vpop.f32.mrf.mxu0
  %1390 = vdwg.mxu0
  %v1391 = vmul.f32 %v1383, 0.5
  %v1392 = vmul.f32 %v1388, 0.5
  %v1393 = vmul.f32 %v1383, 0.044715
  %v1394 = vmul.f32 %v1388, 0.044715
  %v1395 = vmul.f32 %v1393, %v1383
  %v1396 = vmul.f32 %v1394, %v1388
  %v1397 = vmul.f32 %v1395, %v1383
  %v1398 = vmul.f32 %v1396, %v1388
  %v1399 = vadd.f32 %v1383, %v1397
  %v1400 = vadd.f32 %v1388, %v1398
  %v1401 = vmul.f32 %v1399, 0.7978845
  %v1402 = vmul.f32 %v1400, 0.7978845
  %v1403 = vtanh.pop %v1401
  %v1404 = vtanh.pop %v1402
  %v1405 = vadd.f32 %v1403, 1.0
  %v1406 = vadd.f32 %v1404, 1.0
  %v1407 = vmul.f32 %v1391, %v1405
  %v1408 = vmul.f32 %v1392, %v1406
  %v1409 = vld [vmem:[%s15] sm:$0xff]
  %v1410 = vld [vmem:[%s15 + $0x8] sm:$0xff]
  %v1411 = vld [vmem:[%s15 + $0x10] sm:$0xff]
  %v1412 = vld [vmem:[%s15 + $0x18] sm:$0xff]
  %v1413 = vld [vmem:[%s15 + $0x20] sm:$0xff]
  %v1414 = vld [vmem:[%s15 + $0x28] sm:$0xff]
  %v1415 = vld [vmem:[%s15 + $0x30] sm:$0xff]
  %v1416 = vld [vmem:[%s15 + $0x38] sm:$0xff]
  %v1417 = vld [vmem:[%s15 + $0x40] sm:$0xff]
  %v1418 = vld [vmem:[%s15 + $0x48] sm:$0xff]
  %v1419 = vld [vmem:[%s15 + $0x50] sm:$0xff]
  %v1420 = vld [vmem:[%s15 + $0x58] sm:$0xff]
  %v1421 = vld [vmem:[%s15 + $0x60] sm:$0xff]
  %v1422 = vld [vmem:[%s15 + $0x68] sm:$0xff]
  %v1423 = vld [vmem:[%s15 + $0x70] sm:$0xff]
  %v1424 = vld [vmem:[%s15 + $0x78] sm:$0xff]
  %v1425 = vld [vmem:[%s16] sm:$0x1]
  %v1426 = vlaneseq
  %v1427 = vshrl.u32 %v1426, 7
  %v1428 = vsub.s32 0, %v1427
  %v1429 = vrot.slane %v1425, %v1428
  %1430 = vmatprep.subr.mxu0 0.0
  %1431 = vmatpush1.msra.mxu0 %v1424
  %1432 = vmatprep.subr.mxu0 0.0
  %1433 = vmatpush1.msra.mxu0 %v1423
  %1434 = vmatprep.subr.mxu0 0.0
  %1435 = vmatpush1.msra.mxu0 %v1422
  %1436 = vmatprep.subr.mxu0 0.0
  %1437 = vmatpush1.msra.mxu0 %v1421
  %1438 = vmatprep.subr.mxu0 0.0
  %1439 = vmatpush1.msra.mxu0 %v1420
  %1440 = vmatprep.subr.mxu0 0.0
  %1441 = vmatpush1.msra.mxu0 %v1419
  %1442 = vmatprep.subr.mxu0 0.0
  %1443 = vmatpush1.msra.mxu0 %v1418
  %1444 = vmatprep.subr.mxu0 0.0
  %1445 = vmatpush1.msra.mxu0 %v1417
  %1446 = vmatprep.subr.mxu0 0.0
  %1447 = vmatpush1.msra.mxu0 %v1416
  %1448 = vmatprep.subr.mxu0 0.0
  %1449 = vmatpush1.msra.mxu0 %v1415
  %1450 = vmatprep.subr.mxu0 0.0
  %1451 = vmatpush1.msra.mxu0 %v1414
  %1452 = vmatprep.subr.mxu0 0.0
  %1453 = vmatpush1.msra.mxu0 %v1413
  %1454 = vmatprep.subr.mxu0 0.0
  %1455 = vmatpush1.msra.mxu0 %v1412
  %1456 = vmatprep.subr.mxu0 0.0
  %1457 = vmatpush1.msra.mxu0 %v1411
  %1458 = vmatprep.subr.mxu0 0.0
  %1459 = vmatpush1.msra.mxu0 %v1410
  %1460 = vmatprep.subr.mxu0 0.0
  %1461 = vmatpush1.msra.mxu0 %v1409
  %1462 = vmatprep.subr.mxu0 0.0
  %1463 = vmatpush2.msra.mxu0 0.0
  %1464 = vmatprep.subr.mxu0 0.0
  %1465 = vmatpush2.msra.mxu0 0.0
  %1466 = vmatprep.subr.mxu0 0.0
  %1467 = vmatpush2.msra.mxu0 0.0
  %1468 = vmatprep.subr.mxu0 0.0
  %1469 = vmatpush2.msra.mxu0 0.0
  %1470 = vmatprep.subr.mxu0 0.0
  %1471 = vmatpush2.msra.mxu0 0.0
  %1472 = vmatprep.subr.mxu0 0.0
  %1473 = vmatpush2.msra.mxu0 0.0
  %1474 = vmatprep.subr.mxu0 0.0
  %1475 = vmatpush2.msra.mxu0 0.0
  %1476 = vmatprep.subr.mxu0 0.0
  %1477 = vmatpush2.msra.mxu0 0.0
  %1478 = vmatprep.subr.mxu0 0.0
  %1479 = vmatpush2.msra.mxu0 0.0
  %1480 = vmatprep.subr.mxu0 0.0
  %1481 = vmatpush2.msra.mxu0 0.0
  %1482 = vmatprep.subr.mxu0 0.0
  %1483 = vmatpush2.msra.mxu0 0.0
  %1484 = vmatprep.subr.mxu0 0.0
  %1485 = vmatpush2.msra.mxu0 0.0
  %1486 = vmatprep.subr.mxu0 0.0
  %1487 = vmatpush2.msra.mxu0 0.0
  %1488 = vmatprep.subr.mxu0 0.0
  %1489 = vmatpush2.msra.mxu0 0.0
  %1490 = vmatprep.subr.mxu0 0.0
  %1491 = vmatpush2.msra.mxu0 0.0
  %1492 = vmatprep.subr.mxu0 0.0
  %1493 = vmatpush2.msra.mxu0 0.0
  %1494 = vmatprep.mubr.f32.mxu0 0.0
  %1495 = vmatmul.mubr.f32.gmra.mxu0 %v1407
  %v1496 = vpop.f32.mrf.mxu0
  %v1497 = vadd.f32 %v1429, %v1496
  %v1498 = vpop.f32.mrf.mxu0
  %1499 = vmatprep.mubr.f32.mxu0 0.0
  %1500 = vmatmul.mubr.f32.gmra.mxu0 %v1408
  %v1501 = vpop.f32.mrf.mxu0
  %v1502 = vadd.f32 %v1429, %v1501
  %v1503 = vpop.f32.mrf.mxu0
  %1504 = vdwg.mxu0
  %v1505 = vadd.f32 %v1259, %v1497
  %v1506 = vadd.f32 %v1260, %v1502
  %v1507 = vld [vmem:[%s5 + $0x1] sm:$0x1]
  %v1508 = vld [vmem:[%s6 + $0x1] sm:$0x1]
  %v1509 = vsel %vm184, %v1505, 0.0
  %1510 = vadd.xlane.f32.xlu0 %v1509
  %v1511 = vpop.xlane.xlu0 %1510
  %v1512 = vsel %vm184, %v1506, 0.0
  %1513 = vadd.xlane.f32.xlu0 %v1512
  %v1514 = vpop.xlane.xlu0 %1513
  %v1515 = vmul.f32 %v1511, %v191
  %v1516 = vmul.f32 %v1514, %v191
  %v1517 = vsub.f32 %v1505, %v1515
  %v1518 = vsub.f32 %v1506, %v1516
  %v1519 = vmul.f32 %v1517, %v1517
  %v1520 = vmul.f32 %v1518, %v1518
  %v1521 = vsel %vm184, %v1519, 0.0
  %1522 = vadd.xlane.f32.xlu0 %v1521
  %v1523 = vpop.xlane.xlu0 %1522
  %v1524 = vsel %vm184, %v1520, 0.0
  %1525 = vadd.xlane.f32.xlu0 %v1524
  %v1526 = vpop.xlane.xlu0 %1525
  %v1527 = vmul.f32 %v1523, %v191
  %v1528 = vmul.f32 %v1526, %v191
  %v1529 = vadd.f32 %v1527, 1e-05
  %v1530 = vadd.f32 %v1528, 1e-05
  %v1531 = vrsqrt.pop %v1529
  %v1532 = vrsqrt.pop %v1530
  %v1533 = vmul.f32 %v1517, %v1531
  %v1534 = vmul.f32 %v1518, %v1532
  %v1535 = vlaneseq
  %v1536 = vshrl.u32 %v1535, 7
  %v1537 = vsub.s32 0, %v1536
  %v1538 = vrot.slane %v1507, %v1537
  %v1539 = vmul.f32 %v1533, %v1538
  %v1540 = vmul.f32 %v1534, %v1538
  %v1541 = vlaneseq
  %v1542 = vshrl.u32 %v1541, 7
  %v1543 = vsub.s32 0, %v1542
  %v1544 = vrot.slane %v1508, %v1543
  %v1545 = vadd.f32 %v1539, %v1544
  %v1546 = vadd.f32 %v1540, %v1544
  %s1547 = scalar_lea.vmem %s7, 32
  %v1548 = vld [vmem:[%s1547] sm:$0xff]
  %v1549 = vld [vmem:[%s1547 + $0x8] sm:$0xff]
  %v1550 = vld [vmem:[%s1547 + $0x10] sm:$0xff]
  %v1551 = vld [vmem:[%s1547 + $0x18] sm:$0xff]
  %v1552 = vld [vmem:[%s8 + $0x1] sm:$0x1]
  %v1553 = vlaneseq
  %v1554 = vshrl.u32 %v1553, 7
  %v1555 = vsub.s32 0, %v1554
  %v1556 = vrot.slane %v1552, %v1555
  %v1558 = vsel %vm184, %v1545, 0
  %v1561 = vsel %vm184, %v1546, 0
  %1563 = vmatprep.subr.mxu0 0.0
  %1564 = vmatpush1.msra.mxu0 0.0
  %1565 = vmatprep.subr.mxu0 0.0
  %1566 = vmatpush1.msra.mxu0 0.0
  %1567 = vmatprep.subr.mxu0 0.0
  %1568 = vmatpush1.msra.mxu0 0.0
  %1569 = vmatprep.subr.mxu0 0.0
  %1570 = vmatpush1.msra.mxu0 0.0
  %1571 = vmatprep.subr.mxu0 0.0
  %1572 = vmatpush1.msra.mxu0 0.0
  %1573 = vmatprep.subr.mxu0 0.0
  %1574 = vmatpush1.msra.mxu0 0.0
  %1575 = vmatprep.subr.mxu0 0.0
  %1576 = vmatpush1.msra.mxu0 0.0
  %1577 = vmatprep.subr.mxu0 0.0
  %1578 = vmatpush1.msra.mxu0 0.0
  %1579 = vmatprep.subr.mxu0 0.0
  %1580 = vmatpush1.msra.mxu0 0.0
  %1581 = vmatprep.subr.mxu0 0.0
  %1582 = vmatpush1.msra.mxu0 0.0
  %1583 = vmatprep.subr.mxu0 0.0
  %1584 = vmatpush1.msra.mxu0 0.0
  %1585 = vmatprep.subr.mxu0 0.0
  %1586 = vmatpush1.msra.mxu0 0.0
  %1587 = vmatprep.subr.mxu0 0.0
  %1588 = vmatpush1.msra.mxu0 %v1551
  %1589 = vmatprep.subr.mxu0 0.0
  %1590 = vmatpush1.msra.mxu0 %v1550
  %1591 = vmatprep.subr.mxu0 0.0
  %1592 = vmatpush1.msra.mxu0 %v1549
  %1593 = vmatprep.subr.mxu0 0.0
  %1594 = vmatpush1.msra.mxu0 %v1548
  %1595 = vmatprep.subr.mxu0 0.0
  %1596 = vmatpush2.msra.mxu0 0.0
  %1597 = vmatprep.subr.mxu0 0.0
  %1598 = vmatpush2.msra.mxu0 0.0
  %1599 = vmatprep.subr.mxu0 0.0
  %1600 = vmatpush2.msra.mxu0 0.0
  %1601 = vmatprep.subr.mxu0 0.0
  %1602 = vmatpush2.msra.mxu0 0.0
  %1603 = vmatprep.subr.mxu0 0.0
  %1604 = vmatpush2.msra.mxu0 0.0
  %1605 = vmatprep.subr.mxu0 0.0
  %1606 = vmatpush2.msra.mxu0 0.0
  %1607 = vmatprep.subr.mxu0 0.0
  %1608 = vmatpush2.msra.mxu0 0.0
  %1609 = vmatprep.subr.mxu0 0.0
  %1610 = vmatpush2.msra.mxu0 0.0
  %1611 = vmatprep.subr.mxu0 0.0
  %1612 = vmatpush2.msra.mxu0 0.0
  %1613 = vmatprep.subr.mxu0 0.0
  %1614 = vmatpush2.msra.mxu0 0.0
  %1615 = vmatprep.subr.mxu0 0.0
  %1616 = vmatpush2.msra.mxu0 0.0
  %1617 = vmatprep.subr.mxu0 0.0
  %1618 = vmatpush2.msra.mxu0 0.0
  %1619 = vmatprep.subr.mxu0 0.0
  %1620 = vmatpush2.msra.mxu0 0.0
  %1621 = vmatprep.subr.mxu0 0.0
  %1622 = vmatpush2.msra.mxu0 0.0
  %1623 = vmatprep.subr.mxu0 0.0
  %1624 = vmatpush2.msra.mxu0 0.0
  %1625 = vmatprep.subr.mxu0 0.0
  %1626 = vmatpush2.msra.mxu0 0.0
  %1627 = vmatprep.mubr.f32.mxu0 0.0
  %1628 = vmatmul.mubr.f32.gmra.mxu0 %v1558
  %v1629 = vpop.f32.mrf.mxu0
  %v1630 = vadd.f32 %v1556, %v1629
  %v1631 = vpop.f32.mrf.mxu0
  %1632 = vmatprep.mubr.f32.mxu0 0.0
  %1633 = vmatmul.mubr.f32.gmra.mxu0 %v1561
  %v1634 = vpop.f32.mrf.mxu0
  %v1635 = vadd.f32 %v1556, %v1634
  %v1636 = vpop.f32.mrf.mxu0
  %1637 = vdwg.mxu0
  %1640 = vrot.lane.b32.xlu0 %v1630, 120
  %v1641 = vpop.permute.xlu0 %1640
  %1642 = vrot.lane.b32.xlu0 %v1635, 120
  %v1643 = vpop.permute.xlu0 %1642
  %1646 = vrot.lane.b32.xlu0 %v1630, 112
  %v1647 = vpop.permute.xlu0 %1646
  %1648 = vrot.lane.b32.xlu0 %v1635, 112
  %v1649 = vpop.permute.xlu0 %1648
  %1652 = vrot.lane.b32.xlu0 %v1630, 104
  %v1653 = vpop.permute.xlu0 %1652
  %1654 = vrot.lane.b32.xlu0 %v1635, 104
  %v1655 = vpop.permute.xlu0 %1654
  %v1658 = vmul.f32 %v1630, 0.35355338
  %v1659 = vmul.f32 %v1635, 0.35355338
  %v1660 = vmul.f32 %v1641, 0.35355338
  %v1661 = vmul.f32 %v1643, 0.35355338
  %v1662 = vmul.f32 %v1647, 0.35355338
  %v1663 = vmul.f32 %v1649, 0.35355338
  %v1664 = vmul.f32 %v1653, 0.35355338
  %v1665 = vmul.f32 %v1655, 0.35355338
  %1666 = vrot.lane.b32.xlu0 %v1630, 96
  %v1667 = vpop.permute.xlu0 %1666
  %1668 = vrot.lane.b32.xlu0 %v1635, 96
  %v1669 = vpop.permute.xlu0 %1668
  %v1671 = vsel %vm346, %v1658, 0
  %v1674 = vsel %vm346, %v1659, 0
  %v1676 = vsel %vm346, %v1667, 0
  %v1678 = vsel %vm346, %v1669, 0
  %1680 = vmatprep.subr.mxu0 0.0
  %1681 = vmatpush1.xpose.msra.mxu0 0.0
  %1682 = vmatprep.subr.mxu0 0.0
  %1683 = vmatpush1.xpose.msra.mxu0 0.0
  %1684 = vmatprep.subr.mxu0 0.0
  %1685 = vmatpush1.xpose.msra.mxu0 0.0
  %1686 = vmatprep.subr.mxu0 0.0
  %1687 = vmatpush1.xpose.msra.mxu0 0.0
  %1688 = vmatprep.subr.mxu0 0.0
  %1689 = vmatpush1.xpose.msra.mxu0 0.0
  %1690 = vmatprep.subr.mxu0 0.0
  %1691 = vmatpush1.xpose.msra.mxu0 0.0
  %1692 = vmatprep.subr.mxu0 0.0
  %1693 = vmatpush1.xpose.msra.mxu0 0.0
  %1694 = vmatprep.subr.mxu0 0.0
  %1695 = vmatpush1.xpose.msra.mxu0 0.0
  %1696 = vmatprep.subr.mxu0 0.0
  %1697 = vmatpush1.xpose.msra.mxu0 0.0
  %1698 = vmatprep.subr.mxu0 0.0
  %1699 = vmatpush1.xpose.msra.mxu0 0.0
  %1700 = vmatprep.subr.mxu0 0.0
  %1701 = vmatpush1.xpose.msra.mxu0 0.0
  %1702 = vmatprep.subr.mxu0 0.0
  %1703 = vmatpush1.xpose.msra.mxu0 0.0
  %1704 = vmatprep.subr.mxu0 0.0
  %1705 = vmatpush1.xpose.msra.mxu0 0.0
  %1706 = vmatprep.subr.mxu0 0.0
  %1707 = vmatpush1.xpose.msra.mxu0 0.0
  %1708 = vmatprep.subr.mxu0 0.0
  %1709 = vmatpush1.xpose.msra.mxu0 %v1678
  %1710 = vmatprep.subr.mxu0 0.0
  %1711 = vmatpush1.xpose.msra.mxu0 %v1676
  %1712 = vmatprep.subr.mxu0 0.0
  %1713 = vmatpush2.xpose.msra.mxu0 0.0
  %1714 = vmatprep.subr.mxu0 0.0
  %1715 = vmatpush2.xpose.msra.mxu0 0.0
  %1716 = vmatprep.subr.mxu0 0.0
  %1717 = vmatpush2.xpose.msra.mxu0 0.0
  %1718 = vmatprep.subr.mxu0 0.0
  %1719 = vmatpush2.xpose.msra.mxu0 0.0
  %1720 = vmatprep.subr.mxu0 0.0
  %1721 = vmatpush2.xpose.msra.mxu0 0.0
  %1722 = vmatprep.subr.mxu0 0.0
  %1723 = vmatpush2.xpose.msra.mxu0 0.0
  %1724 = vmatprep.subr.mxu0 0.0
  %1725 = vmatpush2.xpose.msra.mxu0 0.0
  %1726 = vmatprep.subr.mxu0 0.0
  %1727 = vmatpush2.xpose.msra.mxu0 0.0
  %1728 = vmatprep.subr.mxu0 0.0
  %1729 = vmatpush2.xpose.msra.mxu0 0.0
  %1730 = vmatprep.subr.mxu0 0.0
  %1731 = vmatpush2.xpose.msra.mxu0 0.0
  %1732 = vmatprep.subr.mxu0 0.0
  %1733 = vmatpush2.xpose.msra.mxu0 0.0
  %1734 = vmatprep.subr.mxu0 0.0
  %1735 = vmatpush2.xpose.msra.mxu0 0.0
  %1736 = vmatprep.subr.mxu0 0.0
  %1737 = vmatpush2.xpose.msra.mxu0 0.0
  %1738 = vmatprep.subr.mxu0 0.0
  %1739 = vmatpush2.xpose.msra.mxu0 0.0
  %1740 = vmatprep.subr.mxu0 0.0
  %1741 = vmatpush2.xpose.msra.mxu0 0.0
  %1742 = vmatprep.subr.mxu0 0.0
  %1743 = vmatpush2.xpose.msra.mxu0 0.0
  %1744 = vmatprep.mubr.f32.mxu0 0.0
  %1745 = vmatmul.mubr.f32.gmra.mxu0 %v1671
  %v1746 = vpop.f32.mrf.mxu0
  %v1747 = vadd.f32 %v180, %v1746
  %v1748 = vpop.f32.mrf.mxu0
  %1749 = vmatprep.mubr.f32.mxu0 0.0
  %1750 = vmatmul.mubr.f32.gmra.mxu0 %v1674
  %v1751 = vpop.f32.mrf.mxu0
  %v1752 = vadd.f32 %v181, %v1751
  %v1753 = vpop.f32.mrf.mxu0
  %1754 = vdwg.mxu0
  %1755 = vrot.lane.b32.xlu0 %v1641, 96
  %v1756 = vpop.permute.xlu0 %1755
  %1757 = vrot.lane.b32.xlu0 %v1643, 96
  %v1758 = vpop.permute.xlu0 %1757
  %v1760 = vsel %vm346, %v1660, 0
  %v1763 = vsel %vm346, %v1661, 0
  %v1765 = vsel %vm346, %v1756, 0
  %v1767 = vsel %vm346, %v1758, 0
  %1769 = vmatprep.subr.mxu0 0.0
  %1770 = vmatpush1.xpose.msra.mxu0 0.0
  %1771 = vmatprep.subr.mxu0 0.0
  %1772 = vmatpush1.xpose.msra.mxu0 0.0
  %1773 = vmatprep.subr.mxu0 0.0
  %1774 = vmatpush1.xpose.msra.mxu0 0.0
  %1775 = vmatprep.subr.mxu0 0.0
  %1776 = vmatpush1.xpose.msra.mxu0 0.0
  %1777 = vmatprep.subr.mxu0 0.0
  %1778 = vmatpush1.xpose.msra.mxu0 0.0
  %1779 = vmatprep.subr.mxu0 0.0
  %1780 = vmatpush1.xpose.msra.mxu0 0.0
  %1781 = vmatprep.subr.mxu0 0.0
  %1782 = vmatpush1.xpose.msra.mxu0 0.0
  %1783 = vmatprep.subr.mxu0 0.0
  %1784 = vmatpush1.xpose.msra.mxu0 0.0
  %1785 = vmatprep.subr.mxu0 0.0
  %1786 = vmatpush1.xpose.msra.mxu0 0.0
  %1787 = vmatprep.subr.mxu0 0.0
  %1788 = vmatpush1.xpose.msra.mxu0 0.0
  %1789 = vmatprep.subr.mxu0 0.0
  %1790 = vmatpush1.xpose.msra.mxu0 0.0
  %1791 = vmatprep.subr.mxu0 0.0
  %1792 = vmatpush1.xpose.msra.mxu0 0.0
  %1793 = vmatprep.subr.mxu0 0.0
  %1794 = vmatpush1.xpose.msra.mxu0 0.0
  %1795 = vmatprep.subr.mxu0 0.0
  %1796 = vmatpush1.xpose.msra.mxu0 0.0
  %1797 = vmatprep.subr.mxu0 0.0
  %1798 = vmatpush1.xpose.msra.mxu0 %v1767
  %1799 = vmatprep.subr.mxu0 0.0
  %1800 = vmatpush1.xpose.msra.mxu0 %v1765
  %1801 = vmatprep.subr.mxu0 0.0
  %1802 = vmatpush2.xpose.msra.mxu0 0.0
  %1803 = vmatprep.subr.mxu0 0.0
  %1804 = vmatpush2.xpose.msra.mxu0 0.0
  %1805 = vmatprep.subr.mxu0 0.0
  %1806 = vmatpush2.xpose.msra.mxu0 0.0
  %1807 = vmatprep.subr.mxu0 0.0
  %1808 = vmatpush2.xpose.msra.mxu0 0.0
  %1809 = vmatprep.subr.mxu0 0.0
  %1810 = vmatpush2.xpose.msra.mxu0 0.0
  %1811 = vmatprep.subr.mxu0 0.0
  %1812 = vmatpush2.xpose.msra.mxu0 0.0
  %1813 = vmatprep.subr.mxu0 0.0
  %1814 = vmatpush2.xpose.msra.mxu0 0.0
  %1815 = vmatprep.subr.mxu0 0.0
  %1816 = vmatpush2.xpose.msra.mxu0 0.0
  %1817 = vmatprep.subr.mxu0 0.0
  %1818 = vmatpush2.xpose.msra.mxu0 0.0
  %1819 = vmatprep.subr.mxu0 0.0
  %1820 = vmatpush2.xpose.msra.mxu0 0.0
  %1821 = vmatprep.subr.mxu0 0.0
  %1822 = vmatpush2.xpose.msra.mxu0 0.0
  %1823 = vmatprep.subr.mxu0 0.0
  %1824 = vmatpush2.xpose.msra.mxu0 0.0
  %1825 = vmatprep.subr.mxu0 0.0
  %1826 = vmatpush2.xpose.msra.mxu0 0.0
  %1827 = vmatprep.subr.mxu0 0.0
  %1828 = vmatpush2.xpose.msra.mxu0 0.0
  %1829 = vmatprep.subr.mxu0 0.0
  %1830 = vmatpush2.xpose.msra.mxu0 0.0
  %1831 = vmatprep.subr.mxu0 0.0
  %1832 = vmatpush2.xpose.msra.mxu0 0.0
  %1833 = vmatprep.mubr.f32.mxu0 0.0
  %1834 = vmatmul.mubr.f32.gmra.mxu0 %v1760
  %v1835 = vpop.f32.mrf.mxu0
  %v1836 = vadd.f32 %v180, %v1835
  %v1837 = vpop.f32.mrf.mxu0
  %1838 = vmatprep.mubr.f32.mxu0 0.0
  %1839 = vmatmul.mubr.f32.gmra.mxu0 %v1763
  %v1840 = vpop.f32.mrf.mxu0
  %v1841 = vadd.f32 %v181, %v1840
  %v1842 = vpop.f32.mrf.mxu0
  %1843 = vdwg.mxu0
  %1844 = vrot.lane.b32.xlu0 %v1647, 96
  %v1845 = vpop.permute.xlu0 %1844
  %1846 = vrot.lane.b32.xlu0 %v1649, 96
  %v1847 = vpop.permute.xlu0 %1846
  %v1849 = vsel %vm346, %v1662, 0
  %v1852 = vsel %vm346, %v1663, 0
  %v1854 = vsel %vm346, %v1845, 0
  %v1856 = vsel %vm346, %v1847, 0
  %1858 = vmatprep.subr.mxu0 0.0
  %1859 = vmatpush1.xpose.msra.mxu0 0.0
  %1860 = vmatprep.subr.mxu0 0.0
  %1861 = vmatpush1.xpose.msra.mxu0 0.0
  %1862 = vmatprep.subr.mxu0 0.0
  %1863 = vmatpush1.xpose.msra.mxu0 0.0
  %1864 = vmatprep.subr.mxu0 0.0
  %1865 = vmatpush1.xpose.msra.mxu0 0.0
  %1866 = vmatprep.subr.mxu0 0.0
  %1867 = vmatpush1.xpose.msra.mxu0 0.0
  %1868 = vmatprep.subr.mxu0 0.0
  %1869 = vmatpush1.xpose.msra.mxu0 0.0
  %1870 = vmatprep.subr.mxu0 0.0
  %1871 = vmatpush1.xpose.msra.mxu0 0.0
  %1872 = vmatprep.subr.mxu0 0.0
  %1873 = vmatpush1.xpose.msra.mxu0 0.0
  %1874 = vmatprep.subr.mxu0 0.0
  %1875 = vmatpush1.xpose.msra.mxu0 0.0
  %1876 = vmatprep.subr.mxu0 0.0
  %1877 = vmatpush1.xpose.msra.mxu0 0.0
  %1878 = vmatprep.subr.mxu0 0.0
  %1879 = vmatpush1.xpose.msra.mxu0 0.0
  %1880 = vmatprep.subr.mxu0 0.0
  %1881 = vmatpush1.xpose.msra.mxu0 0.0
  %1882 = vmatprep.subr.mxu0 0.0
  %1883 = vmatpush1.xpose.msra.mxu0 0.0
  %1884 = vmatprep.subr.mxu0 0.0
  %1885 = vmatpush1.xpose.msra.mxu0 0.0
  %1886 = vmatprep.subr.mxu0 0.0
  %1887 = vmatpush1.xpose.msra.mxu0 %v1856
  %1888 = vmatprep.subr.mxu0 0.0
  %1889 = vmatpush1.xpose.msra.mxu0 %v1854
  %1890 = vmatprep.subr.mxu0 0.0
  %1891 = vmatpush2.xpose.msra.mxu0 0.0
  %1892 = vmatprep.subr.mxu0 0.0
  %1893 = vmatpush2.xpose.msra.mxu0 0.0
  %1894 = vmatprep.subr.mxu0 0.0
  %1895 = vmatpush2.xpose.msra.mxu0 0.0
  %1896 = vmatprep.subr.mxu0 0.0
  %1897 = vmatpush2.xpose.msra.mxu0 0.0
  %1898 = vmatprep.subr.mxu0 0.0
  %1899 = vmatpush2.xpose.msra.mxu0 0.0
  %1900 = vmatprep.subr.mxu0 0.0
  %1901 = vmatpush2.xpose.msra.mxu0 0.0
  %1902 = vmatprep.subr.mxu0 0.0
  %1903 = vmatpush2.xpose.msra.mxu0 0.0
  %1904 = vmatprep.subr.mxu0 0.0
  %1905 = vmatpush2.xpose.msra.mxu0 0.0
  %1906 = vmatprep.subr.mxu0 0.0
  %1907 = vmatpush2.xpose.msra.mxu0 0.0
  %1908 = vmatprep.subr.mxu0 0.0
  %1909 = vmatpush2.xpose.msra.mxu0 0.0
  %1910 = vmatprep.subr.mxu0 0.0
  %1911 = vmatpush2.xpose.msra.mxu0 0.0
  %1912 = vmatprep.subr.mxu0 0.0
  %1913 = vmatpush2.xpose.msra.mxu0 0.0
  %1914 = vmatprep.subr.mxu0 0.0
  %1915 = vmatpush2.xpose.msra.mxu0 0.0
  %1916 = vmatprep.subr.mxu0 0.0
  %1917 = vmatpush2.xpose.msra.mxu0 0.0
  %1918 = vmatprep.subr.mxu0 0.0
  %1919 = vmatpush2.xpose.msra.mxu0 0.0
  %1920 = vmatprep.subr.mxu0 0.0
  %1921 = vmatpush2.xpose.msra.mxu0 0.0
  %1922 = vmatprep.mubr.f32.mxu0 0.0
  %1923 = vmatmul.mubr.f32.gmra.mxu0 %v1849
  %v1924 = vpop.f32.mrf.mxu0
  %v1925 = vadd.f32 %v180, %v1924
  %v1926 = vpop.f32.mrf.mxu0
  %1927 = vmatprep.mubr.f32.mxu0 0.0
  %1928 = vmatmul.mubr.f32.gmra.mxu0 %v1852
  %v1929 = vpop.f32.mrf.mxu0
  %v1930 = vadd.f32 %v181, %v1929
  %v1931 = vpop.f32.mrf.mxu0
  %1932 = vdwg.mxu0
  %1933 = vrot.lane.b32.xlu0 %v1653, 96
  %v1934 = vpop.permute.xlu0 %1933
  %1935 = vrot.lane.b32.xlu0 %v1655, 96
  %v1936 = vpop.permute.xlu0 %1935
  %v1938 = vsel %vm346, %v1664, 0
  %v1941 = vsel %vm346, %v1665, 0
  %v1943 = vsel %vm346, %v1934, 0
  %v1945 = vsel %vm346, %v1936, 0
  %1947 = vmatprep.subr.mxu0 0.0
  %1948 = vmatpush1.xpose.msra.mxu0 0.0
  %1949 = vmatprep.subr.mxu0 0.0
  %1950 = vmatpush1.xpose.msra.mxu0 0.0
  %1951 = vmatprep.subr.mxu0 0.0
  %1952 = vmatpush1.xpose.msra.mxu0 0.0
  %1953 = vmatprep.subr.mxu0 0.0
  %1954 = vmatpush1.xpose.msra.mxu0 0.0
  %1955 = vmatprep.subr.mxu0 0.0
  %1956 = vmatpush1.xpose.msra.mxu0 0.0
  %1957 = vmatprep.subr.mxu0 0.0
  %1958 = vmatpush1.xpose.msra.mxu0 0.0
  %1959 = vmatprep.subr.mxu0 0.0
  %1960 = vmatpush1.xpose.msra.mxu0 0.0
  %1961 = vmatprep.subr.mxu0 0.0
  %1962 = vmatpush1.xpose.msra.mxu0 0.0
  %1963 = vmatprep.subr.mxu0 0.0
  %1964 = vmatpush1.xpose.msra.mxu0 0.0
  %1965 = vmatprep.subr.mxu0 0.0
  %1966 = vmatpush1.xpose.msra.mxu0 0.0
  %1967 = vmatprep.subr.mxu0 0.0
  %1968 = vmatpush1.xpose.msra.mxu0 0.0
  %1969 = vmatprep.subr.mxu0 0.0
  %1970 = vmatpush1.xpose.msra.mxu0 0.0
  %1971 = vmatprep.subr.mxu0 0.0
  %1972 = vmatpush1.xpose.msra.mxu0 0.0
  %1973 = vmatprep.subr.mxu0 0.0
  %1974 = vmatpush1.xpose.msra.mxu0 0.0
  %1975 = vmatprep.subr.mxu0 0.0
  %1976 = vmatpush1.xpose.msra.mxu0 %v1945
  %1977 = vmatprep.subr.mxu0 0.0
  %1978 = vmatpush1.xpose.msra.mxu0 %v1943
  %1979 = vmatprep.subr.mxu0 0.0
  %1980 = vmatpush2.xpose.msra.mxu0 0.0
  %1981 = vmatprep.subr.mxu0 0.0
  %1982 = vmatpush2.xpose.msra.mxu0 0.0
  %1983 = vmatprep.subr.mxu0 0.0
  %1984 = vmatpush2.xpose.msra.mxu0 0.0
  %1985 = vmatprep.subr.mxu0 0.0
  %1986 = vmatpush2.xpose.msra.mxu0 0.0
  %1987 = vmatprep.subr.mxu0 0.0
  %1988 = vmatpush2.xpose.msra.mxu0 0.0
  %1989 = vmatprep.subr.mxu0 0.0
  %1990 = vmatpush2.xpose.msra.mxu0 0.0
  %1991 = vmatprep.subr.mxu0 0.0
  %1992 = vmatpush2.xpose.msra.mxu0 0.0
  %1993 = vmatprep.subr.mxu0 0.0
  %1994 = vmatpush2.xpose.msra.mxu0 0.0
  %1995 = vmatprep.subr.mxu0 0.0
  %1996 = vmatpush2.xpose.msra.mxu0 0.0
  %1997 = vmatprep.subr.mxu0 0.0
  %1998 = vmatpush2.xpose.msra.mxu0 0.0
  %1999 = vmatprep.subr.mxu0 0.0
  %2000 = vmatpush2.xpose.msra.mxu0 0.0
  %2001 = vmatprep.subr.mxu0 0.0
  %2002 = vmatpush2.xpose.msra.mxu0 0.0
  %2003 = vmatprep.subr.mxu0 0.0
  %2004 = vmatpush2.xpose.msra.mxu0 0.0
  %2005 = vmatprep.subr.mxu0 0.0
  %2006 = vmatpush2.xpose.msra.mxu0 0.0
  %2007 = vmatprep.subr.mxu0 0.0
  %2008 = vmatpush2.xpose.msra.mxu0 0.0
  %2009 = vmatprep.subr.mxu0 0.0
  %2010 = vmatpush2.xpose.msra.mxu0 0.0
  %2011 = vmatprep.mubr.f32.mxu0 0.0
  %2012 = vmatmul.mubr.f32.gmra.mxu0 %v1938
  %v2013 = vpop.f32.mrf.mxu0
  %v2014 = vadd.f32 %v180, %v2013
  %v2015 = vpop.f32.mrf.mxu0
  %2016 = vmatprep.mubr.f32.mxu0 0.0
  %2017 = vmatmul.mubr.f32.gmra.mxu0 %v1941
  %v2018 = vpop.f32.mrf.mxu0
  %v2019 = vadd.f32 %v181, %v2018
  %v2020 = vpop.f32.mrf.mxu0
  %2021 = vdwg.mxu0
  %v2022 = vsel %vm699, %v1747, -inf
  %2023 = vmax.xlane.f32.xlu0 %v2022
  %v2024 = vpop.xlane.xlu0 %2023
  %v2025 = vsel %vm699, %v1752, -inf
  %2026 = vmax.xlane.f32.xlu0 %v2025
  %v2027 = vpop.xlane.xlu0 %2026
  %v2028 = vsel %vm699, %v1836, -inf
  %2029 = vmax.xlane.f32.xlu0 %v2028
  %v2030 = vpop.xlane.xlu0 %2029
  %v2031 = vsel %vm699, %v1841, -inf
  %2032 = vmax.xlane.f32.xlu0 %v2031
  %v2033 = vpop.xlane.xlu0 %2032
  %v2034 = vsel %vm699, %v1925, -inf
  %2035 = vmax.xlane.f32.xlu0 %v2034
  %v2036 = vpop.xlane.xlu0 %2035
  %v2037 = vsel %vm699, %v1930, -inf
  %2038 = vmax.xlane.f32.xlu0 %v2037
  %v2039 = vpop.xlane.xlu0 %2038
  %v2040 = vsel %vm699, %v2014, -inf
  %2041 = vmax.xlane.f32.xlu0 %v2040
  %v2042 = vpop.xlane.xlu0 %2041
  %v2043 = vsel %vm699, %v2019, -inf
  %2044 = vmax.xlane.f32.xlu0 %v2043
  %v2045 = vpop.xlane.xlu0 %2044
  %v2046 = vsub.f32 %v1747, %v2024
  %v2047 = vsub.f32 %v1752, %v2027
  %v2048 = vsub.f32 %v1836, %v2030
  %v2049 = vsub.f32 %v1841, %v2033
  %v2050 = vsub.f32 %v1925, %v2036
  %v2051 = vsub.f32 %v1930, %v2039
  %v2052 = vsub.f32 %v2014, %v2042
  %v2053 = vsub.f32 %v2019, %v2045
  %v2054 = vmul.f32 %v2046, 1.442695
  %v2055 = vpow.pop %v2054
  %v2056 = vmul.f32 %v2047, 1.442695
  %v2057 = vpow.pop %v2056
  %v2058 = vmul.f32 %v2048, 1.442695
  %v2059 = vpow.pop %v2058
  %v2060 = vmul.f32 %v2049, 1.442695
  %v2061 = vpow.pop %v2060
  %v2062 = vmul.f32 %v2050, 1.442695
  %v2063 = vpow.pop %v2062
  %v2064 = vmul.f32 %v2051, 1.442695
  %v2065 = vpow.pop %v2064
  %v2066 = vmul.f32 %v2052, 1.442695
  %v2067 = vpow.pop %v2066
  %v2068 = vmul.f32 %v2053, 1.442695
  %v2069 = vpow.pop %v2068
  %v2070 = vsel %vm699, %v2055, 0.0
  %2071 = vadd.xlane.f32.xlu0 %v2070
  %v2072 = vpop.xlane.xlu0 %2071
  %v2073 = vsel %vm699, %v2057, 0.0
  %2074 = vadd.xlane.f32.xlu0 %v2073
  %v2075 = vpop.xlane.xlu0 %2074
  %v2076 = vsel %vm699, %v2059, 0.0
  %2077 = vadd.xlane.f32.xlu0 %v2076
  %v2078 = vpop.xlane.xlu0 %2077
  %v2079 = vsel %vm699, %v2061, 0.0
  %2080 = vadd.xlane.f32.xlu0 %v2079
  %v2081 = vpop.xlane.xlu0 %2080
  %v2082 = vsel %vm699, %v2063, 0.0
  %2083 = vadd.xlane.f32.xlu0 %v2082
  %v2084 = vpop.xlane.xlu0 %2083
  %v2085 = vsel %vm699, %v2065, 0.0
  %2086 = vadd.xlane.f32.xlu0 %v2085
  %v2087 = vpop.xlane.xlu0 %2086
  %v2088 = vsel %vm699, %v2067, 0.0
  %2089 = vadd.xlane.f32.xlu0 %v2088
  %v2090 = vpop.xlane.xlu0 %2089
  %v2091 = vsel %vm699, %v2069, 0.0
  %2092 = vadd.xlane.f32.xlu0 %v2091
  %v2093 = vpop.xlane.xlu0 %2092
  %v2094 = vrcp.pop %v2072
  %v2095 = vrcp.pop %v2075
  %v2096 = vrcp.pop %v2078
  %v2097 = vrcp.pop %v2081
  %v2098 = vrcp.pop %v2084
  %v2099 = vrcp.pop %v2087
  %v2100 = vrcp.pop %v2090
  %v2101 = vrcp.pop %v2093
  %v2102 = vmul.f32 %v2055, %v2094
  %v2103 = vmul.f32 %v2057, %v2095
  %v2104 = vmul.f32 %v2059, %v2096
  %v2105 = vmul.f32 %v2061, %v2097
  %v2106 = vmul.f32 %v2063, %v2098
  %v2107 = vmul.f32 %v2065, %v2099
  %v2108 = vmul.f32 %v2067, %v2100
  %v2109 = vmul.f32 %v2069, %v2101
  %2110 = vrot.lane.b32.xlu0 %v1630, 64
  %v2111 = vpop.permute.xlu0 %2110
  %2112 = vrot.lane.b32.xlu0 %v1635, 64
  %v2113 = vpop.permute.xlu0 %2112
  %v2117 = vsel %vm699, %v2102, 0
  %v2120 = vsel %vm699, %v2103, 0
  %2122 = vmatprep.subr.mxu0 0.0
  %2123 = vmatpush1.msra.mxu0 0.0
  %2124 = vmatprep.subr.mxu0 0.0
  %2125 = vmatpush1.msra.mxu0 0.0
  %2126 = vmatprep.subr.mxu0 0.0
  %2127 = vmatpush1.msra.mxu0 0.0
  %2128 = vmatprep.subr.mxu0 0.0
  %2129 = vmatpush1.msra.mxu0 0.0
  %2130 = vmatprep.subr.mxu0 0.0
  %2131 = vmatpush1.msra.mxu0 0.0
  %2132 = vmatprep.subr.mxu0 0.0
  %2133 = vmatpush1.msra.mxu0 0.0
  %2134 = vmatprep.subr.mxu0 0.0
  %2135 = vmatpush1.msra.mxu0 0.0
  %2136 = vmatprep.subr.mxu0 0.0
  %2137 = vmatpush1.msra.mxu0 0.0
  %2138 = vmatprep.subr.mxu0 0.0
  %2139 = vmatpush1.msra.mxu0 0.0
  %2140 = vmatprep.subr.mxu0 0.0
  %2141 = vmatpush1.msra.mxu0 0.0
  %2142 = vmatprep.subr.mxu0 0.0
  %2143 = vmatpush1.msra.mxu0 0.0
  %2144 = vmatprep.subr.mxu0 0.0
  %2145 = vmatpush1.msra.mxu0 0.0
  %2146 = vmatprep.subr.mxu0 0.0
  %2147 = vmatpush1.msra.mxu0 0.0
  %2148 = vmatprep.subr.mxu0 0.0
  %2149 = vmatpush1.msra.mxu0 0.0
  %2150 = vmatprep.subr.mxu0 0.0
  %2151 = vmatpush1.msra.mxu0 %v2113
  %2152 = vmatprep.subr.mxu0 0.0
  %2153 = vmatpush1.msra.mxu0 %v2111
  %2154 = vmatprep.subr.mxu0 0.0
  %2155 = vmatpush2.msra.mxu0 0.0
  %2156 = vmatprep.subr.mxu0 0.0
  %2157 = vmatpush2.msra.mxu0 0.0
  %2158 = vmatprep.subr.mxu0 0.0
  %2159 = vmatpush2.msra.mxu0 0.0
  %2160 = vmatprep.subr.mxu0 0.0
  %2161 = vmatpush2.msra.mxu0 0.0
  %2162 = vmatprep.subr.mxu0 0.0
  %2163 = vmatpush2.msra.mxu0 0.0
  %2164 = vmatprep.subr.mxu0 0.0
  %2165 = vmatpush2.msra.mxu0 0.0
  %2166 = vmatprep.subr.mxu0 0.0
  %2167 = vmatpush2.msra.mxu0 0.0
  %2168 = vmatprep.subr.mxu0 0.0
  %2169 = vmatpush2.msra.mxu0 0.0
  %2170 = vmatprep.subr.mxu0 0.0
  %2171 = vmatpush2.msra.mxu0 0.0
  %2172 = vmatprep.subr.mxu0 0.0
  %2173 = vmatpush2.msra.mxu0 0.0
  %2174 = vmatprep.subr.mxu0 0.0
  %2175 = vmatpush2.msra.mxu0 0.0
  %2176 = vmatprep.subr.mxu0 0.0
  %2177 = vmatpush2.msra.mxu0 0.0
  %2178 = vmatprep.subr.mxu0 0.0
  %2179 = vmatpush2.msra.mxu0 0.0
  %2180 = vmatprep.subr.mxu0 0.0
  %2181 = vmatpush2.msra.mxu0 0.0
  %2182 = vmatprep.subr.mxu0 0.0
  %2183 = vmatpush2.msra.mxu0 0.0
  %2184 = vmatprep.subr.mxu0 0.0
  %2185 = vmatpush2.msra.mxu0 0.0
  %2186 = vmatprep.mubr.f32.mxu0 0.0
  %2187 = vmatmul.mubr.f32.gmra.mxu0 %v2117
  %v2188 = vpop.f32.mrf.mxu0
  %v2189 = vadd.f32 0.0, %v2188
  %v2190 = vpop.f32.mrf.mxu0
  %2191 = vmatprep.mubr.f32.mxu0 0.0
  %2192 = vmatmul.mubr.f32.gmra.mxu0 %v2120
  %v2193 = vpop.f32.mrf.mxu0
  %v2194 = vadd.f32 0.0, %v2193
  %v2195 = vpop.f32.mrf.mxu0
  %2196 = vdwg.mxu0
  %2197 = vrot.lane.b32.xlu0 %v1641, 64
  %v2198 = vpop.permute.xlu0 %2197
  %2199 = vrot.lane.b32.xlu0 %v1643, 64
  %v2200 = vpop.permute.xlu0 %2199
  %v2204 = vsel %vm699, %v2104, 0
  %v2207 = vsel %vm699, %v2105, 0
  %2209 = vmatprep.subr.mxu0 0.0
  %2210 = vmatpush1.msra.mxu0 0.0
  %2211 = vmatprep.subr.mxu0 0.0
  %2212 = vmatpush1.msra.mxu0 0.0
  %2213 = vmatprep.subr.mxu0 0.0
  %2214 = vmatpush1.msra.mxu0 0.0
  %2215 = vmatprep.subr.mxu0 0.0
  %2216 = vmatpush1.msra.mxu0 0.0
  %2217 = vmatprep.subr.mxu0 0.0
  %2218 = vmatpush1.msra.mxu0 0.0
  %2219 = vmatprep.subr.mxu0 0.0
  %2220 = vmatpush1.msra.mxu0 0.0
  %2221 = vmatprep.subr.mxu0 0.0
  %2222 = vmatpush1.msra.mxu0 0.0
  %2223 = vmatprep.subr.mxu0 0.0
  %2224 = vmatpush1.msra.mxu0 0.0
  %2225 = vmatprep.subr.mxu0 0.0
  %2226 = vmatpush1.msra.mxu0 0.0
  %2227 = vmatprep.subr.mxu0 0.0
  %2228 = vmatpush1.msra.mxu0 0.0
  %2229 = vmatprep.subr.mxu0 0.0
  %2230 = vmatpush1.msra.mxu0 0.0
  %2231 = vmatprep.subr.mxu0 0.0
  %2232 = vmatpush1.msra.mxu0 0.0
  %2233 = vmatprep.subr.mxu0 0.0
  %2234 = vmatpush1.msra.mxu0 0.0
  %2235 = vmatprep.subr.mxu0 0.0
  %2236 = vmatpush1.msra.mxu0 0.0
  %2237 = vmatprep.subr.mxu0 0.0
  %2238 = vmatpush1.msra.mxu0 %v2200
  %2239 = vmatprep.subr.mxu0 0.0
  %2240 = vmatpush1.msra.mxu0 %v2198
  %2241 = vmatprep.subr.mxu0 0.0
  %2242 = vmatpush2.msra.mxu0 0.0
  %2243 = vmatprep.subr.mxu0 0.0
  %2244 = vmatpush2.msra.mxu0 0.0
  %2245 = vmatprep.subr.mxu0 0.0
  %2246 = vmatpush2.msra.mxu0 0.0
  %2247 = vmatprep.subr.mxu0 0.0
  %2248 = vmatpush2.msra.mxu0 0.0
  %2249 = vmatprep.subr.mxu0 0.0
  %2250 = vmatpush2.msra.mxu0 0.0
  %2251 = vmatprep.subr.mxu0 0.0
  %2252 = vmatpush2.msra.mxu0 0.0
  %2253 = vmatprep.subr.mxu0 0.0
  %2254 = vmatpush2.msra.mxu0 0.0
  %2255 = vmatprep.subr.mxu0 0.0
  %2256 = vmatpush2.msra.mxu0 0.0
  %2257 = vmatprep.subr.mxu0 0.0
  %2258 = vmatpush2.msra.mxu0 0.0
  %2259 = vmatprep.subr.mxu0 0.0
  %2260 = vmatpush2.msra.mxu0 0.0
  %2261 = vmatprep.subr.mxu0 0.0
  %2262 = vmatpush2.msra.mxu0 0.0
  %2263 = vmatprep.subr.mxu0 0.0
  %2264 = vmatpush2.msra.mxu0 0.0
  %2265 = vmatprep.subr.mxu0 0.0
  %2266 = vmatpush2.msra.mxu0 0.0
  %2267 = vmatprep.subr.mxu0 0.0
  %2268 = vmatpush2.msra.mxu0 0.0
  %2269 = vmatprep.subr.mxu0 0.0
  %2270 = vmatpush2.msra.mxu0 0.0
  %2271 = vmatprep.subr.mxu0 0.0
  %2272 = vmatpush2.msra.mxu0 0.0
  %2273 = vmatprep.mubr.f32.mxu0 0.0
  %2274 = vmatmul.mubr.f32.gmra.mxu0 %v2204
  %v2275 = vpop.f32.mrf.mxu0
  %v2276 = vadd.f32 0.0, %v2275
  %v2277 = vpop.f32.mrf.mxu0
  %2278 = vmatprep.mubr.f32.mxu0 0.0
  %2279 = vmatmul.mubr.f32.gmra.mxu0 %v2207
  %v2280 = vpop.f32.mrf.mxu0
  %v2281 = vadd.f32 0.0, %v2280
  %v2282 = vpop.f32.mrf.mxu0
  %2283 = vdwg.mxu0
  %2284 = vrot.lane.b32.xlu0 %v1647, 64
  %v2285 = vpop.permute.xlu0 %2284
  %2286 = vrot.lane.b32.xlu0 %v1649, 64
  %v2287 = vpop.permute.xlu0 %2286
  %v2291 = vsel %vm699, %v2106, 0
  %v2294 = vsel %vm699, %v2107, 0
  %2296 = vmatprep.subr.mxu0 0.0
  %2297 = vmatpush1.msra.mxu0 0.0
  %2298 = vmatprep.subr.mxu0 0.0
  %2299 = vmatpush1.msra.mxu0 0.0
  %2300 = vmatprep.subr.mxu0 0.0
  %2301 = vmatpush1.msra.mxu0 0.0
  %2302 = vmatprep.subr.mxu0 0.0
  %2303 = vmatpush1.msra.mxu0 0.0
  %2304 = vmatprep.subr.mxu0 0.0
  %2305 = vmatpush1.msra.mxu0 0.0
  %2306 = vmatprep.subr.mxu0 0.0
  %2307 = vmatpush1.msra.mxu0 0.0
  %2308 = vmatprep.subr.mxu0 0.0
  %2309 = vmatpush1.msra.mxu0 0.0
  %2310 = vmatprep.subr.mxu0 0.0
  %2311 = vmatpush1.msra.mxu0 0.0
  %2312 = vmatprep.subr.mxu0 0.0
  %2313 = vmatpush1.msra.mxu0 0.0
  %2314 = vmatprep.subr.mxu0 0.0
  %2315 = vmatpush1.msra.mxu0 0.0
  %2316 = vmatprep.subr.mxu0 0.0
  %2317 = vmatpush1.msra.mxu0 0.0
  %2318 = vmatprep.subr.mxu0 0.0
  %2319 = vmatpush1.msra.mxu0 0.0
  %2320 = vmatprep.subr.mxu0 0.0
  %2321 = vmatpush1.msra.mxu0 0.0
  %2322 = vmatprep.subr.mxu0 0.0
  %2323 = vmatpush1.msra.mxu0 0.0
  %2324 = vmatprep.subr.mxu0 0.0
  %2325 = vmatpush1.msra.mxu0 %v2287
  %2326 = vmatprep.subr.mxu0 0.0
  %2327 = vmatpush1.msra.mxu0 %v2285
  %2328 = vmatprep.subr.mxu0 0.0
  %2329 = vmatpush2.msra.mxu0 0.0
  %2330 = vmatprep.subr.mxu0 0.0
  %2331 = vmatpush2.msra.mxu0 0.0
  %2332 = vmatprep.subr.mxu0 0.0
  %2333 = vmatpush2.msra.mxu0 0.0
  %2334 = vmatprep.subr.mxu0 0.0
  %2335 = vmatpush2.msra.mxu0 0.0
  %2336 = vmatprep.subr.mxu0 0.0
  %2337 = vmatpush2.msra.mxu0 0.0
  %2338 = vmatprep.subr.mxu0 0.0
  %2339 = vmatpush2.msra.mxu0 0.0
  %2340 = vmatprep.subr.mxu0 0.0
  %2341 = vmatpush2.msra.mxu0 0.0
  %2342 = vmatprep.subr.mxu0 0.0
  %2343 = vmatpush2.msra.mxu0 0.0
  %2344 = vmatprep.subr.mxu0 0.0
  %2345 = vmatpush2.msra.mxu0 0.0
  %2346 = vmatprep.subr.mxu0 0.0
  %2347 = vmatpush2.msra.mxu0 0.0
  %2348 = vmatprep.subr.mxu0 0.0
  %2349 = vmatpush2.msra.mxu0 0.0
  %2350 = vmatprep.subr.mxu0 0.0
  %2351 = vmatpush2.msra.mxu0 0.0
  %2352 = vmatprep.subr.mxu0 0.0
  %2353 = vmatpush2.msra.mxu0 0.0
  %2354 = vmatprep.subr.mxu0 0.0
  %2355 = vmatpush2.msra.mxu0 0.0
  %2356 = vmatprep.subr.mxu0 0.0
  %2357 = vmatpush2.msra.mxu0 0.0
  %2358 = vmatprep.subr.mxu0 0.0
  %2359 = vmatpush2.msra.mxu0 0.0
  %2360 = vmatprep.mubr.f32.mxu0 0.0
  %2361 = vmatmul.mubr.f32.gmra.mxu0 %v2291
  %v2362 = vpop.f32.mrf.mxu0
  %v2363 = vadd.f32 0.0, %v2362
  %v2364 = vpop.f32.mrf.mxu0
  %2365 = vmatprep.mubr.f32.mxu0 0.0
  %2366 = vmatmul.mubr.f32.gmra.mxu0 %v2294
  %v2367 = vpop.f32.mrf.mxu0
  %v2368 = vadd.f32 0.0, %v2367
  %v2369 = vpop.f32.mrf.mxu0
  %2370 = vdwg.mxu0
  %2371 = vrot.lane.b32.xlu0 %v1653, 64
  %v2372 = vpop.permute.xlu0 %2371
  %2373 = vrot.lane.b32.xlu0 %v1655, 64
  %v2374 = vpop.permute.xlu0 %2373
  %v2378 = vsel %vm699, %v2108, 0
  %v2381 = vsel %vm699, %v2109, 0
  %2383 = vmatprep.subr.mxu0 0.0
  %2384 = vmatpush1.msra.mxu0 0.0
  %2385 = vmatprep.subr.mxu0 0.0
  %2386 = vmatpush1.msra.mxu0 0.0
  %2387 = vmatprep.subr.mxu0 0.0
  %2388 = vmatpush1.msra.mxu0 0.0
  %2389 = vmatprep.subr.mxu0 0.0
  %2390 = vmatpush1.msra.mxu0 0.0
  %2391 = vmatprep.subr.mxu0 0.0
  %2392 = vmatpush1.msra.mxu0 0.0
  %2393 = vmatprep.subr.mxu0 0.0
  %2394 = vmatpush1.msra.mxu0 0.0
  %2395 = vmatprep.subr.mxu0 0.0
  %2396 = vmatpush1.msra.mxu0 0.0
  %2397 = vmatprep.subr.mxu0 0.0
  %2398 = vmatpush1.msra.mxu0 0.0
  %2399 = vmatprep.subr.mxu0 0.0
  %2400 = vmatpush1.msra.mxu0 0.0
  %2401 = vmatprep.subr.mxu0 0.0
  %2402 = vmatpush1.msra.mxu0 0.0
  %2403 = vmatprep.subr.mxu0 0.0
  %2404 = vmatpush1.msra.mxu0 0.0
  %2405 = vmatprep.subr.mxu0 0.0
  %2406 = vmatpush1.msra.mxu0 0.0
  %2407 = vmatprep.subr.mxu0 0.0
  %2408 = vmatpush1.msra.mxu0 0.0
  %2409 = vmatprep.subr.mxu0 0.0
  %2410 = vmatpush1.msra.mxu0 0.0
  %2411 = vmatprep.subr.mxu0 0.0
  %2412 = vmatpush1.msra.mxu0 %v2374
  %2413 = vmatprep.subr.mxu0 0.0
  %2414 = vmatpush1.msra.mxu0 %v2372
  %2415 = vmatprep.subr.mxu0 0.0
  %2416 = vmatpush2.msra.mxu0 0.0
  %2417 = vmatprep.subr.mxu0 0.0
  %2418 = vmatpush2.msra.mxu0 0.0
  %2419 = vmatprep.subr.mxu0 0.0
  %2420 = vmatpush2.msra.mxu0 0.0
  %2421 = vmatprep.subr.mxu0 0.0
  %2422 = vmatpush2.msra.mxu0 0.0
  %2423 = vmatprep.subr.mxu0 0.0
  %2424 = vmatpush2.msra.mxu0 0.0
  %2425 = vmatprep.subr.mxu0 0.0
  %2426 = vmatpush2.msra.mxu0 0.0
  %2427 = vmatprep.subr.mxu0 0.0
  %2428 = vmatpush2.msra.mxu0 0.0
  %2429 = vmatprep.subr.mxu0 0.0
  %2430 = vmatpush2.msra.mxu0 0.0
  %2431 = vmatprep.subr.mxu0 0.0
  %2432 = vmatpush2.msra.mxu0 0.0
  %2433 = vmatprep.subr.mxu0 0.0
  %2434 = vmatpush2.msra.mxu0 0.0
  %2435 = vmatprep.subr.mxu0 0.0
  %2436 = vmatpush2.msra.mxu0 0.0
  %2437 = vmatprep.subr.mxu0 0.0
  %2438 = vmatpush2.msra.mxu0 0.0
  %2439 = vmatprep.subr.mxu0 0.0
  %2440 = vmatpush2.msra.mxu0 0.0
  %2441 = vmatprep.subr.mxu0 0.0
  %2442 = vmatpush2.msra.mxu0 0.0
  %2443 = vmatprep.subr.mxu0 0.0
  %2444 = vmatpush2.msra.mxu0 0.0
  %2445 = vmatprep.subr.mxu0 0.0
  %2446 = vmatpush2.msra.mxu0 0.0
  %2447 = vmatprep.mubr.f32.mxu0 0.0
  %2448 = vmatmul.mubr.f32.gmra.mxu0 %v2378
  %v2449 = vpop.f32.mrf.mxu0
  %v2450 = vadd.f32 0.0, %v2449
  %v2451 = vpop.f32.mrf.mxu0
  %2452 = vmatprep.mubr.f32.mxu0 0.0
  %2453 = vmatmul.mubr.f32.gmra.mxu0 %v2381
  %v2454 = vpop.f32.mrf.mxu0
  %v2455 = vadd.f32 0.0, %v2454
  %v2456 = vpop.f32.mrf.mxu0
  %2457 = vdwg.mxu0
  %2460 = vrot.lane.b32.xlu0 %v2276, 8
  %v2461 = vpop.permute.xlu0 %2460
  %2462 = vrot.lane.b32.xlu0 %v2281, 8
  %v2463 = vpop.permute.xlu0 %2462
  %2468 = vrot.lane.b32.xlu0 %v2363, 16
  %v2469 = vpop.permute.xlu0 %2468
  %2470 = vrot.lane.b32.xlu0 %v2368, 16
  %v2471 = vpop.permute.xlu0 %2470
  %2476 = vrot.lane.b32.xlu0 %v2450, 24
  %v2477 = vpop.permute.xlu0 %2476
  %2478 = vrot.lane.b32.xlu0 %v2455, 24
  %v2479 = vpop.permute.xlu0 %2478
  %v2482 = vsel %vm346, %v2189, %v2461
  %v2483 = vsel %vm346, %v2194, %v2463
  %v2484 = vsel %vm699, %v2482, %v2469
  %v2485 = vsel %vm699, %v2483, %v2471
  %v2486 = vsel %vm1164, %v2484, %v2477
  %v2487 = vsel %vm1164, %v2485, %v2479
  %s2488 = scalar_lea.vmem %s9, 32
  %v2489 = vld [vmem:[%s2488] sm:$0xff]
  %v2490 = vld [vmem:[%s2488 + $0x8] sm:$0xff]
  %v2491 = vld [vmem:[%s2488 + $0x10] sm:$0xff]
  %v2492 = vld [vmem:[%s2488 + $0x18] sm:$0xff]
  %v2494 = vsel %vm184, %v2486, 0
  %v2497 = vsel %vm184, %v2487, 0
  %2499 = vmatprep.subr.mxu0 0.0
  %2500 = vmatpush1.msra.mxu0 0.0
  %2501 = vmatprep.subr.mxu0 0.0
  %2502 = vmatpush1.msra.mxu0 0.0
  %2503 = vmatprep.subr.mxu0 0.0
  %2504 = vmatpush1.msra.mxu0 0.0
  %2505 = vmatprep.subr.mxu0 0.0
  %2506 = vmatpush1.msra.mxu0 0.0
  %2507 = vmatprep.subr.mxu0 0.0
  %2508 = vmatpush1.msra.mxu0 0.0
  %2509 = vmatprep.subr.mxu0 0.0
  %2510 = vmatpush1.msra.mxu0 0.0
  %2511 = vmatprep.subr.mxu0 0.0
  %2512 = vmatpush1.msra.mxu0 0.0
  %2513 = vmatprep.subr.mxu0 0.0
  %2514 = vmatpush1.msra.mxu0 0.0
  %2515 = vmatprep.subr.mxu0 0.0
  %2516 = vmatpush1.msra.mxu0 0.0
  %2517 = vmatprep.subr.mxu0 0.0
  %2518 = vmatpush1.msra.mxu0 0.0
  %2519 = vmatprep.subr.mxu0 0.0
  %2520 = vmatpush1.msra.mxu0 0.0
  %2521 = vmatprep.subr.mxu0 0.0
  %2522 = vmatpush1.msra.mxu0 0.0
  %2523 = vmatprep.subr.mxu0 0.0
  %2524 = vmatpush1.msra.mxu0 %v2492
  %2525 = vmatprep.subr.mxu0 0.0
  %2526 = vmatpush1.msra.mxu0 %v2491
  %2527 = vmatprep.subr.mxu0 0.0
  %2528 = vmatpush1.msra.mxu0 %v2490
  %2529 = vmatprep.subr.mxu0 0.0
  %2530 = vmatpush1.msra.mxu0 %v2489
  %2531 = vmatprep.subr.mxu0 0.0
  %2532 = vmatpush2.msra.mxu0 0.0
  %2533 = vmatprep.subr.mxu0 0.0
  %2534 = vmatpush2.msra.mxu0 0.0
  %2535 = vmatprep.subr.mxu0 0.0
  %2536 = vmatpush2.msra.mxu0 0.0
  %2537 = vmatprep.subr.mxu0 0.0
  %2538 = vmatpush2.msra.mxu0 0.0
  %2539 = vmatprep.subr.mxu0 0.0
  %2540 = vmatpush2.msra.mxu0 0.0
  %2541 = vmatprep.subr.mxu0 0.0
  %2542 = vmatpush2.msra.mxu0 0.0
  %2543 = vmatprep.subr.mxu0 0.0
  %2544 = vmatpush2.msra.mxu0 0.0
  %2545 = vmatprep.subr.mxu0 0.0
  %2546 = vmatpush2.msra.mxu0 0.0
  %2547 = vmatprep.subr.mxu0 0.0
  %2548 = vmatpush2.msra.mxu0 0.0
  %2549 = vmatprep.subr.mxu0 0.0
  %2550 = vmatpush2.msra.mxu0 0.0
  %2551 = vmatprep.subr.mxu0 0.0
  %2552 = vmatpush2.msra.mxu0 0.0
  %2553 = vmatprep.subr.mxu0 0.0
  %2554 = vmatpush2.msra.mxu0 0.0
  %2555 = vmatprep.subr.mxu0 0.0
  %2556 = vmatpush2.msra.mxu0 0.0
  %2557 = vmatprep.subr.mxu0 0.0
  %2558 = vmatpush2.msra.mxu0 0.0
  %2559 = vmatprep.subr.mxu0 0.0
  %2560 = vmatpush2.msra.mxu0 0.0
  %2561 = vmatprep.subr.mxu0 0.0
  %2562 = vmatpush2.msra.mxu0 0.0
  %2563 = vmatprep.mubr.f32.mxu0 0.0
  %2564 = vmatmul.mubr.f32.gmra.mxu0 %v2494
  %v2565 = vpop.f32.mrf.mxu0
  %v2566 = vadd.f32 0.0, %v2565
  %v2567 = vpop.f32.mrf.mxu0
  %2568 = vmatprep.mubr.f32.mxu0 0.0
  %2569 = vmatmul.mubr.f32.gmra.mxu0 %v2497
  %v2570 = vpop.f32.mrf.mxu0
  %v2571 = vadd.f32 0.0, %v2570
  %v2572 = vpop.f32.mrf.mxu0
  %2573 = vdwg.mxu0
  %v2574 = vadd.f32 %v1505, %v2566
  %v2575 = vadd.f32 %v1506, %v2571
  %v2576 = vld [vmem:[%s10 + $0x1] sm:$0x1]
  %v2577 = vlaneseq
  %v2578 = vshrl.u32 %v2577, 7
  %v2579 = vsub.s32 0, %v2578
  %v2580 = vrot.slane %v2576, %v2579
  %v2581 = vadd.f32 %v2574, %v2580
  %v2582 = vadd.f32 %v2575, %v2580
  %v2583 = vld [vmem:[%s11 + $0x1] sm:$0x1]
  %v2584 = vld [vmem:[%s12 + $0x1] sm:$0x1]
  %v2585 = vsel %vm184, %v2581, 0.0
  %2586 = vadd.xlane.f32.xlu0 %v2585
  %v2587 = vpop.xlane.xlu0 %2586
  %v2588 = vsel %vm184, %v2582, 0.0
  %2589 = vadd.xlane.f32.xlu0 %v2588
  %v2590 = vpop.xlane.xlu0 %2589
  %v2591 = vmul.f32 %v2587, %v191
  %v2592 = vmul.f32 %v2590, %v191
  %v2593 = vsub.f32 %v2581, %v2591
  %v2594 = vsub.f32 %v2582, %v2592
  %v2595 = vmul.f32 %v2593, %v2593
  %v2596 = vmul.f32 %v2594, %v2594
  %v2597 = vsel %vm184, %v2595, 0.0
  %2598 = vadd.xlane.f32.xlu0 %v2597
  %v2599 = vpop.xlane.xlu0 %2598
  %v2600 = vsel %vm184, %v2596, 0.0
  %2601 = vadd.xlane.f32.xlu0 %v2600
  %v2602 = vpop.xlane.xlu0 %2601
  %v2603 = vmul.f32 %v2599, %v191
  %v2604 = vmul.f32 %v2602, %v191
  %v2605 = vadd.f32 %v2603, 1e-05
  %v2606 = vadd.f32 %v2604, 1e-05
  %v2607 = vrsqrt.pop %v2605
  %v2608 = vrsqrt.pop %v2606
  %v2609 = vmul.f32 %v2593, %v2607
  %v2610 = vmul.f32 %v2594, %v2608
  %v2611 = vlaneseq
  %v2612 = vshrl.u32 %v2611, 7
  %v2613 = vsub.s32 0, %v2612
  %v2614 = vrot.slane %v2583, %v2613
  %v2615 = vmul.f32 %v2609, %v2614
  %v2616 = vmul.f32 %v2610, %v2614
  %v2617 = vlaneseq
  %v2618 = vshrl.u32 %v2617, 7
  %v2619 = vsub.s32 0, %v2618
  %v2620 = vrot.slane %v2584, %v2619
  %v2621 = vadd.f32 %v2615, %v2620
  %v2622 = vadd.f32 %v2616, %v2620
  %s2623 = scalar_lea.vmem %s13, 32
  %v2624 = vld [vmem:[%s2623] sm:$0xff]
  %v2625 = vld [vmem:[%s2623 + $0x8] sm:$0xff]
  %v2626 = vld [vmem:[%s2623 + $0x10] sm:$0xff]
  %v2627 = vld [vmem:[%s2623 + $0x18] sm:$0xff]
  %v2628 = vld [vmem:[%s14 + $0x1] sm:$0x1]
  %v2629 = vlaneseq
  %v2630 = vshrl.u32 %v2629, 7
  %v2631 = vsub.s32 0, %v2630
  %v2632 = vrot.slane %v2628, %v2631
  %v2634 = vsel %vm184, %v2621, 0
  %v2637 = vsel %vm184, %v2622, 0
  %2639 = vmatprep.subr.mxu0 0.0
  %2640 = vmatpush1.msra.mxu0 0.0
  %2641 = vmatprep.subr.mxu0 0.0
  %2642 = vmatpush1.msra.mxu0 0.0
  %2643 = vmatprep.subr.mxu0 0.0
  %2644 = vmatpush1.msra.mxu0 0.0
  %2645 = vmatprep.subr.mxu0 0.0
  %2646 = vmatpush1.msra.mxu0 0.0
  %2647 = vmatprep.subr.mxu0 0.0
  %2648 = vmatpush1.msra.mxu0 0.0
  %2649 = vmatprep.subr.mxu0 0.0
  %2650 = vmatpush1.msra.mxu0 0.0
  %2651 = vmatprep.subr.mxu0 0.0
  %2652 = vmatpush1.msra.mxu0 0.0
  %2653 = vmatprep.subr.mxu0 0.0
  %2654 = vmatpush1.msra.mxu0 0.0
  %2655 = vmatprep.subr.mxu0 0.0
  %2656 = vmatpush1.msra.mxu0 0.0
  %2657 = vmatprep.subr.mxu0 0.0
  %2658 = vmatpush1.msra.mxu0 0.0
  %2659 = vmatprep.subr.mxu0 0.0
  %2660 = vmatpush1.msra.mxu0 0.0
  %2661 = vmatprep.subr.mxu0 0.0
  %2662 = vmatpush1.msra.mxu0 0.0
  %2663 = vmatprep.subr.mxu0 0.0
  %2664 = vmatpush1.msra.mxu0 %v2627
  %2665 = vmatprep.subr.mxu0 0.0
  %2666 = vmatpush1.msra.mxu0 %v2626
  %2667 = vmatprep.subr.mxu0 0.0
  %2668 = vmatpush1.msra.mxu0 %v2625
  %2669 = vmatprep.subr.mxu0 0.0
  %2670 = vmatpush1.msra.mxu0 %v2624
  %2671 = vmatprep.subr.mxu0 0.0
  %2672 = vmatpush2.msra.mxu0 0.0
  %2673 = vmatprep.subr.mxu0 0.0
  %2674 = vmatpush2.msra.mxu0 0.0
  %2675 = vmatprep.subr.mxu0 0.0
  %2676 = vmatpush2.msra.mxu0 0.0
  %2677 = vmatprep.subr.mxu0 0.0
  %2678 = vmatpush2.msra.mxu0 0.0
  %2679 = vmatprep.subr.mxu0 0.0
  %2680 = vmatpush2.msra.mxu0 0.0
  %2681 = vmatprep.subr.mxu0 0.0
  %2682 = vmatpush2.msra.mxu0 0.0
  %2683 = vmatprep.subr.mxu0 0.0
  %2684 = vmatpush2.msra.mxu0 0.0
  %2685 = vmatprep.subr.mxu0 0.0
  %2686 = vmatpush2.msra.mxu0 0.0
  %2687 = vmatprep.subr.mxu0 0.0
  %2688 = vmatpush2.msra.mxu0 0.0
  %2689 = vmatprep.subr.mxu0 0.0
  %2690 = vmatpush2.msra.mxu0 0.0
  %2691 = vmatprep.subr.mxu0 0.0
  %2692 = vmatpush2.msra.mxu0 0.0
  %2693 = vmatprep.subr.mxu0 0.0
  %2694 = vmatpush2.msra.mxu0 0.0
  %2695 = vmatprep.subr.mxu0 0.0
  %2696 = vmatpush2.msra.mxu0 0.0
  %2697 = vmatprep.subr.mxu0 0.0
  %2698 = vmatpush2.msra.mxu0 0.0
  %2699 = vmatprep.subr.mxu0 0.0
  %2700 = vmatpush2.msra.mxu0 0.0
  %2701 = vmatprep.subr.mxu0 0.0
  %2702 = vmatpush2.msra.mxu0 0.0
  %2703 = vmatprep.mubr.f32.mxu0 0.0
  %2704 = vmatmul.mubr.f32.gmra.mxu0 %v2634
  %v2705 = vpop.f32.mrf.mxu0
  %v2706 = vadd.f32 %v2632, %v2705
  %v2707 = vpop.f32.mrf.mxu0
  %2708 = vmatprep.mubr.f32.mxu0 0.0
  %2709 = vmatmul.mubr.f32.gmra.mxu0 %v2637
  %v2710 = vpop.f32.mrf.mxu0
  %v2711 = vadd.f32 %v2632, %v2710
  %v2712 = vpop.f32.mrf.mxu0
  %2713 = vdwg.mxu0
  %v2714 = vmul.f32 %v2706, 0.5
  %v2715 = vmul.f32 %v2711, 0.5
  %v2716 = vmul.f32 %v2706, 0.044715
  %v2717 = vmul.f32 %v2711, 0.044715
  %v2718 = vmul.f32 %v2716, %v2706
  %v2719 = vmul.f32 %v2717, %v2711
  %v2720 = vmul.f32 %v2718, %v2706
  %v2721 = vmul.f32 %v2719, %v2711
  %v2722 = vadd.f32 %v2706, %v2720
  %v2723 = vadd.f32 %v2711, %v2721
  %v2724 = vmul.f32 %v2722, 0.7978845
  %v2725 = vmul.f32 %v2723, 0.7978845
  %v2726 = vtanh.pop %v2724
  %v2727 = vtanh.pop %v2725
  %v2728 = vadd.f32 %v2726, 1.0
  %v2729 = vadd.f32 %v2727, 1.0
  %v2730 = vmul.f32 %v2714, %v2728
  %v2731 = vmul.f32 %v2715, %v2729
  %s2732 = scalar_lea.vmem %s15, 128
  %v2733 = vld [vmem:[%s2732] sm:$0xff]
  %v2734 = vld [vmem:[%s2732 + $0x8] sm:$0xff]
  %v2735 = vld [vmem:[%s2732 + $0x10] sm:$0xff]
  %v2736 = vld [vmem:[%s2732 + $0x18] sm:$0xff]
  %v2737 = vld [vmem:[%s2732 + $0x20] sm:$0xff]
  %v2738 = vld [vmem:[%s2732 + $0x28] sm:$0xff]
  %v2739 = vld [vmem:[%s2732 + $0x30] sm:$0xff]
  %v2740 = vld [vmem:[%s2732 + $0x38] sm:$0xff]
  %v2741 = vld [vmem:[%s2732 + $0x40] sm:$0xff]
  %v2742 = vld [vmem:[%s2732 + $0x48] sm:$0xff]
  %v2743 = vld [vmem:[%s2732 + $0x50] sm:$0xff]
  %v2744 = vld [vmem:[%s2732 + $0x58] sm:$0xff]
  %v2745 = vld [vmem:[%s2732 + $0x60] sm:$0xff]
  %v2746 = vld [vmem:[%s2732 + $0x68] sm:$0xff]
  %v2747 = vld [vmem:[%s2732 + $0x70] sm:$0xff]
  %v2748 = vld [vmem:[%s2732 + $0x78] sm:$0xff]
  %v2749 = vld [vmem:[%s16 + $0x1] sm:$0x1]
  %v2750 = vlaneseq
  %v2751 = vshrl.u32 %v2750, 7
  %v2752 = vsub.s32 0, %v2751
  %v2753 = vrot.slane %v2749, %v2752
  %2754 = vmatprep.subr.mxu0 0.0
  %2755 = vmatpush1.msra.mxu0 %v2748
  %2756 = vmatprep.subr.mxu0 0.0
  %2757 = vmatpush1.msra.mxu0 %v2747
  %2758 = vmatprep.subr.mxu0 0.0
  %2759 = vmatpush1.msra.mxu0 %v2746
  %2760 = vmatprep.subr.mxu0 0.0
  %2761 = vmatpush1.msra.mxu0 %v2745
  %2762 = vmatprep.subr.mxu0 0.0
  %2763 = vmatpush1.msra.mxu0 %v2744
  %2764 = vmatprep.subr.mxu0 0.0
  %2765 = vmatpush1.msra.mxu0 %v2743
  %2766 = vmatprep.subr.mxu0 0.0
  %2767 = vmatpush1.msra.mxu0 %v2742
  %2768 = vmatprep.subr.mxu0 0.0
  %2769 = vmatpush1.msra.mxu0 %v2741
  %2770 = vmatprep.subr.mxu0 0.0
  %2771 = vmatpush1.msra.mxu0 %v2740
  %2772 = vmatprep.subr.mxu0 0.0
  %2773 = vmatpush1.msra.mxu0 %v2739
  %2774 = vmatprep.subr.mxu0 0.0
  %2775 = vmatpush1.msra.mxu0 %v2738
  %2776 = vmatprep.subr.mxu0 0.0
  %2777 = vmatpush1.msra.mxu0 %v2737
  %2778 = vmatprep.subr.mxu0 0.0
  %2779 = vmatpush1.msra.mxu0 %v2736
  %2780 = vmatprep.subr.mxu0 0.0
  %2781 = vmatpush1.msra.mxu0 %v2735
  %2782 = vmatprep.subr.mxu0 0.0
  %2783 = vmatpush1.msra.mxu0 %v2734
  %2784 = vmatprep.subr.mxu0 0.0
  %2785 = vmatpush1.msra.mxu0 %v2733
  %2786 = vmatprep.subr.mxu0 0.0
  %2787 = vmatpush2.msra.mxu0 0.0
  %2788 = vmatprep.subr.mxu0 0.0
  %2789 = vmatpush2.msra.mxu0 0.0
  %2790 = vmatprep.subr.mxu0 0.0
  %2791 = vmatpush2.msra.mxu0 0.0
  %2792 = vmatprep.subr.mxu0 0.0
  %2793 = vmatpush2.msra.mxu0 0.0
  %2794 = vmatprep.subr.mxu0 0.0
  %2795 = vmatpush2.msra.mxu0 0.0
  %2796 = vmatprep.subr.mxu0 0.0
  %2797 = vmatpush2.msra.mxu0 0.0
  %2798 = vmatprep.subr.mxu0 0.0
  %2799 = vmatpush2.msra.mxu0 0.0
  %2800 = vmatprep.subr.mxu0 0.0
  %2801 = vmatpush2.msra.mxu0 0.0
  %2802 = vmatprep.subr.mxu0 0.0
  %2803 = vmatpush2.msra.mxu0 0.0
  %2804 = vmatprep.subr.mxu0 0.0
  %2805 = vmatpush2.msra.mxu0 0.0
  %2806 = vmatprep.subr.mxu0 0.0
  %2807 = vmatpush2.msra.mxu0 0.0
  %2808 = vmatprep.subr.mxu0 0.0
  %2809 = vmatpush2.msra.mxu0 0.0
  %2810 = vmatprep.subr.mxu0 0.0
  %2811 = vmatpush2.msra.mxu0 0.0
  %2812 = vmatprep.subr.mxu0 0.0
  %2813 = vmatpush2.msra.mxu0 0.0
  %2814 = vmatprep.subr.mxu0 0.0
  %2815 = vmatpush2.msra.mxu0 0.0
  %2816 = vmatprep.subr.mxu0 0.0
  %2817 = vmatpush2.msra.mxu0 0.0
  %2818 = vmatprep.mubr.f32.mxu0 0.0
  %2819 = vmatmul.mubr.f32.gmra.mxu0 %v2730
  %v2820 = vpop.f32.mrf.mxu0
  %v2821 = vadd.f32 %v2753, %v2820
  %v2822 = vpop.f32.mrf.mxu0
  %2823 = vmatprep.mubr.f32.mxu0 0.0
  %2824 = vmatmul.mubr.f32.gmra.mxu0 %v2731
  %v2825 = vpop.f32.mrf.mxu0
  %v2826 = vadd.f32 %v2753, %v2825
  %v2827 = vpop.f32.mrf.mxu0
  %2828 = vdwg.mxu0
  %v2829 = vadd.f32 %v2581, %v2821
  %v2830 = vadd.f32 %v2582, %v2826
  %v2831 = vld [vmem:[%s17] sm:$0x1]
  %v2832 = vld [vmem:[%s18] sm:$0x1]
  %v2833 = vsel %vm184, %v2829, 0.0
  %2834 = vadd.xlane.f32.xlu0 %v2833
  %v2835 = vpop.xlane.xlu0 %2834
  %v2836 = vsel %vm184, %v2830, 0.0
  %2837 = vadd.xlane.f32.xlu0 %v2836
  %v2838 = vpop.xlane.xlu0 %2837
  %v2839 = vmul.f32 %v2835, %v191
  %v2840 = vmul.f32 %v2838, %v191
  %v2841 = vsub.f32 %v2829, %v2839
  %v2842 = vsub.f32 %v2830, %v2840
  %v2843 = vmul.f32 %v2841, %v2841
  %v2844 = vmul.f32 %v2842, %v2842
  %v2845 = vsel %vm184, %v2843, 0.0
  %2846 = vadd.xlane.f32.xlu0 %v2845
  %v2847 = vpop.xlane.xlu0 %2846
  %v2848 = vsel %vm184, %v2844, 0.0
  %2849 = vadd.xlane.f32.xlu0 %v2848
  %v2850 = vpop.xlane.xlu0 %2849
  %v2851 = vmul.f32 %v2847, %v191
  %v2852 = vmul.f32 %v2850, %v191
  %v2853 = vadd.f32 %v2851, 1e-05
  %v2854 = vadd.f32 %v2852, 1e-05
  %v2855 = vrsqrt.pop %v2853
  %v2856 = vrsqrt.pop %v2854
  %v2857 = vmul.f32 %v2841, %v2855
  %v2858 = vmul.f32 %v2842, %v2856
  %v2860 = vlaneseq
  %v2861 = vshrl.u32 %v2860, 7
  %v2862 = vsub.s32 0, %v2861
  %v2863 = vrot.slane %v2831, %v2862
  %v2865 = vmul.f32 %v2857, %v2863
  %v2866 = vmul.f32 %v2858, %v2863
  %v2868 = vlaneseq
  %v2869 = vshrl.u32 %v2868, 7
  %v2870 = vsub.s32 0, %v2869
  %v2871 = vrot.slane %v2832, %v2870
  %v2873 = vadd.f32 %v2865, %v2871
  %v2874 = vadd.f32 %v2866, %v2871
  %v2875 = vld [vmem:[%s1] sm:$0x3]
  %vm2876 = vcmask 58368
  %v2877 = vsel %vm2876, %v2875, 2147483648
  %v2878 = vand.u32 %v2877, 65535
  %v2879 = vshra.s32 %v2877, 16
  %v2880 = vcvt.s32.f32 %v2878
  %v2881 = vcvt.s32.f32 %v2879
  %2882 = vmax.xlane.f32.xlu0 %v2881
  %v2883 = vpop.xlane.xlu0 %2882
  %vm2884 = vcmp.eq.f32.partialorder %v2881, %v2883
  %v2885 = vsel %vm2884, %v2880, -inf
  %2886 = vmax.xlane.f32.xlu0 %v2885
  %v2887 = vpop.xlane.xlu0 %2886
  %v2888 = vcvt.f32.s32 %v2887
  %v2889 = vcvt.f32.s32 %v2883
  %v2890 = vshll.u32 %v2889, 16
  %v2891 = vadd.s32 %v2890, %v2888
  %vm2892 = vcmp.eq.s32.totalorder %v2875, %v2891
  %v2893 = vsel %vm2892, %v74, 8
  %v2894 = vsel %vm2876, %v2893, 2147483647
  %v2895 = vand.u32 %v2894, 65535
  %v2896 = vshra.s32 %v2894, 16
  %v2897 = vcvt.s32.f32 %v2895
  %v2898 = vcvt.s32.f32 %v2896
  %2899 = vmin.xlane.f32.xlu0 %v2898
  %v2900 = vpop.xlane.xlu0 %2899
  %vm2901 = vcmp.eq.f32.partialorder %v2898, %v2900
  %v2902 = vsel %vm2901, %v2897, inf
  %2903 = vmin.xlane.f32.xlu0 %v2902
  %v2904 = vpop.xlane.xlu0 %2903
  %v2905 = vcvt.f32.s32 %v2904
  %v2906 = vcvt.f32.s32 %v2900
  %v2907 = vshll.u32 %v2906, 16
  %v2908 = vadd.s32 %v2907, %v2905
  %v2909 = vlaneseq
  %v2910 = vshrl.u32 %v2909, 7
  %v2911 = vmul.u32 %v2910, 8
  %v2912 = vadd.s32 %v2908, %v2911
  %vm2913 = vcmp.eq.s32.totalorder %v74, %v2912
  %v2914 = vsel %vm2913, 1, 0
  %v2915 = vcvt.s32.f32 %v2914
  %v2917 = vsel %vm699, %v2915, 0
  %2919 = vmatprep.subr.mxu0 0.0
  %2920 = vmatpush1.msra.mxu0 0.0
  %2921 = vmatprep.subr.mxu0 0.0
  %2922 = vmatpush1.msra.mxu0 0.0
  %2923 = vmatprep.subr.mxu0 0.0
  %2924 = vmatpush1.msra.mxu0 0.0
  %2925 = vmatprep.subr.mxu0 0.0
  %2926 = vmatpush1.msra.mxu0 0.0
  %2927 = vmatprep.subr.mxu0 0.0
  %2928 = vmatpush1.msra.mxu0 0.0
  %2929 = vmatprep.subr.mxu0 0.0
  %2930 = vmatpush1.msra.mxu0 0.0
  %2931 = vmatprep.subr.mxu0 0.0
  %2932 = vmatpush1.msra.mxu0 0.0
  %2933 = vmatprep.subr.mxu0 0.0
  %2934 = vmatpush1.msra.mxu0 0.0
  %2935 = vmatprep.subr.mxu0 0.0
  %2936 = vmatpush1.msra.mxu0 0.0
  %2937 = vmatprep.subr.mxu0 0.0
  %2938 = vmatpush1.msra.mxu0 0.0
  %2939 = vmatprep.subr.mxu0 0.0
  %2940 = vmatpush1.msra.mxu0 0.0
  %2941 = vmatprep.subr.mxu0 0.0
  %2942 = vmatpush1.msra.mxu0 0.0
  %2943 = vmatprep.subr.mxu0 0.0
  %2944 = vmatpush1.msra.mxu0 0.0
  %2945 = vmatprep.subr.mxu0 0.0
  %2946 = vmatpush1.msra.mxu0 0.0
  %2947 = vmatprep.subr.mxu0 0.0
  %2948 = vmatpush1.msra.mxu0 %v2874
  %2949 = vmatprep.subr.mxu0 0.0
  %2950 = vmatpush1.msra.mxu0 %v2873
  %2951 = vmatprep.subr.mxu0 0.0
  %2952 = vmatpush2.msra.mxu0 0.0
  %2953 = vmatprep.subr.mxu0 0.0
  %2954 = vmatpush2.msra.mxu0 0.0
  %2955 = vmatprep.subr.mxu0 0.0
  %2956 = vmatpush2.msra.mxu0 0.0
  %2957 = vmatprep.subr.mxu0 0.0
  %2958 = vmatpush2.msra.mxu0 0.0
  %2959 = vmatprep.subr.mxu0 0.0
  %2960 = vmatpush2.msra.mxu0 0.0
  %2961 = vmatprep.subr.mxu0 0.0
  %2962 = vmatpush2.msra.mxu0 0.0
  %2963 = vmatprep.subr.mxu0 0.0
  %2964 = vmatpush2.msra.mxu0 0.0
  %2965 = vmatprep.subr.mxu0 0.0
  %2966 = vmatpush2.msra.mxu0 0.0
  %2967 = vmatprep.subr.mxu0 0.0
  %2968 = vmatpush2.msra.mxu0 0.0
  %2969 = vmatprep.subr.mxu0 0.0
  %2970 = vmatpush2.msra.mxu0 0.0
  %2971 = vmatprep.subr.mxu0 0.0
  %2972 = vmatpush2.msra.mxu0 0.0
  %2973 = vmatprep.subr.mxu0 0.0
  %2974 = vmatpush2.msra.mxu0 0.0
  %2975 = vmatprep.subr.mxu0 0.0
  %2976 = vmatpush2.msra.mxu0 0.0
  %2977 = vmatprep.subr.mxu0 0.0
  %2978 = vmatpush2.msra.mxu0 0.0
  %2979 = vmatprep.subr.mxu0 0.0
  %2980 = vmatpush2.msra.mxu0 0.0
  %2981 = vmatprep.subr.mxu0 0.0
  %2982 = vmatpush2.msra.mxu0 0.0
  %2983 = vmatprep.mubr.f32.mxu0 0.0
  %2984 = vmatmul.mubr.f32.gmra.mxu0 %v2917
  %v2985 = vpop.f32.mrf.mxu0
  %v2986 = vadd.f32 0.0, %v2985
  %v2987 = vpop.f32.mrf.mxu0
  %2988 = vdwg.mxu0
  %v2989 = vld [vmem:[%s19] sm:$0xff]
  %v2990 = vld [vmem:[%s19 + $0x8] sm:$0xff]
  %v2991 = vld [vmem:[%s19 + $0x10] sm:$0xff]
  %v2992 = vld [vmem:[%s19 + $0x18] sm:$0xff]
  %v2994 = vsel %vm184, %v2986, 0
  %2996 = vmatprep.subr.mxu0 0.0
  %2997 = vmatpush1.msra.mxu0 0.0
  %2998 = vmatprep.subr.mxu0 0.0
  %2999 = vmatpush1.msra.mxu0 0.0
  %3000 = vmatprep.subr.mxu0 0.0
  %3001 = vmatpush1.msra.mxu0 0.0
  %3002 = vmatprep.subr.mxu0 0.0
  %3003 = vmatpush1.msra.mxu0 0.0
  %3004 = vmatprep.subr.mxu0 0.0
  %3005 = vmatpush1.msra.mxu0 0.0
  %3006 = vmatprep.subr.mxu0 0.0
  %3007 = vmatpush1.msra.mxu0 0.0
  %3008 = vmatprep.subr.mxu0 0.0
  %3009 = vmatpush1.msra.mxu0 0.0
  %3010 = vmatprep.subr.mxu0 0.0
  %3011 = vmatpush1.msra.mxu0 0.0
  %3012 = vmatprep.subr.mxu0 0.0
  %3013 = vmatpush1.msra.mxu0 0.0
  %3014 = vmatprep.subr.mxu0 0.0
  %3015 = vmatpush1.msra.mxu0 0.0
  %3016 = vmatprep.subr.mxu0 0.0
  %3017 = vmatpush1.msra.mxu0 0.0
  %3018 = vmatprep.subr.mxu0 0.0
  %3019 = vmatpush1.msra.mxu0 0.0
  %3020 = vmatprep.subr.mxu0 0.0
  %3021 = vmatpush1.msra.mxu0 %v2992
  %3022 = vmatprep.subr.mxu0 0.0
  %3023 = vmatpush1.msra.mxu0 %v2991
  %3024 = vmatprep.subr.mxu0 0.0
  %3025 = vmatpush1.msra.mxu0 %v2990
  %3026 = vmatprep.subr.mxu0 0.0
  %3027 = vmatpush1.msra.mxu0 %v2989
  %3028 = vmatprep.subr.mxu0 0.0
  %3029 = vmatpush2.msra.mxu0 0.0
  %3030 = vmatprep.subr.mxu0 0.0
  %3031 = vmatpush2.msra.mxu0 0.0
  %3032 = vmatprep.subr.mxu0 0.0
  %3033 = vmatpush2.msra.mxu0 0.0
  %3034 = vmatprep.subr.mxu0 0.0
  %3035 = vmatpush2.msra.mxu0 0.0
  %3036 = vmatprep.subr.mxu0 0.0
  %3037 = vmatpush2.msra.mxu0 0.0
  %3038 = vmatprep.subr.mxu0 0.0
  %3039 = vmatpush2.msra.mxu0 0.0
  %3040 = vmatprep.subr.mxu0 0.0
  %3041 = vmatpush2.msra.mxu0 0.0
  %3042 = vmatprep.subr.mxu0 0.0
  %3043 = vmatpush2.msra.mxu0 0.0
  %3044 = vmatprep.subr.mxu0 0.0
  %3045 = vmatpush2.msra.mxu0 0.0
  %3046 = vmatprep.subr.mxu0 0.0
  %3047 = vmatpush2.msra.mxu0 0.0
  %3048 = vmatprep.subr.mxu0 0.0
  %3049 = vmatpush2.msra.mxu0 0.0
  %3050 = vmatprep.subr.mxu0 0.0
  %3051 = vmatpush2.msra.mxu0 0.0
  %3052 = vmatprep.subr.mxu0 0.0
  %3053 = vmatpush2.msra.mxu0 0.0
  %3054 = vmatprep.subr.mxu0 0.0
  %3055 = vmatpush2.msra.mxu0 0.0
  %3056 = vmatprep.subr.mxu0 0.0
  %3057 = vmatpush2.msra.mxu0 0.0
  %3058 = vmatprep.subr.mxu0 0.0
  %3059 = vmatpush2.msra.mxu0 0.0
  %3060 = vmatprep.mubr.f32.mxu0 0.0
  %3061 = vmatmul.mubr.f32.gmra.mxu0 %v2994
  %v3062 = vpop.f32.mrf.mxu0
  %v3063 = vadd.f32 0.0, %v3062
  %v3064 = vpop.f32.mrf.mxu0
  %3065 = vdwg.mxu0
  %v3066 = vld [vmem:[%s20] sm:$0x1]
  %v3068 = vlaneseq
  %v3069 = vshrl.u32 %v3068, 7
  %v3070 = vsub.s32 0, %v3069
  %v3071 = vrot.slane %v3066, %v3070
  %v3073 = vmul.f32 %v3063, %v3071
  %vm3074 = vcmask 254976
  %v3075 = vsel %vm3074, %v3073, 0.0
  %3076 = vadd.xlane.f32.xlu0 %v3075
  %v3077 = vpop.xlane.xlu0 %3076
  %v3078 = vld [vmem:[#allocation2] sm:$0x1]
  %v3080 = vlaneseq
  %v3081 = vshrl.u32 %v3080, 7
  %v3082 = vsub.s32 0, %v3081
  %v3083 = vrot.slane %v3078, %v3082
  %v3085 = vadd.f32 %v3077, %v3083
  %vm3086 = vcmask 1024
  %3087 = vst.msk [vmem:[%s22] sm:$0x3] %vm3086, %v3085
  // Predicated region
  $region90: #{tpu_custom_call.1} parent=0 // pred_check
    _
  $region91: #{tpu_custom_call.1} parent=0 // pred_check_branch
    %3089 = sbr.rel (0) target = $region93
  $region92: #{tpu_custom_call.1} parent=0 // pred_region
    _
  $region93: #{tpu_custom_call.1} parent=0 // pred_fallthru
    _
  // Predicated region
  $region94: #{tpu_custom_call.1} parent=0 // pred_check
    _
  $region95: #{tpu_custom_call.1} parent=0 // pred_check_branch
    %3091 = sbr.rel (0) target = $region97
  $region96: #{tpu_custom_call.1} parent=0 // pred_region
    _
  $region97: #{tpu_custom_call.1} parent=0 // pred_fallthru
    _

</llo_original>
